<compile_context>
chip_gen: v6e
topology: v6e:2x2x1
jax: 0.10.0
libtpu: 0.0.40
codegen_flags: <defaults>
</compile_context>

<pallas_src>
import functools

import jax
import jax.numpy as jnp
from jax.experimental import pallas as pl
from jax.experimental.pallas import tpu as pltpu

CIN, COUT, K, STRIDE = 12, 3, 4, 2
NEG_SLOPE = -0.042


def _fused_kernel(x_ref, w_ref, b_ref, o_ref, *, n, h, bw, inv_area):
    """Fused conv-transpose + leaky-select + global mean, one invocation.

    x_ref: (H, 2*CIN, N*BW)  rows [0,CIN): input (kw sub-tap b=0);
                             rows [CIN,2*CIN): input shifted right by one
                             column inside each BW-wide per-batch block (b=1).
    w_ref: (2, 4*COUT, 2*CIN) per kh sub-tap `a`; row r=(p*2+q)*COUT+co,
                             col b*CIN+ci holds W[ci, co, p+2a, q+2b].
    b_ref: (4*COUT, 1)       bias[co] repeated for the 4 output parities.
    o_ref: (COUT, N)         per-(channel, batch) spatial mean.
    """
    nw = n * bw
    brow = b_ref[...]                                   # (4*COUT, 1)

    def mxu(a, b):
        return jnp.dot(a, b, preferred_element_type=jnp.float32)

    def leaky_with_bias(g):
        v = g + brow
        return jnp.where(v > 0.0, v, v * NEG_SLOPE)

    # Phase-decomposed transposed conv: for each output-row pair oh' (= oh//2)
    # accumulate the (at most two) valid kh sub-taps a in {0,1}, ih = oh'-a.
    acc = None
    for ohp in range(h + 1):                            # static unroll (H+1 = 3)
        g = None
        for a in (0, 1):
            ih = ohp - a
            if 0 <= ih < h:
                t = mxu(w_ref[a], x_ref[ih])            # (4*COUT, N*BW)
                g = t if g is None else g + t
        lg = leaky_with_bias(g)                         # bias + leaky select
        acc = lg if acc is None else acc + lg           # sum over oh' (post-select)

    # Per-batch reduction as a 0/1 mask matmul (stays on the MXU, avoids
    # lane-misaligned reshapes): (4*COUT, N*BW) @ (N*BW, N) -> (4*COUT, N).
    col = jax.lax.broadcasted_iota(jnp.int32, (nw, n), 0)
    nid = jax.lax.broadcasted_iota(jnp.int32, (nw, n), 1) * bw
    msk = jnp.where((col >= nid) & (col < nid + bw), 1.0, 0.0)
    per_rn = mxu(acc, msk)                              # (4*COUT, N)

    # Fold the 4 output parities (p, q) of each channel: rows r = k*COUT + co.
    per_cn = (per_rn[0:COUT] + per_rn[COUT:2 * COUT]
              + per_rn[2 * COUT:3 * COUT] + per_rn[3 * COUT:4 * COUT])
    o_ref[...] = per_cn * inv_area                      # single lane-dense store


@jax.jit
def model_forward(x, weight, bias):
    """x: (N, CIN, H, W) NCHW; weight: (CIN, COUT, K, K); bias: (COUT,)."""
    N, cin, H, W = x.shape
    assert cin == CIN and weight.shape == (CIN, COUT, K, K)
    assert K == 4 and STRIDE == 2

    BW = W + 1                      # per-parity output width  (w_out = 2*BW)
    HP = H + 1                      # per-parity output height (h_out = 2*HP)
    NW = N * BW
    inv_area = 1.0 / float((2 * HP) * (2 * BW))

    # ---- layout plumbing (tiny, fused by XLA) ------------------------------
    # x -> (H, CIN, N, W); the two kw-shifted views (b = 0, 1) are packed along
    # the contraction axis so the kernel never performs cross-lane shifts.
    xt = jnp.transpose(x, (2, 1, 0, 3)).astype(jnp.float32)          # (H,CIN,N,W)
    x_b0 = jnp.pad(xt, ((0, 0), (0, 0), (0, 0), (0, 1))).reshape(H, CIN, NW)
    x_b1 = jnp.pad(xt, ((0, 0), (0, 0), (0, 0), (1, 0))).reshape(H, CIN, NW)
    x_stack = jnp.concatenate([x_b0, x_b1], axis=1)                  # (H,2*CIN,NW)

    # Weights regrouped by (kh offset a, kw offset b):
    #   w_a[a, (p*2+q)*COUT+co, b*CIN+ci] = W[ci, co, p+2a, q+2b]
    w_r = weight.astype(jnp.float32).reshape(CIN, COUT, 2, 2, 2, 2)  # ci,co,a,p,b,q
    w_r = jnp.transpose(w_r, (2, 4, 3, 5, 1, 0))                     # a,b,p,q,co,ci
    w_r = jnp.transpose(w_r.reshape(2, 2, 4 * COUT, CIN), (0, 2, 1, 3))  # a,r,b,ci
    w_a = w_r.reshape(2, 4 * COUT, 2 * CIN)                          # (2, 12, 24)

    b_rows = jnp.tile(bias.astype(jnp.float32), 4).reshape(4 * COUT, 1)

    kernel = functools.partial(_fused_kernel, n=N, h=H, bw=BW, inv_area=inv_area)

    res = pl.pallas_call(
        kernel,
        out_shape=jax.ShapeDtypeStruct((COUT, N), jnp.float32),
        grid_spec=pltpu.PrefetchScalarGridSpec(
            num_scalar_prefetch=0,
            grid=(1,),      # whole problem in one step: no per-step overhead
            in_specs=[
                pl.BlockSpec((H, 2 * CIN, NW), lambda i: (0, 0, 0)),
                pl.BlockSpec((2, 4 * COUT, 2 * CIN), lambda i: (0, 0, 0)),
                pl.BlockSpec((4 * COUT, 1), lambda i: (0, 0)),
            ],
            out_specs=pl.BlockSpec((COUT, N), lambda i: (0, 0)),
        ),
        compiler_params=pltpu.CompilerParams(
            dimension_semantics=("arbitrary",)),
    )(x_stack, w_a, b_rows)

    # (COUT, N) lane-dense kernel output -> PyTorch (N, COUT, 1, 1)
    return jnp.transpose(res).reshape(N, COUT, 1, 1)


def _reference(x, weight, bias):
    """Pure-JAX reference of the PyTorch forward pass (for validation)."""
    w_conv = jnp.transpose(jnp.flip(weight, axis=(2, 3)), (1, 0, 2, 3))  # OIHW
    f1 = jax.lax.conv_general_dilated(
        x, w_conv,
        window_strides=(1, 1),
        padding=((K - 1, K - 1), (K - 1, K - 1)),
        lhs_dilation=(STRIDE, STRIDE),
        dimension_numbers=('NCHW', 'OIHW', 'NCHW'),
    ) + bias.reshape(1, COUT, 1, 1)
    f4 = jnp.where(f1 > 0, f1, f1 * NEG_SLOPE)
    return jnp.mean(f4, axis=(2, 3), keepdims=True)


if __name__ == "__main__":
    key = jax.random.PRNGKey(0)
    kx, kw, kb = jax.random.split(key, 3)

    # shapes implied by the module: x3 = randn(19, 12, 2, 63)
    x3 = jax.random.normal(kx, (19, CIN, 2, 63), jnp.float32)
    weight = jax.random.normal(kw, (CIN, COUT, K, K), jnp.float32) * 0.1
    bias = jax.random.normal(kb, (COUT,), jnp.float32) * 0.1

    out = jax.block_until_ready(model_forward(x3, weight, bias))
    ref = jax.block_until_ready(_reference(x3, weight, bias))

    assert out.shape == (19, COUT, 1, 1), out.shape
    assert jnp.allclose(out, ref, atol=5e-4, rtol=5e-4), \
        float(jnp.max(jnp.abs(out - ref)))

    print("KERNEL_OK")
</pallas_src>

<mosaic_0001>
module attributes {stable_mosaic.version = 11 : i64} {
  func.func @_fused_kernel(%arg0: i32, %arg1: memref<2x24x1216xf32, #tpu.memory_space<vmem>>, %arg2: memref<2x12x24xf32, #tpu.memory_space<vmem>>, %arg3: memref<12x1xf32, #tpu.memory_space<vmem>>, %arg4: memref<3x19xf32, #tpu.memory_space<vmem>>) attributes {dimension_semantics = [#tpu.dimension_semantics<arbitrary>], iteration_bounds = array<i64: 1>, scalar_prefetch = 0 : i64, scratch_operands = 0 : i64, tpu.core_type = #tpu.core_type<tc>, window_params = [{pipeline_mode = #tpu.pipeline_mode<synchronous>, transform_indices = @transform_0, window_bounds = array<i64: 2, 24, 1216>}, {pipeline_mode = #tpu.pipeline_mode<synchronous>, transform_indices = @transform_1, window_bounds = array<i64: 2, 12, 24>}, {pipeline_mode = #tpu.pipeline_mode<synchronous>, transform_indices = @transform_2, window_bounds = array<i64: 12, 1>}, {pipeline_mode = #tpu.pipeline_mode<synchronous>, transform_indices = @transform_3, window_bounds = array<i64: 3, 19>}]} {
    %c0 = arith.constant 0 : index
    %c0_0 = arith.constant 0 : index
    %0 = vector.load %arg3[%c0, %c0_0] : memref<12x1xf32, #tpu.memory_space<vmem>>, vector<12x1xf32>
    %c0_1 = arith.constant 0 : index
    %c0_2 = arith.constant 0 : index
    %c0_3 = arith.constant 0 : index
    %1 = vector.load %arg2[%c0_1, %c0_2, %c0_3] : memref<2x12x24xf32, #tpu.memory_space<vmem>>, vector<1x12x24xf32>
    %2 = vector.shape_cast %1 : vector<1x12x24xf32> to vector<12x24xf32>
    %c0_4 = arith.constant 0 : index
    %c0_5 = arith.constant 0 : index
    %c0_6 = arith.constant 0 : index
    %3 = vector.load %arg1[%c0_4, %c0_5, %c0_6] : memref<2x24x1216xf32, #tpu.memory_space<vmem>>, vector<1x24x1216xf32>
    %4 = vector.shape_cast %3 : vector<1x24x1216xf32> to vector<24x1216xf32>
    %cst = arith.constant dense<0.000000e+00> : vector<12x1216xf32>
    %5 = tpu.matmul %2, %4, %cst {dimension_numbers = #tpu.dot_dimension_numbers<[1], [0], [0], [1], [0, 0, 1, 1], [], []>} : vector<12x24xf32>, vector<24x1216xf32>, vector<12x1216xf32> -> vector<12x1216xf32>
    %6 = vector.broadcast %0 : vector<12x1xf32> to vector<12x1216xf32>
    %7 = arith.addf %5, %6 : vector<12x1216xf32>
    %cst_7 = arith.constant 0.000000e+00 : f32
    %8 = vector.broadcast %cst_7 : f32 to vector<12x1216xf32>
    %9 = arith.cmpf ogt, %7, %8 : vector<12x1216xf32>
    %cst_8 = arith.constant -4.200000e-02 : f32
    %10 = vector.broadcast %cst_8 : f32 to vector<12x1216xf32>
    %11 = arith.mulf %7, %10 : vector<12x1216xf32>
    %12 = arith.select %9, %7, %11 : vector<12x1216xi1>, vector<12x1216xf32>
    %c0_9 = arith.constant 0 : index
    %c0_10 = arith.constant 0 : index
    %c0_11 = arith.constant 0 : index
    %13 = vector.load %arg2[%c0_9, %c0_10, %c0_11] : memref<2x12x24xf32, #tpu.memory_space<vmem>>, vector<1x12x24xf32>
    %14 = vector.shape_cast %13 : vector<1x12x24xf32> to vector<12x24xf32>
    %c1 = arith.constant 1 : index
    %c0_12 = arith.constant 0 : index
    %c0_13 = arith.constant 0 : index
    %15 = vector.load %arg1[%c1, %c0_12, %c0_13] : memref<2x24x1216xf32, #tpu.memory_space<vmem>>, vector<1x24x1216xf32>
    %16 = vector.shape_cast %15 : vector<1x24x1216xf32> to vector<24x1216xf32>
    %cst_14 = arith.constant dense<0.000000e+00> : vector<12x1216xf32>
    %17 = tpu.matmul %14, %16, %cst_14 {dimension_numbers = #tpu.dot_dimension_numbers<[1], [0], [0], [1], [0, 0, 1, 1], [], []>} : vector<12x24xf32>, vector<24x1216xf32>, vector<12x1216xf32> -> vector<12x1216xf32>
    %c1_15 = arith.constant 1 : index
    %c0_16 = arith.constant 0 : index
    %c0_17 = arith.constant 0 : index
    %18 = vector.load %arg2[%c1_15, %c0_16, %c0_17] : memref<2x12x24xf32, #tpu.memory_space<vmem>>, vector<1x12x24xf32>
    %19 = vector.shape_cast %18 : vector<1x12x24xf32> to vector<12x24xf32>
    %c0_18 = arith.constant 0 : index
    %c0_19 = arith.constant 0 : index
    %c0_20 = arith.constant 0 : index
    %20 = vector.load %arg1[%c0_18, %c0_19, %c0_20] : memref<2x24x1216xf32, #tpu.memory_space<vmem>>, vector<1x24x1216xf32>
    %21 = vector.shape_cast %20 : vector<1x24x1216xf32> to vector<24x1216xf32>
    %cst_21 = arith.constant dense<0.000000e+00> : vector<12x1216xf32>
    %22 = tpu.matmul %19, %21, %cst_21 {dimension_numbers = #tpu.dot_dimension_numbers<[1], [0], [0], [1], [0, 0, 1, 1], [], []>} : vector<12x24xf32>, vector<24x1216xf32>, vector<12x1216xf32> -> vector<12x1216xf32>
    %23 = arith.addf %17, %22 : vector<12x1216xf32>
    %24 = vector.broadcast %0 : vector<12x1xf32> to vector<12x1216xf32>
    %25 = arith.addf %23, %24 : vector<12x1216xf32>
    %cst_22 = arith.constant 0.000000e+00 : f32
    %26 = vector.broadcast %cst_22 : f32 to vector<12x1216xf32>
    %27 = arith.cmpf ogt, %25, %26 : vector<12x1216xf32>
    %cst_23 = arith.constant -4.200000e-02 : f32
    %28 = vector.broadcast %cst_23 : f32 to vector<12x1216xf32>
    %29 = arith.mulf %25, %28 : vector<12x1216xf32>
    %30 = arith.select %27, %25, %29 : vector<12x1216xi1>, vector<12x1216xf32>
    %31 = arith.addf %12, %30 : vector<12x1216xf32>
    %c1_24 = arith.constant 1 : index
    %c0_25 = arith.constant 0 : index
    %c0_26 = arith.constant 0 : index
    %32 = vector.load %arg2[%c1_24, %c0_25, %c0_26] : memref<2x12x24xf32, #tpu.memory_space<vmem>>, vector<1x12x24xf32>
    %33 = vector.shape_cast %32 : vector<1x12x24xf32> to vector<12x24xf32>
    %c1_27 = arith.constant 1 : index
    %c0_28 = arith.constant 0 : index
    %c0_29 = arith.constant 0 : index
    %34 = vector.load %arg1[%c1_27, %c0_28, %c0_29] : memref<2x24x1216xf32, #tpu.memory_space<vmem>>, vector<1x24x1216xf32>
    %35 = vector.shape_cast %34 : vector<1x24x1216xf32> to vector<24x1216xf32>
    %cst_30 = arith.constant dense<0.000000e+00> : vector<12x1216xf32>
    %36 = tpu.matmul %33, %35, %cst_30 {dimension_numbers = #tpu.dot_dimension_numbers<[1], [0], [0], [1], [0, 0, 1, 1], [], []>} : vector<12x24xf32>, vector<24x1216xf32>, vector<12x1216xf32> -> vector<12x1216xf32>
    %37 = vector.broadcast %0 : vector<12x1xf32> to vector<12x1216xf32>
    %38 = arith.addf %36, %37 : vector<12x1216xf32>
    %cst_31 = arith.constant 0.000000e+00 : f32
    %39 = vector.broadcast %cst_31 : f32 to vector<12x1216xf32>
    %40 = arith.cmpf ogt, %38, %39 : vector<12x1216xf32>
    %cst_32 = arith.constant -4.200000e-02 : f32
    %41 = vector.broadcast %cst_32 : f32 to vector<12x1216xf32>
    %42 = arith.mulf %38, %41 : vector<12x1216xf32>
    %43 = arith.select %40, %38, %42 : vector<12x1216xi1>, vector<12x1216xf32>
    %44 = arith.addf %31, %43 : vector<12x1216xf32>
    %45 = tpu.iota {dimensions = array<i32: 0>} : vector<1216x19xi32>
    %46 = tpu.iota {dimensions = array<i32: 1>} : vector<1216x19xi32>
    %c64_i32 = arith.constant 64 : i32
    %47 = vector.broadcast %c64_i32 : i32 to vector<1216x19xi32>
    %48 = arith.muli %46, %47 : vector<1216x19xi32>
    %49 = arith.cmpi sge, %45, %48 : vector<1216x19xi32>
    %c64_i32_33 = arith.constant 64 : i32
    %50 = vector.broadcast %c64_i32_33 : i32 to vector<1216x19xi32>
    %51 = arith.addi %48, %50 : vector<1216x19xi32>
    %52 = arith.cmpi slt, %45, %51 : vector<1216x19xi32>
    %53 = arith.andi %49, %52 : vector<1216x19xi1>
    %cst_34 = arith.constant 1.000000e+00 : f32
    %cst_35 = arith.constant 0.000000e+00 : f32
    %54 = vector.broadcast %cst_34 : f32 to vector<1216x19xf32>
    %55 = vector.broadcast %cst_35 : f32 to vector<1216x19xf32>
    %56 = arith.select %53, %54, %55 : vector<1216x19xi1>, vector<1216x19xf32>
    %cst_36 = arith.constant dense<0.000000e+00> : vector<12x19xf32>
    %57 = tpu.matmul %44, %56, %cst_36 {dimension_numbers = #tpu.dot_dimension_numbers<[1], [0], [0], [1], [0, 0, 1, 1], [], []>} : vector<12x1216xf32>, vector<1216x19xf32>, vector<12x19xf32> -> vector<12x19xf32>
    %58 = vector.extract_strided_slice %57 {offsets = [0, 0], sizes = [3, 19], strides = [1, 1]} : vector<12x19xf32> to vector<3x19xf32>
    %59 = vector.extract_strided_slice %57 {offsets = [3, 0], sizes = [3, 19], strides = [1, 1]} : vector<12x19xf32> to vector<3x19xf32>
    %60 = arith.addf %58, %59 : vector<3x19xf32>
    %61 = vector.extract_strided_slice %57 {offsets = [6, 0], sizes = [3, 19], strides = [1, 1]} : vector<12x19xf32> to vector<3x19xf32>
    %62 = arith.addf %60, %61 : vector<3x19xf32>
    %63 = vector.extract_strided_slice %57 {offsets = [9, 0], sizes = [3, 19], strides = [1, 1]} : vector<12x19xf32> to vector<3x19xf32>
    %64 = arith.addf %62, %63 : vector<3x19xf32>
    %cst_37 = arith.constant 0.00130208337 : f32
    %65 = vector.broadcast %cst_37 : f32 to vector<3x19xf32>
    %66 = arith.mulf %64, %65 : vector<3x19xf32>
    %c0_38 = arith.constant 0 : index
    %c0_39 = arith.constant 0 : index
    %67 = vector.load %arg4[%c0_38, %c0_39] : memref<3x19xf32, #tpu.memory_space<vmem>>, vector<3x19xf32>
    tpu.vector_store %arg4[%c0_38, %c0_39], %66 {strides = array<i32>} : memref<3x19xf32, #tpu.memory_space<vmem>>, vector<3x19xf32>,
    return
  }
  func.func @transform_0(%arg0: i32) -> (i32, i32, i32) {
    %c0_i32 = arith.constant 0 : i32
    %c0_i32_0 = arith.constant 0 : i32
    %c0_i32_1 = arith.constant 0 : i32
    %c0_i32_2 = arith.constant 0 : i32
    return %c0_i32, %c0_i32_0, %c0_i32_1 : i32, i32, i32
  }
  func.func @transform_1(%arg0: i32) -> (i32, i32, i32) {
    %c0_i32 = arith.constant 0 : i32
    %c0_i32_0 = arith.constant 0 : i32
    %c0_i32_1 = arith.constant 0 : i32
    %c0_i32_2 = arith.constant 0 : i32
    return %c0_i32, %c0_i32_0, %c0_i32_1 : i32, i32, i32
  }
  func.func @transform_2(%arg0: i32) -> (i32, i32) {
    %c0_i32 = arith.constant 0 : i32
    %c0_i32_0 = arith.constant 0 : i32
    %c0_i32_1 = arith.constant 0 : i32
    return %c0_i32, %c0_i32_0 : i32, i32
  }
  func.func @transform_3(%arg0: i32) -> (i32, i32) {
    %c0_i32 = arith.constant 0 : i32
    %c0_i32_0 = arith.constant 0 : i32
    %c0_i32_1 = arith.constant 0 : i32
    return %c0_i32, %c0_i32_0 : i32, i32
  }
}

</mosaic_0001>

<llo_original>
// kernel: tile.8
$region0: #{tile.8}
  #allocation0 [shape = 's32[1]{0}', space=sflag, size = 0x4, scoped, tag = 'scoped memory for tile.8']
  %s0 = inlined_call_operand.vmem [shape: f32[3], index: 0, kind: input, shape index: {}]
  %s1 = inlined_call_operand.vmem [shape: f32[4,3], index: 1, kind: output, shape index: {}]
  // Predicated region
  $region2: #{tile.8} parent=0 // pred_check
    _
  $region3: #{tile.8} parent=0 // pred_check_branch
    %3 = sbr.rel (0) target = $region5
  $region4: #{tile.8} parent=0 // pred_region
    _
  $region5: #{tile.8} parent=0 // pred_fallthru
    _
  %v4 = vld [vmem:[%s0] ss:$0 sm:$0xff]
  %5 = vst [vmem:[%s1] sm:$0xf] %v4

// kernel: tile.0
$region0: #{tile.0}
  %s0 = inlined_call_operand.vmem [shape: f32[4,3], index: 0, kind: input, shape index: {}]
  %s1 = inlined_call_operand.vmem [shape: f32[12,1], index: 1, kind: output, shape index: {}]
  $region1: #{tile.0} parent=0
    #allocation0 [shape = 'u8[4096]{0}', space=vmem, size = 0x1000, scoped, tag = 'scoped mem for input reshape']
    %s3 = sshll.u32 1, 4
    %s4 = ssub.s32 %s3, 1
    %v5 = vld [vmem:[%s0] sm:%s4]
    %6 = vst [vmem:[#allocation0] sm:%s4] %v5
    %v7 = vld [vmem:[#allocation0] sm:$0xf]
    %vm8 = vcmask 7168
    %9 = vst.msk [vmem:[%s1] ss:$3 sm:$0xf] %vm8, %v7
    %v10 = vld [vmem:[#allocation0] sm:$0xf]
    %11 = vrot.lane.b32.xlu0 %v10, 127
    %v12 = vpop.permute.xlu0 %11
    %vm13 = vcmask 7168
    %s14 = scalar_lea.vmem %s1, 1
    %15 = vst.msk [vmem:[%s14] ss:$3 sm:$0xf] %vm13, %v12
    %v16 = vld [vmem:[#allocation0] sm:$0xf]
    %17 = vrot.lane.b32.xlu0 %v16, 126
    %v18 = vpop.permute.xlu0 %17
    %vm19 = vcmask 7168
    %s20 = scalar_lea.vmem %s1, 2
    %21 = vst.msk [vmem:[%s20] ss:$3 sm:$0xf] %vm19, %v18

// kernel: model_forward.1
$region0: #{model_forward.1}
  #allocation0 [shape = 'u32[]', space=smem, size = 0x4, offset = 0x4, fixed_abs, tag = 'smem constant byte address 0x4 - core index']
  #allocation1 [shape = 'u32[144,128]{1,0:T(1,128)}', space=vmem, size = 0x12000, scoped, tag = 'internal scratch']
  %s0 = inlined_call_operand.vmem [shape: f32[2,24,1216], index: 0, kind: input, shape index: {}]
  %s1 = inlined_call_operand.vmem [shape: f32[2,12,24], index: 1, kind: input, shape index: {}]
  %s2 = inlined_call_operand.vmem [shape: f32[12,1], index: 2, kind: input, shape index: {}]
  %s3 = inlined_call_operand.vmem [shape: f32[3,19], index: 3, kind: output, shape index: {}]
  %s4 = sld [smem:[#allocation0]]
  $region22: #{model_forward.1} parent=0
    _
  %s6 = ssub.s32 1, %s4
  %s7 = scalar_select 0, %s6, %s4
  // Predicated region
  $region2: #{model_forward.1} parent=0 // pred_check
    _
  $region3: #{model_forward.1} parent=0 // pred_check_branch
    %9 = sbr.rel (0) target = $region5
  $region4: #{model_forward.1} parent=0 // pred_region
    _
  $region5: #{model_forward.1} parent=0 // pred_fallthru
    _
  // Predicated region
  $region6: #{model_forward.1} parent=0 // pred_check
    _
  $region7: #{model_forward.1} parent=0 // pred_check_branch
    %11 = sbr.rel (0) target = $region9
  $region8: #{model_forward.1} parent=0 // pred_region
    _
  $region9: #{model_forward.1} parent=0 // pred_fallthru
    _
  // Predicated region
  $region10: #{model_forward.1} parent=0 // pred_check
    _
  $region11: #{model_forward.1} parent=0 // pred_check_branch
    %13 = sbr.rel (0) target = $region13
  $region12: #{model_forward.1} parent=0 // pred_region
    _
  $region13: #{model_forward.1} parent=0 // pred_fallthru
    _
  %v14 = vld [vmem:[%s2] sm:$0xff]
  %v15 = vld [vmem:[%s2 + $0x8] sm:$0xf]
  %v16 = vld [vmem:[%s1] sm:$0xff]
  %v17 = vld [vmem:[%s1 + $0x8] sm:$0xf]
  %v18 = vld [vmem:[%s0] sm:$0xff]
  %v19 = vld [vmem:[%s0 + $0x8] sm:$0xff]
  %v20 = vld [vmem:[%s0 + $0x10] sm:$0xff]
  %v21 = vld [vmem:[%s0 + $0x18] sm:$0xff]
  %v22 = vld [vmem:[%s0 + $0x20] sm:$0xff]
  %v23 = vld [vmem:[%s0 + $0x28] sm:$0xff]
  %v24 = vld [vmem:[%s0 + $0x30] sm:$0xff]
  %v25 = vld [vmem:[%s0 + $0x38] sm:$0xff]
  %v26 = vld [vmem:[%s0 + $0x40] sm:$0xff]
  %v27 = vld [vmem:[%s0 + $0x48] sm:$0xff]
  %v28 = vld [vmem:[%s0 + $0x50] sm:$0xff]
  %v29 = vld [vmem:[%s0 + $0x58] sm:$0xff]
  %v30 = vld [vmem:[%s0 + $0x60] sm:$0xff]
  %v31 = vld [vmem:[%s0 + $0x68] sm:$0xff]
  %v32 = vld [vmem:[%s0 + $0x70] sm:$0xff]
  %v33 = vld [vmem:[%s0 + $0x78] sm:$0xff]
  %v34 = vld [vmem:[%s0 + $0x80] sm:$0xff]
  %v35 = vld [vmem:[%s0 + $0x88] sm:$0xff]
  %v36 = vld [vmem:[%s0 + $0x90] sm:$0xff]
  %v37 = vld [vmem:[%s0 + $0x98] sm:$0xff]
  %v38 = vld [vmem:[%s0 + $0xa0] sm:$0xff]
  %v39 = vld [vmem:[%s0 + $0xa8] sm:$0xff]
  %v40 = vld [vmem:[%s0 + $0xb0] sm:$0xff]
  %v41 = vld [vmem:[%s0 + $0xb8] sm:$0xff]
  %v42 = vld [vmem:[%s0 + $0xc0] sm:$0xff]
  %v43 = vld [vmem:[%s0 + $0xc8] sm:$0xff]
  %v44 = vld [vmem:[%s0 + $0xd0] sm:$0xff]
  %v45 = vld [vmem:[%s0 + $0xd8] sm:$0xff]
  %v46 = vld [vmem:[%s0 + $0xe0] sm:$0xff]
  %v47 = vld [vmem:[%s0 + $0xe8] sm:$0xff]
  %49 = vset.pattern.permute.xlu0 0
  %50 = vperm.xlu0 %49, %v14
  %v51 = vpop.permute.xlu0 %50
  %54 = vset.pattern.permute.xlu0 0
  %55 = vperm.xlu0 %54, %v15
  %v56 = vpop.permute.xlu0 %55
  %vm58 = vcmask 195584
  %v60 = vsel %vm58, %v16, 0
  %v63 = vsel %vm58, %v17, 0
  %65 = vmatprep.subr.mxu0 0.0
  %66 = vmatpush1.msra.mxu0 0.0
  %67 = vmatprep.subr.mxu0 0.0
  %68 = vmatpush1.msra.mxu0 0.0
  %69 = vmatprep.subr.mxu0 0.0
  %70 = vmatpush1.msra.mxu0 0.0
  %71 = vmatprep.subr.mxu0 0.0
  %72 = vmatpush1.msra.mxu0 0.0
  %73 = vmatprep.subr.mxu0 0.0
  %74 = vmatpush1.msra.mxu0 0.0
  %75 = vmatprep.subr.mxu0 0.0
  %76 = vmatpush1.msra.mxu0 0.0
  %77 = vmatprep.subr.mxu0 0.0
  %78 = vmatpush1.msra.mxu0 0.0
  %79 = vmatprep.subr.mxu0 0.0
  %80 = vmatpush1.msra.mxu0 0.0
  %81 = vmatprep.subr.mxu0 0.0
  %82 = vmatpush1.msra.mxu0 0.0
  %83 = vmatprep.subr.mxu0 0.0
  %84 = vmatpush1.msra.mxu0 0.0
  %85 = vmatprep.subr.mxu0 0.0
  %86 = vmatpush1.msra.mxu0 0.0
  %87 = vmatprep.subr.mxu0 0.0
  %88 = vmatpush1.msra.mxu0 0.0
  %89 = vmatprep.subr.mxu0 0.0
  %90 = vmatpush1.msra.mxu0 0.0
  %91 = vmatprep.subr.mxu0 %v39
  %92 = vmatpush1.msra.mxu0 %v38
  %93 = vmatprep.subr.mxu0 %v29
  %94 = vmatpush1.msra.mxu0 %v28
  %95 = vmatprep.subr.mxu0 %v19
  %96 = vmatpush1.msra.mxu0 %v18
  %97 = vmatprep.subr.mxu0 0.0
  %98 = vmatpush2.msra.mxu0 0.0
  %99 = vmatprep.subr.mxu0 0.0
  %100 = vmatpush2.msra.mxu0 0.0
  %101 = vmatprep.subr.mxu0 0.0
  %102 = vmatpush2.msra.mxu0 0.0
  %103 = vmatprep.subr.mxu0 0.0
  %104 = vmatpush2.msra.mxu0 0.0
  %105 = vmatprep.subr.mxu0 0.0
  %106 = vmatpush2.msra.mxu0 0.0
  %107 = vmatprep.subr.mxu0 0.0
  %108 = vmatpush2.msra.mxu0 0.0
  %109 = vmatprep.subr.mxu0 0.0
  %110 = vmatpush2.msra.mxu0 0.0
  %111 = vmatprep.subr.mxu0 0.0
  %112 = vmatpush2.msra.mxu0 0.0
  %113 = vmatprep.subr.mxu0 0.0
  %114 = vmatpush2.msra.mxu0 0.0
  %115 = vmatprep.subr.mxu0 0.0
  %116 = vmatpush2.msra.mxu0 0.0
  %117 = vmatprep.subr.mxu0 0.0
  %118 = vmatpush2.msra.mxu0 0.0
  %119 = vmatprep.subr.mxu0 0.0
  %120 = vmatpush2.msra.mxu0 0.0
  %121 = vmatprep.subr.mxu0 0.0
  %122 = vmatpush2.msra.mxu0 0.0
  %123 = vmatprep.subr.mxu0 0.0
  %124 = vmatpush2.msra.mxu0 0.0
  %125 = vmatprep.subr.mxu0 0.0
  %126 = vmatpush2.msra.mxu0 0.0
  %127 = vmatprep.subr.mxu0 0.0
  %128 = vmatpush2.msra.mxu0 0.0
  %129 = vmatprep.mubr.f32.mxu0 0.0
  %130 = vmatmul.mubr.f32.gmra.mxu0 %v60
  %v131 = vpop.f32.mrf.mxu0
  %v132 = vadd.f32 %v51, %v131
  %v133 = vpop.f32.mrf.mxu0
  %v134 = vadd.f32 %v51, %v133
  %135 = vmatprep.mubr.f32.mxu0 0.0
  %136 = vmatmul.mubr.f32.gmra.mxu0 %v63
  %v137 = vpop.f32.mrf.mxu0
  %v138 = vadd.f32 %v56, %v137
  %v139 = vpop.f32.mrf.mxu0
  %v140 = vadd.f32 %v56, %v139
  %141 = vdwg.mxu0
  %142 = vmatprep.subr.mxu0 0.0
  %143 = vmatpush1.msra.mxu0 0.0
  %144 = vmatprep.subr.mxu0 0.0
  %145 = vmatpush1.msra.mxu0 0.0
  %146 = vmatprep.subr.mxu0 0.0
  %147 = vmatpush1.msra.mxu0 0.0
  %148 = vmatprep.subr.mxu0 0.0
  %149 = vmatpush1.msra.mxu0 0.0
  %150 = vmatprep.subr.mxu0 0.0
  %151 = vmatpush1.msra.mxu0 0.0
  %152 = vmatprep.subr.mxu0 0.0
  %153 = vmatpush1.msra.mxu0 0.0
  %154 = vmatprep.subr.mxu0 0.0
  %155 = vmatpush1.msra.mxu0 0.0
  %156 = vmatprep.subr.mxu0 0.0
  %157 = vmatpush1.msra.mxu0 0.0
  %158 = vmatprep.subr.mxu0 0.0
  %159 = vmatpush1.msra.mxu0 0.0
  %160 = vmatprep.subr.mxu0 0.0
  %161 = vmatpush1.msra.mxu0 0.0
  %162 = vmatprep.subr.mxu0 0.0
  %163 = vmatpush1.msra.mxu0 0.0
  %164 = vmatprep.subr.mxu0 0.0
  %165 = vmatpush1.msra.mxu0 0.0
  %166 = vmatprep.subr.mxu0 0.0
  %167 = vmatpush1.msra.mxu0 0.0
  %168 = vmatprep.subr.mxu0 %v41
  %169 = vmatpush1.msra.mxu0 %v40
  %170 = vmatprep.subr.mxu0 %v31
  %171 = vmatpush1.msra.mxu0 %v30
  %172 = vmatprep.subr.mxu0 %v21
  %173 = vmatpush1.msra.mxu0 %v20
  %174 = vmatprep.subr.mxu0 0.0
  %175 = vmatpush2.msra.mxu0 0.0
  %176 = vmatprep.subr.mxu0 0.0
  %177 = vmatpush2.msra.mxu0 0.0
  %178 = vmatprep.subr.mxu0 0.0
  %179 = vmatpush2.msra.mxu0 0.0
  %180 = vmatprep.subr.mxu0 0.0
  %181 = vmatpush2.msra.mxu0 0.0
  %182 = vmatprep.subr.mxu0 0.0
  %183 = vmatpush2.msra.mxu0 0.0
  %184 = vmatprep.subr.mxu0 0.0
  %185 = vmatpush2.msra.mxu0 0.0
  %186 = vmatprep.subr.mxu0 0.0
  %187 = vmatpush2.msra.mxu0 0.0
  %188 = vmatprep.subr.mxu0 0.0
  %189 = vmatpush2.msra.mxu0 0.0
  %190 = vmatprep.subr.mxu0 0.0
  %191 = vmatpush2.msra.mxu0 0.0
  %192 = vmatprep.subr.mxu0 0.0
  %193 = vmatpush2.msra.mxu0 0.0
  %194 = vmatprep.subr.mxu0 0.0
  %195 = vmatpush2.msra.mxu0 0.0
  %196 = vmatprep.subr.mxu0 0.0
  %197 = vmatpush2.msra.mxu0 0.0
  %198 = vmatprep.subr.mxu0 0.0
  %199 = vmatpush2.msra.mxu0 0.0
  %200 = vmatprep.subr.mxu0 0.0
  %201 = vmatpush2.msra.mxu0 0.0
  %202 = vmatprep.subr.mxu0 0.0
  %203 = vmatpush2.msra.mxu0 0.0
  %204 = vmatprep.subr.mxu0 0.0
  %205 = vmatpush2.msra.mxu0 0.0
  %206 = vmatprep.mubr.f32.mxu0 0.0
  %207 = vmatmul.mubr.f32.gmra.mxu0 %v60
  %v208 = vpop.f32.mrf.mxu0
  %v209 = vadd.f32 %v51, %v208
  %v210 = vpop.f32.mrf.mxu0
  %v211 = vadd.f32 %v51, %v210
  %212 = vmatprep.mubr.f32.mxu0 0.0
  %213 = vmatmul.mubr.f32.gmra.mxu0 %v63
  %v214 = vpop.f32.mrf.mxu0
  %v215 = vadd.f32 %v56, %v214
  %v216 = vpop.f32.mrf.mxu0
  %v217 = vadd.f32 %v56, %v216
  %218 = vdwg.mxu0
  %219 = vmatprep.subr.mxu0 0.0
  %220 = vmatpush1.msra.mxu0 0.0
  %221 = vmatprep.subr.mxu0 0.0
  %222 = vmatpush1.msra.mxu0 0.0
  %223 = vmatprep.subr.mxu0 0.0
  %224 = vmatpush1.msra.mxu0 0.0
  %225 = vmatprep.subr.mxu0 0.0
  %226 = vmatpush1.msra.mxu0 0.0
  %227 = vmatprep.subr.mxu0 0.0
  %228 = vmatpush1.msra.mxu0 0.0
  %229 = vmatprep.subr.mxu0 0.0
  %230 = vmatpush1.msra.mxu0 0.0
  %231 = vmatprep.subr.mxu0 0.0
  %232 = vmatpush1.msra.mxu0 0.0
  %233 = vmatprep.subr.mxu0 0.0
  %234 = vmatpush1.msra.mxu0 0.0
  %235 = vmatprep.subr.mxu0 0.0
  %236 = vmatpush1.msra.mxu0 0.0
  %237 = vmatprep.subr.mxu0 0.0
  %238 = vmatpush1.msra.mxu0 0.0
  %239 = vmatprep.subr.mxu0 0.0
  %240 = vmatpush1.msra.mxu0 0.0
  %241 = vmatprep.subr.mxu0 0.0
  %242 = vmatpush1.msra.mxu0 0.0
  %243 = vmatprep.subr.mxu0 0.0
  %244 = vmatpush1.msra.mxu0 0.0
  %245 = vmatprep.subr.mxu0 %v43
  %246 = vmatpush1.msra.mxu0 %v42
  %247 = vmatprep.subr.mxu0 %v33
  %248 = vmatpush1.msra.mxu0 %v32
  %249 = vmatprep.subr.mxu0 %v23
  %250 = vmatpush1.msra.mxu0 %v22
  %251 = vmatprep.subr.mxu0 0.0
  %252 = vmatpush2.msra.mxu0 0.0
  %253 = vmatprep.subr.mxu0 0.0
  %254 = vmatpush2.msra.mxu0 0.0
  %255 = vmatprep.subr.mxu0 0.0
  %256 = vmatpush2.msra.mxu0 0.0
  %257 = vmatprep.subr.mxu0 0.0
  %258 = vmatpush2.msra.mxu0 0.0
  %259 = vmatprep.subr.mxu0 0.0
  %260 = vmatpush2.msra.mxu0 0.0
  %261 = vmatprep.subr.mxu0 0.0
  %262 = vmatpush2.msra.mxu0 0.0
  %263 = vmatprep.subr.mxu0 0.0
  %264 = vmatpush2.msra.mxu0 0.0
  %265 = vmatprep.subr.mxu0 0.0
  %266 = vmatpush2.msra.mxu0 0.0
  %267 = vmatprep.subr.mxu0 0.0
  %268 = vmatpush2.msra.mxu0 0.0
  %269 = vmatprep.subr.mxu0 0.0
  %270 = vmatpush2.msra.mxu0 0.0
  %271 = vmatprep.subr.mxu0 0.0
  %272 = vmatpush2.msra.mxu0 0.0
  %273 = vmatprep.subr.mxu0 0.0
  %274 = vmatpush2.msra.mxu0 0.0
  %275 = vmatprep.subr.mxu0 0.0
  %276 = vmatpush2.msra.mxu0 0.0
  %277 = vmatprep.subr.mxu0 0.0
  %278 = vmatpush2.msra.mxu0 0.0
  %279 = vmatprep.subr.mxu0 0.0
  %280 = vmatpush2.msra.mxu0 0.0
  %281 = vmatprep.subr.mxu0 0.0
  %282 = vmatpush2.msra.mxu0 0.0
  %283 = vmatprep.mubr.f32.mxu0 0.0
  %284 = vmatmul.mubr.f32.gmra.mxu0 %v60
  %v285 = vpop.f32.mrf.mxu0
  %v286 = vadd.f32 %v51, %v285
  %v287 = vpop.f32.mrf.mxu0
  %v288 = vadd.f32 %v51, %v287
  %289 = vmatprep.mubr.f32.mxu0 0.0
  %290 = vmatmul.mubr.f32.gmra.mxu0 %v63
  %v291 = vpop.f32.mrf.mxu0
  %v292 = vadd.f32 %v56, %v291
  %v293 = vpop.f32.mrf.mxu0
  %v294 = vadd.f32 %v56, %v293
  %295 = vdwg.mxu0
  %296 = vmatprep.subr.mxu0 0.0
  %297 = vmatpush1.msra.mxu0 0.0
  %298 = vmatprep.subr.mxu0 0.0
  %299 = vmatpush1.msra.mxu0 0.0
  %300 = vmatprep.subr.mxu0 0.0
  %301 = vmatpush1.msra.mxu0 0.0
  %302 = vmatprep.subr.mxu0 0.0
  %303 = vmatpush1.msra.mxu0 0.0
  %304 = vmatprep.subr.mxu0 0.0
  %305 = vmatpush1.msra.mxu0 0.0
  %306 = vmatprep.subr.mxu0 0.0
  %307 = vmatpush1.msra.mxu0 0.0
  %308 = vmatprep.subr.mxu0 0.0
  %309 = vmatpush1.msra.mxu0 0.0
  %310 = vmatprep.subr.mxu0 0.0
  %311 = vmatpush1.msra.mxu0 0.0
  %312 = vmatprep.subr.mxu0 0.0
  %313 = vmatpush1.msra.mxu0 0.0
  %314 = vmatprep.subr.mxu0 0.0
  %315 = vmatpush1.msra.mxu0 0.0
  %316 = vmatprep.subr.mxu0 0.0
  %317 = vmatpush1.msra.mxu0 0.0
  %318 = vmatprep.subr.mxu0 0.0
  %319 = vmatpush1.msra.mxu0 0.0
  %320 = vmatprep.subr.mxu0 0.0
  %321 = vmatpush1.msra.mxu0 0.0
  %322 = vmatprep.subr.mxu0 %v45
  %323 = vmatpush1.msra.mxu0 %v44
  %324 = vmatprep.subr.mxu0 %v35
  %325 = vmatpush1.msra.mxu0 %v34
  %326 = vmatprep.subr.mxu0 %v25
  %327 = vmatpush1.msra.mxu0 %v24
  %328 = vmatprep.subr.mxu0 0.0
  %329 = vmatpush2.msra.mxu0 0.0
  %330 = vmatprep.subr.mxu0 0.0
  %331 = vmatpush2.msra.mxu0 0.0
  %332 = vmatprep.subr.mxu0 0.0
  %333 = vmatpush2.msra.mxu0 0.0
  %334 = vmatprep.subr.mxu0 0.0
  %335 = vmatpush2.msra.mxu0 0.0
  %336 = vmatprep.subr.mxu0 0.0
  %337 = vmatpush2.msra.mxu0 0.0
  %338 = vmatprep.subr.mxu0 0.0
  %339 = vmatpush2.msra.mxu0 0.0
  %340 = vmatprep.subr.mxu0 0.0
  %341 = vmatpush2.msra.mxu0 0.0
  %342 = vmatprep.subr.mxu0 0.0
  %343 = vmatpush2.msra.mxu0 0.0
  %344 = vmatprep.subr.mxu0 0.0
  %345 = vmatpush2.msra.mxu0 0.0
  %346 = vmatprep.subr.mxu0 0.0
  %347 = vmatpush2.msra.mxu0 0.0
  %348 = vmatprep.subr.mxu0 0.0
  %349 = vmatpush2.msra.mxu0 0.0
  %350 = vmatprep.subr.mxu0 0.0
  %351 = vmatpush2.msra.mxu0 0.0
  %352 = vmatprep.subr.mxu0 0.0
  %353 = vmatpush2.msra.mxu0 0.0
  %354 = vmatprep.subr.mxu0 0.0
  %355 = vmatpush2.msra.mxu0 0.0
  %356 = vmatprep.subr.mxu0 0.0
  %357 = vmatpush2.msra.mxu0 0.0
  %358 = vmatprep.subr.mxu0 0.0
  %359 = vmatpush2.msra.mxu0 0.0
  %360 = vmatprep.mubr.f32.mxu0 0.0
  %361 = vmatmul.mubr.f32.gmra.mxu0 %v60
  %v362 = vpop.f32.mrf.mxu0
  %v363 = vadd.f32 %v51, %v362
  %v364 = vpop.f32.mrf.mxu0
  %v365 = vadd.f32 %v51, %v364
  %366 = vmatprep.mubr.f32.mxu0 0.0
  %367 = vmatmul.mubr.f32.gmra.mxu0 %v63
  %v368 = vpop.f32.mrf.mxu0
  %v369 = vadd.f32 %v56, %v368
  %v370 = vpop.f32.mrf.mxu0
  %v371 = vadd.f32 %v56, %v370
  %372 = vdwg.mxu0
  %373 = vmatprep.subr.mxu0 0.0
  %374 = vmatpush1.msra.mxu0 0.0
  %375 = vmatprep.subr.mxu0 0.0
  %376 = vmatpush1.msra.mxu0 0.0
  %377 = vmatprep.subr.mxu0 0.0
  %378 = vmatpush1.msra.mxu0 0.0
  %379 = vmatprep.subr.mxu0 0.0
  %380 = vmatpush1.msra.mxu0 0.0
  %381 = vmatprep.subr.mxu0 0.0
  %382 = vmatpush1.msra.mxu0 0.0
  %383 = vmatprep.subr.mxu0 0.0
  %384 = vmatpush1.msra.mxu0 0.0
  %385 = vmatprep.subr.mxu0 0.0
  %386 = vmatpush1.msra.mxu0 0.0
  %387 = vmatprep.subr.mxu0 0.0
  %388 = vmatpush1.msra.mxu0 0.0
  %389 = vmatprep.subr.mxu0 0.0
  %390 = vmatpush1.msra.mxu0 0.0
  %391 = vmatprep.subr.mxu0 0.0
  %392 = vmatpush1.msra.mxu0 0.0
  %393 = vmatprep.subr.mxu0 0.0
  %394 = vmatpush1.msra.mxu0 0.0
  %395 = vmatprep.subr.mxu0 0.0
  %396 = vmatpush1.msra.mxu0 0.0
  %397 = vmatprep.subr.mxu0 0.0
  %398 = vmatpush1.msra.mxu0 0.0
  %399 = vmatprep.subr.mxu0 %v47
  %400 = vmatpush1.msra.mxu0 %v46
  %401 = vmatprep.subr.mxu0 %v37
  %402 = vmatpush1.msra.mxu0 %v36
  %403 = vmatprep.subr.mxu0 %v27
  %404 = vmatpush1.msra.mxu0 %v26
  %405 = vmatprep.subr.mxu0 0.0
  %406 = vmatpush2.msra.mxu0 0.0
  %407 = vmatprep.subr.mxu0 0.0
  %408 = vmatpush2.msra.mxu0 0.0
  %409 = vmatprep.subr.mxu0 0.0
  %410 = vmatpush2.msra.mxu0 0.0
  %411 = vmatprep.subr.mxu0 0.0
  %412 = vmatpush2.msra.mxu0 0.0
  %413 = vmatprep.subr.mxu0 0.0
  %414 = vmatpush2.msra.mxu0 0.0
  %415 = vmatprep.subr.mxu0 0.0
  %416 = vmatpush2.msra.mxu0 0.0
  %417 = vmatprep.subr.mxu0 0.0
  %418 = vmatpush2.msra.mxu0 0.0
  %419 = vmatprep.subr.mxu0 0.0
  %420 = vmatpush2.msra.mxu0 0.0
  %421 = vmatprep.subr.mxu0 0.0
  %422 = vmatpush2.msra.mxu0 0.0
  %423 = vmatprep.subr.mxu0 0.0
  %424 = vmatpush2.msra.mxu0 0.0
  %425 = vmatprep.subr.mxu0 0.0
  %426 = vmatpush2.msra.mxu0 0.0
  %427 = vmatprep.subr.mxu0 0.0
  %428 = vmatpush2.msra.mxu0 0.0
  %429 = vmatprep.subr.mxu0 0.0
  %430 = vmatpush2.msra.mxu0 0.0
  %431 = vmatprep.subr.mxu0 0.0
  %432 = vmatpush2.msra.mxu0 0.0
  %433 = vmatprep.subr.mxu0 0.0
  %434 = vmatpush2.msra.mxu0 0.0
  %435 = vmatprep.subr.mxu0 0.0
  %436 = vmatpush2.msra.mxu0 0.0
  %437 = vmatprep.mubr.f32.mxu0 0.0
  %438 = vmatmul.mubr.f32.gmra.mxu0 %v60
  %v439 = vpop.f32.mrf.mxu0
  %v440 = vadd.f32 %v51, %v439
  %v441 = vpop.f32.mrf.mxu0
  %v442 = vadd.f32 %v51, %v441
  %443 = vmatprep.mubr.f32.mxu0 0.0
  %444 = vmatmul.mubr.f32.gmra.mxu0 %v63
  %v445 = vpop.f32.mrf.mxu0
  %v446 = vadd.f32 %v56, %v445
  %v447 = vpop.f32.mrf.mxu0
  %v448 = vadd.f32 %v56, %v447
  %449 = vdwg.mxu0
  %vm450 = vcmp.gt.f32.partialorder %v132, 0.0
  %vm451 = vcmp.gt.f32.partialorder %v134, 0.0
  %vm452 = vcmp.gt.f32.partialorder %v209, 0.0
  %vm453 = vcmp.gt.f32.partialorder %v211, 0.0
  %vm454 = vcmp.gt.f32.partialorder %v286, 0.0
  %vm455 = vcmp.gt.f32.partialorder %v288, 0.0
  %vm456 = vcmp.gt.f32.partialorder %v363, 0.0
  %vm457 = vcmp.gt.f32.partialorder %v365, 0.0
  %vm458 = vcmp.gt.f32.partialorder %v440, 0.0
  %vm459 = vcmp.gt.f32.partialorder %v442, 0.0
  %vm460 = vcmp.gt.f32.partialorder %v138, 0.0
  %vm461 = vcmp.gt.f32.partialorder %v140, 0.0
  %vm462 = vcmp.gt.f32.partialorder %v215, 0.0
  %vm463 = vcmp.gt.f32.partialorder %v217, 0.0
  %vm464 = vcmp.gt.f32.partialorder %v292, 0.0
  %vm465 = vcmp.gt.f32.partialorder %v294, 0.0
  %vm466 = vcmp.gt.f32.partialorder %v369, 0.0
  %vm467 = vcmp.gt.f32.partialorder %v371, 0.0
  %vm468 = vcmp.gt.f32.partialorder %v446, 0.0
  %vm469 = vcmp.gt.f32.partialorder %v448, 0.0
  %v470 = vmul.f32 %v132, -0.042
  %v471 = vmul.f32 %v134, -0.042
  %v472 = vmul.f32 %v209, -0.042
  %v473 = vmul.f32 %v211, -0.042
  %v474 = vmul.f32 %v286, -0.042
  %v475 = vmul.f32 %v288, -0.042
  %v476 = vmul.f32 %v363, -0.042
  %v477 = vmul.f32 %v365, -0.042
  %v478 = vmul.f32 %v440, -0.042
  %v479 = vmul.f32 %v442, -0.042
  %v480 = vmul.f32 %v138, -0.042
  %v481 = vmul.f32 %v140, -0.042
  %v482 = vmul.f32 %v215, -0.042
  %v483 = vmul.f32 %v217, -0.042
  %v484 = vmul.f32 %v292, -0.042
  %v485 = vmul.f32 %v294, -0.042
  %v486 = vmul.f32 %v369, -0.042
  %v487 = vmul.f32 %v371, -0.042
  %v488 = vmul.f32 %v446, -0.042
  %v489 = vmul.f32 %v448, -0.042
  %v490 = vsel %vm450, %v132, %v470
  %v491 = vsel %vm451, %v134, %v471
  %v492 = vsel %vm452, %v209, %v472
  %v493 = vsel %vm453, %v211, %v473
  %v494 = vsel %vm454, %v286, %v474
  %v495 = vsel %vm455, %v288, %v475
  %v496 = vsel %vm456, %v363, %v476
  %v497 = vsel %vm457, %v365, %v477
  %v498 = vsel %vm458, %v440, %v478
  %v499 = vsel %vm459, %v442, %v479
  %v500 = vsel %vm460, %v138, %v480
  %v501 = vsel %vm461, %v140, %v481
  %v502 = vsel %vm462, %v215, %v482
  %v503 = vsel %vm463, %v217, %v483
  %v504 = vsel %vm464, %v292, %v484
  %v505 = vsel %vm465, %v294, %v485
  %v506 = vsel %vm466, %v369, %v486
  %v507 = vsel %vm467, %v371, %v487
  %v508 = vsel %vm468, %v446, %v488
  %v509 = vsel %vm469, %v448, %v489
  %s510 = scalar_lea.vmem %s0, 240
  %v511 = vld [vmem:[%s510] sm:$0xff]
  %v512 = vld [vmem:[%s510 + $0x8] sm:$0xff]
  %v513 = vld [vmem:[%s510 + $0x10] sm:$0xff]
  %v514 = vld [vmem:[%s510 + $0x18] sm:$0xff]
  %v515 = vld [vmem:[%s510 + $0x20] sm:$0xff]
  %v516 = vld [vmem:[%s510 + $0x28] sm:$0xff]
  %v517 = vld [vmem:[%s510 + $0x30] sm:$0xff]
  %v518 = vld [vmem:[%s510 + $0x38] sm:$0xff]
  %v519 = vld [vmem:[%s510 + $0x40] sm:$0xff]
  %v520 = vld [vmem:[%s510 + $0x48] sm:$0xff]
  %v521 = vld [vmem:[%s510 + $0x50] sm:$0xff]
  %v522 = vld [vmem:[%s510 + $0x58] sm:$0xff]
  %v523 = vld [vmem:[%s510 + $0x60] sm:$0xff]
  %v524 = vld [vmem:[%s510 + $0x68] sm:$0xff]
  %v525 = vld [vmem:[%s510 + $0x70] sm:$0xff]
  %v526 = vld [vmem:[%s510 + $0x78] sm:$0xff]
  %v527 = vld [vmem:[%s510 + $0x80] sm:$0xff]
  %v528 = vld [vmem:[%s510 + $0x88] sm:$0xff]
  %v529 = vld [vmem:[%s510 + $0x90] sm:$0xff]
  %v530 = vld [vmem:[%s510 + $0x98] sm:$0xff]
  %v531 = vld [vmem:[%s510 + $0xa0] sm:$0xff]
  %v532 = vld [vmem:[%s510 + $0xa8] sm:$0xff]
  %v533 = vld [vmem:[%s510 + $0xb0] sm:$0xff]
  %v534 = vld [vmem:[%s510 + $0xb8] sm:$0xff]
  %v535 = vld [vmem:[%s510 + $0xc0] sm:$0xff]
  %v536 = vld [vmem:[%s510 + $0xc8] sm:$0xff]
  %v537 = vld [vmem:[%s510 + $0xd0] sm:$0xff]
  %v538 = vld [vmem:[%s510 + $0xd8] sm:$0xff]
  %v539 = vld [vmem:[%s510 + $0xe0] sm:$0xff]
  %v540 = vld [vmem:[%s510 + $0xe8] sm:$0xff]
  %s541 = scalar_lea.vmem %s1, 16
  %v542 = vld [vmem:[%s541] sm:$0xff]
  %v543 = vld [vmem:[%s541 + $0x8] sm:$0xf]
  %v545 = vsel %vm58, %v542, 0
  %v548 = vsel %vm58, %v543, 0
  %550 = vmatprep.subr.mxu0 0.0
  %551 = vmatpush1.msra.mxu0 0.0
  %552 = vmatprep.subr.mxu0 0.0
  %553 = vmatpush1.msra.mxu0 0.0
  %554 = vmatprep.subr.mxu0 0.0
  %555 = vmatpush1.msra.mxu0 0.0
  %556 = vmatprep.subr.mxu0 0.0
  %557 = vmatpush1.msra.mxu0 0.0
  %558 = vmatprep.subr.mxu0 0.0
  %559 = vmatpush1.msra.mxu0 0.0
  %560 = vmatprep.subr.mxu0 0.0
  %561 = vmatpush1.msra.mxu0 0.0
  %562 = vmatprep.subr.mxu0 0.0
  %563 = vmatpush1.msra.mxu0 0.0
  %564 = vmatprep.subr.mxu0 0.0
  %565 = vmatpush1.msra.mxu0 0.0
  %566 = vmatprep.subr.mxu0 0.0
  %567 = vmatpush1.msra.mxu0 0.0
  %568 = vmatprep.subr.mxu0 0.0
  %569 = vmatpush1.msra.mxu0 0.0
  %570 = vmatprep.subr.mxu0 0.0
  %571 = vmatpush1.msra.mxu0 0.0
  %572 = vmatprep.subr.mxu0 0.0
  %573 = vmatpush1.msra.mxu0 0.0
  %574 = vmatprep.subr.mxu0 0.0
  %575 = vmatpush1.msra.mxu0 0.0
  %576 = vmatprep.subr.mxu0 %v39
  %577 = vmatpush1.msra.mxu0 %v38
  %578 = vmatprep.subr.mxu0 %v29
  %579 = vmatpush1.msra.mxu0 %v28
  %580 = vmatprep.subr.mxu0 %v19
  %581 = vmatpush1.msra.mxu0 %v18
  %582 = vmatprep.subr.mxu0 0.0
  %583 = vmatpush2.msra.mxu0 0.0
  %584 = vmatprep.subr.mxu0 0.0
  %585 = vmatpush2.msra.mxu0 0.0
  %586 = vmatprep.subr.mxu0 0.0
  %587 = vmatpush2.msra.mxu0 0.0
  %588 = vmatprep.subr.mxu0 0.0
  %589 = vmatpush2.msra.mxu0 0.0
  %590 = vmatprep.subr.mxu0 0.0
  %591 = vmatpush2.msra.mxu0 0.0
  %592 = vmatprep.subr.mxu0 0.0
  %593 = vmatpush2.msra.mxu0 0.0
  %594 = vmatprep.subr.mxu0 0.0
  %595 = vmatpush2.msra.mxu0 0.0
  %596 = vmatprep.subr.mxu0 0.0
  %597 = vmatpush2.msra.mxu0 0.0
  %598 = vmatprep.subr.mxu0 0.0
  %599 = vmatpush2.msra.mxu0 0.0
  %600 = vmatprep.subr.mxu0 0.0
  %601 = vmatpush2.msra.mxu0 0.0
  %602 = vmatprep.subr.mxu0 0.0
  %603 = vmatpush2.msra.mxu0 0.0
  %604 = vmatprep.subr.mxu0 0.0
  %605 = vmatpush2.msra.mxu0 0.0
  %606 = vmatprep.subr.mxu0 0.0
  %607 = vmatpush2.msra.mxu0 0.0
  %608 = vmatprep.subr.mxu0 0.0
  %609 = vmatpush2.msra.mxu0 0.0
  %610 = vmatprep.subr.mxu0 0.0
  %611 = vmatpush2.msra.mxu0 0.0
  %612 = vmatprep.subr.mxu0 0.0
  %613 = vmatpush2.msra.mxu0 0.0
  %614 = vmatprep.mubr.f32.mxu0 0.0
  %615 = vmatmul.mubr.f32.gmra.mxu0 %v545
  %v616 = vpop.f32.mrf.mxu0
  %v617 = vadd.f32 0.0, %v616
  %v618 = vpop.f32.mrf.mxu0
  %v619 = vadd.f32 0.0, %v618
  %620 = vmatprep.mubr.f32.mxu0 0.0
  %621 = vmatmul.mubr.f32.gmra.mxu0 %v548
  %v622 = vpop.f32.mrf.mxu0
  %v623 = vadd.f32 0.0, %v622
  %v624 = vpop.f32.mrf.mxu0
  %v625 = vadd.f32 0.0, %v624
  %626 = vdwg.mxu0
  %627 = vmatprep.subr.mxu0 0.0
  %628 = vmatpush1.msra.mxu0 0.0
  %629 = vmatprep.subr.mxu0 0.0
  %630 = vmatpush1.msra.mxu0 0.0
  %631 = vmatprep.subr.mxu0 0.0
  %632 = vmatpush1.msra.mxu0 0.0
  %633 = vmatprep.subr.mxu0 0.0
  %634 = vmatpush1.msra.mxu0 0.0
  %635 = vmatprep.subr.mxu0 0.0
  %636 = vmatpush1.msra.mxu0 0.0
  %637 = vmatprep.subr.mxu0 0.0
  %638 = vmatpush1.msra.mxu0 0.0
  %639 = vmatprep.subr.mxu0 0.0
  %640 = vmatpush1.msra.mxu0 0.0
  %641 = vmatprep.subr.mxu0 0.0
  %642 = vmatpush1.msra.mxu0 0.0
  %643 = vmatprep.subr.mxu0 0.0
  %644 = vmatpush1.msra.mxu0 0.0
  %645 = vmatprep.subr.mxu0 0.0
  %646 = vmatpush1.msra.mxu0 0.0
  %647 = vmatprep.subr.mxu0 0.0
  %648 = vmatpush1.msra.mxu0 0.0
  %649 = vmatprep.subr.mxu0 0.0
  %650 = vmatpush1.msra.mxu0 0.0
  %651 = vmatprep.subr.mxu0 0.0
  %652 = vmatpush1.msra.mxu0 0.0
  %653 = vmatprep.subr.mxu0 %v41
  %654 = vmatpush1.msra.mxu0 %v40
  %655 = vmatprep.subr.mxu0 %v31
  %656 = vmatpush1.msra.mxu0 %v30
  %657 = vmatprep.subr.mxu0 %v21
  %658 = vmatpush1.msra.mxu0 %v20
  %659 = vmatprep.subr.mxu0 0.0
  %660 = vmatpush2.msra.mxu0 0.0
  %661 = vmatprep.subr.mxu0 0.0
  %662 = vmatpush2.msra.mxu0 0.0
  %663 = vmatprep.subr.mxu0 0.0
  %664 = vmatpush2.msra.mxu0 0.0
  %665 = vmatprep.subr.mxu0 0.0
  %666 = vmatpush2.msra.mxu0 0.0
  %667 = vmatprep.subr.mxu0 0.0
  %668 = vmatpush2.msra.mxu0 0.0
  %669 = vmatprep.subr.mxu0 0.0
  %670 = vmatpush2.msra.mxu0 0.0
  %671 = vmatprep.subr.mxu0 0.0
  %672 = vmatpush2.msra.mxu0 0.0
  %673 = vmatprep.subr.mxu0 0.0
  %674 = vmatpush2.msra.mxu0 0.0
  %675 = vmatprep.subr.mxu0 0.0
  %676 = vmatpush2.msra.mxu0 0.0
  %677 = vmatprep.subr.mxu0 0.0
  %678 = vmatpush2.msra.mxu0 0.0
  %679 = vmatprep.subr.mxu0 0.0
  %680 = vmatpush2.msra.mxu0 0.0
  %681 = vmatprep.subr.mxu0 0.0
  %682 = vmatpush2.msra.mxu0 0.0
  %683 = vmatprep.subr.mxu0 0.0
  %684 = vmatpush2.msra.mxu0 0.0
  %685 = vmatprep.subr.mxu0 0.0
  %686 = vmatpush2.msra.mxu0 0.0
  %687 = vmatprep.subr.mxu0 0.0
  %688 = vmatpush2.msra.mxu0 0.0
  %689 = vmatprep.subr.mxu0 0.0
  %690 = vmatpush2.msra.mxu0 0.0
  %691 = vmatprep.mubr.f32.mxu0 0.0
  %692 = vmatmul.mubr.f32.gmra.mxu0 %v545
  %v693 = vpop.f32.mrf.mxu0
  %v694 = vadd.f32 0.0, %v693
  %v695 = vpop.f32.mrf.mxu0
  %v696 = vadd.f32 0.0, %v695
  %697 = vmatprep.mubr.f32.mxu0 0.0
  %698 = vmatmul.mubr.f32.gmra.mxu0 %v548
  %v699 = vpop.f32.mrf.mxu0
  %v700 = vadd.f32 0.0, %v699
  %v701 = vpop.f32.mrf.mxu0
  %v702 = vadd.f32 0.0, %v701
  %703 = vdwg.mxu0
  %704 = vmatprep.subr.mxu0 0.0
  %705 = vmatpush1.msra.mxu0 0.0
  %706 = vmatprep.subr.mxu0 0.0
  %707 = vmatpush1.msra.mxu0 0.0
  %708 = vmatprep.subr.mxu0 0.0
  %709 = vmatpush1.msra.mxu0 0.0
  %710 = vmatprep.subr.mxu0 0.0
  %711 = vmatpush1.msra.mxu0 0.0
  %712 = vmatprep.subr.mxu0 0.0
  %713 = vmatpush1.msra.mxu0 0.0
  %714 = vmatprep.subr.mxu0 0.0
  %715 = vmatpush1.msra.mxu0 0.0
  %716 = vmatprep.subr.mxu0 0.0
  %717 = vmatpush1.msra.mxu0 0.0
  %718 = vmatprep.subr.mxu0 0.0
  %719 = vmatpush1.msra.mxu0 0.0
  %720 = vmatprep.subr.mxu0 0.0
  %721 = vmatpush1.msra.mxu0 0.0
  %722 = vmatprep.subr.mxu0 0.0
  %723 = vmatpush1.msra.mxu0 0.0
  %724 = vmatprep.subr.mxu0 0.0
  %725 = vmatpush1.msra.mxu0 0.0
  %726 = vmatprep.subr.mxu0 0.0
  %727 = vmatpush1.msra.mxu0 0.0
  %728 = vmatprep.subr.mxu0 0.0
  %729 = vmatpush1.msra.mxu0 0.0
  %730 = vmatprep.subr.mxu0 %v43
  %731 = vmatpush1.msra.mxu0 %v42
  %732 = vmatprep.subr.mxu0 %v33
  %733 = vmatpush1.msra.mxu0 %v32
  %734 = vmatprep.subr.mxu0 %v23
  %735 = vmatpush1.msra.mxu0 %v22
  %736 = vmatprep.subr.mxu0 0.0
  %737 = vmatpush2.msra.mxu0 0.0
  %738 = vmatprep.subr.mxu0 0.0
  %739 = vmatpush2.msra.mxu0 0.0
  %740 = vmatprep.subr.mxu0 0.0
  %741 = vmatpush2.msra.mxu0 0.0
  %742 = vmatprep.subr.mxu0 0.0
  %743 = vmatpush2.msra.mxu0 0.0
  %744 = vmatprep.subr.mxu0 0.0
  %745 = vmatpush2.msra.mxu0 0.0
  %746 = vmatprep.subr.mxu0 0.0
  %747 = vmatpush2.msra.mxu0 0.0
  %748 = vmatprep.subr.mxu0 0.0
  %749 = vmatpush2.msra.mxu0 0.0
  %750 = vmatprep.subr.mxu0 0.0
  %751 = vmatpush2.msra.mxu0 0.0
  %752 = vmatprep.subr.mxu0 0.0
  %753 = vmatpush2.msra.mxu0 0.0
  %754 = vmatprep.subr.mxu0 0.0
  %755 = vmatpush2.msra.mxu0 0.0
  %756 = vmatprep.subr.mxu0 0.0
  %757 = vmatpush2.msra.mxu0 0.0
  %758 = vmatprep.subr.mxu0 0.0
  %759 = vmatpush2.msra.mxu0 0.0
  %760 = vmatprep.subr.mxu0 0.0
  %761 = vmatpush2.msra.mxu0 0.0
  %762 = vmatprep.subr.mxu0 0.0
  %763 = vmatpush2.msra.mxu0 0.0
  %764 = vmatprep.subr.mxu0 0.0
  %765 = vmatpush2.msra.mxu0 0.0
  %766 = vmatprep.subr.mxu0 0.0
  %767 = vmatpush2.msra.mxu0 0.0
  %768 = vmatprep.mubr.f32.mxu0 0.0
  %769 = vmatmul.mubr.f32.gmra.mxu0 %v545
  %v770 = vpop.f32.mrf.mxu0
  %v771 = vadd.f32 0.0, %v770
  %v772 = vpop.f32.mrf.mxu0
  %v773 = vadd.f32 0.0, %v772
  %774 = vmatprep.mubr.f32.mxu0 0.0
  %775 = vmatmul.mubr.f32.gmra.mxu0 %v548
  %v776 = vpop.f32.mrf.mxu0
  %v777 = vadd.f32 0.0, %v776
  %v778 = vpop.f32.mrf.mxu0
  %v779 = vadd.f32 0.0, %v778
  %780 = vdwg.mxu0
  %781 = vmatprep.subr.mxu0 0.0
  %782 = vmatpush1.msra.mxu0 0.0
  %783 = vmatprep.subr.mxu0 0.0
  %784 = vmatpush1.msra.mxu0 0.0
  %785 = vmatprep.subr.mxu0 0.0
  %786 = vmatpush1.msra.mxu0 0.0
  %787 = vmatprep.subr.mxu0 0.0
  %788 = vmatpush1.msra.mxu0 0.0
  %789 = vmatprep.subr.mxu0 0.0
  %790 = vmatpush1.msra.mxu0 0.0
  %791 = vmatprep.subr.mxu0 0.0
  %792 = vmatpush1.msra.mxu0 0.0
  %793 = vmatprep.subr.mxu0 0.0
  %794 = vmatpush1.msra.mxu0 0.0
  %795 = vmatprep.subr.mxu0 0.0
  %796 = vmatpush1.msra.mxu0 0.0
  %797 = vmatprep.subr.mxu0 0.0
  %798 = vmatpush1.msra.mxu0 0.0
  %799 = vmatprep.subr.mxu0 0.0
  %800 = vmatpush1.msra.mxu0 0.0
  %801 = vmatprep.subr.mxu0 0.0
  %802 = vmatpush1.msra.mxu0 0.0
  %803 = vmatprep.subr.mxu0 0.0
  %804 = vmatpush1.msra.mxu0 0.0
  %805 = vmatprep.subr.mxu0 0.0
  %806 = vmatpush1.msra.mxu0 0.0
  %807 = vmatprep.subr.mxu0 %v45
  %808 = vmatpush1.msra.mxu0 %v44
  %809 = vmatprep.subr.mxu0 %v35
  %810 = vmatpush1.msra.mxu0 %v34
  %811 = vmatprep.subr.mxu0 %v25
  %812 = vmatpush1.msra.mxu0 %v24
  %813 = vmatprep.subr.mxu0 0.0
  %814 = vmatpush2.msra.mxu0 0.0
  %815 = vmatprep.subr.mxu0 0.0
  %816 = vmatpush2.msra.mxu0 0.0
  %817 = vmatprep.subr.mxu0 0.0
  %818 = vmatpush2.msra.mxu0 0.0
  %819 = vmatprep.subr.mxu0 0.0
  %820 = vmatpush2.msra.mxu0 0.0
  %821 = vmatprep.subr.mxu0 0.0
  %822 = vmatpush2.msra.mxu0 0.0
  %823 = vmatprep.subr.mxu0 0.0
  %824 = vmatpush2.msra.mxu0 0.0
  %825 = vmatprep.subr.mxu0 0.0
  %826 = vmatpush2.msra.mxu0 0.0
  %827 = vmatprep.subr.mxu0 0.0
  %828 = vmatpush2.msra.mxu0 0.0
  %829 = vmatprep.subr.mxu0 0.0
  %830 = vmatpush2.msra.mxu0 0.0
  %831 = vmatprep.subr.mxu0 0.0
  %832 = vmatpush2.msra.mxu0 0.0
  %833 = vmatprep.subr.mxu0 0.0
  %834 = vmatpush2.msra.mxu0 0.0
  %835 = vmatprep.subr.mxu0 0.0
  %836 = vmatpush2.msra.mxu0 0.0
  %837 = vmatprep.subr.mxu0 0.0
  %838 = vmatpush2.msra.mxu0 0.0
  %839 = vmatprep.subr.mxu0 0.0
  %840 = vmatpush2.msra.mxu0 0.0
  %841 = vmatprep.subr.mxu0 0.0
  %842 = vmatpush2.msra.mxu0 0.0
  %843 = vmatprep.subr.mxu0 0.0
  %844 = vmatpush2.msra.mxu0 0.0
  %845 = vmatprep.mubr.f32.mxu0 0.0
  %846 = vmatmul.mubr.f32.gmra.mxu0 %v545
  %v847 = vpop.f32.mrf.mxu0
  %v848 = vadd.f32 0.0, %v847
  %v849 = vpop.f32.mrf.mxu0
  %v850 = vadd.f32 0.0, %v849
  %851 = vmatprep.mubr.f32.mxu0 0.0
  %852 = vmatmul.mubr.f32.gmra.mxu0 %v548
  %v853 = vpop.f32.mrf.mxu0
  %v854 = vadd.f32 0.0, %v853
  %v855 = vpop.f32.mrf.mxu0
  %v856 = vadd.f32 0.0, %v855
  %857 = vdwg.mxu0
  %858 = vmatprep.subr.mxu0 0.0
  %859 = vmatpush1.msra.mxu0 0.0
  %860 = vmatprep.subr.mxu0 0.0
  %861 = vmatpush1.msra.mxu0 0.0
  %862 = vmatprep.subr.mxu0 0.0
  %863 = vmatpush1.msra.mxu0 0.0
  %864 = vmatprep.subr.mxu0 0.0
  %865 = vmatpush1.msra.mxu0 0.0
  %866 = vmatprep.subr.mxu0 0.0
  %867 = vmatpush1.msra.mxu0 0.0
  %868 = vmatprep.subr.mxu0 0.0
  %869 = vmatpush1.msra.mxu0 0.0
  %870 = vmatprep.subr.mxu0 0.0
  %871 = vmatpush1.msra.mxu0 0.0
  %872 = vmatprep.subr.mxu0 0.0
  %873 = vmatpush1.msra.mxu0 0.0
  %874 = vmatprep.subr.mxu0 0.0
  %875 = vmatpush1.msra.mxu0 0.0
  %876 = vmatprep.subr.mxu0 0.0
  %877 = vmatpush1.msra.mxu0 0.0
  %878 = vmatprep.subr.mxu0 0.0
  %879 = vmatpush1.msra.mxu0 0.0
  %880 = vmatprep.subr.mxu0 0.0
  %881 = vmatpush1.msra.mxu0 0.0
  %882 = vmatprep.subr.mxu0 0.0
  %883 = vmatpush1.msra.mxu0 0.0
  %884 = vmatprep.subr.mxu0 %v47
  %885 = vmatpush1.msra.mxu0 %v46
  %886 = vmatprep.subr.mxu0 %v37
  %887 = vmatpush1.msra.mxu0 %v36
  %888 = vmatprep.subr.mxu0 %v27
  %889 = vmatpush1.msra.mxu0 %v26
  %890 = vmatprep.subr.mxu0 0.0
  %891 = vmatpush2.msra.mxu0 0.0
  %892 = vmatprep.subr.mxu0 0.0
  %893 = vmatpush2.msra.mxu0 0.0
  %894 = vmatprep.subr.mxu0 0.0
  %895 = vmatpush2.msra.mxu0 0.0
  %896 = vmatprep.subr.mxu0 0.0
  %897 = vmatpush2.msra.mxu0 0.0
  %898 = vmatprep.subr.mxu0 0.0
  %899 = vmatpush2.msra.mxu0 0.0
  %900 = vmatprep.subr.mxu0 0.0
  %901 = vmatpush2.msra.mxu0 0.0
  %902 = vmatprep.subr.mxu0 0.0
  %903 = vmatpush2.msra.mxu0 0.0
  %904 = vmatprep.subr.mxu0 0.0
  %905 = vmatpush2.msra.mxu0 0.0
  %906 = vmatprep.subr.mxu0 0.0
  %907 = vmatpush2.msra.mxu0 0.0
  %908 = vmatprep.subr.mxu0 0.0
  %909 = vmatpush2.msra.mxu0 0.0
  %910 = vmatprep.subr.mxu0 0.0
  %911 = vmatpush2.msra.mxu0 0.0
  %912 = vmatprep.subr.mxu0 0.0
  %913 = vmatpush2.msra.mxu0 0.0
  %914 = vmatprep.subr.mxu0 0.0
  %915 = vmatpush2.msra.mxu0 0.0
  %916 = vmatprep.subr.mxu0 0.0
  %917 = vmatpush2.msra.mxu0 0.0
  %918 = vmatprep.subr.mxu0 0.0
  %919 = vmatpush2.msra.mxu0 0.0
  %920 = vmatprep.subr.mxu0 0.0
  %921 = vmatpush2.msra.mxu0 0.0
  %922 = vmatprep.mubr.f32.mxu0 0.0
  %923 = vmatmul.mubr.f32.gmra.mxu0 %v545
  %v924 = vpop.f32.mrf.mxu0
  %v925 = vadd.f32 0.0, %v924
  %v926 = vpop.f32.mrf.mxu0
  %v927 = vadd.f32 0.0, %v926
  %928 = vmatprep.mubr.f32.mxu0 0.0
  %929 = vmatmul.mubr.f32.gmra.mxu0 %v548
  %v930 = vpop.f32.mrf.mxu0
  %v931 = vadd.f32 0.0, %v930
  %v932 = vpop.f32.mrf.mxu0
  %v933 = vadd.f32 0.0, %v932
  %934 = vdwg.mxu0
  %935 = vmatprep.subr.mxu0 0.0
  %936 = vmatpush1.msra.mxu0 0.0
  %937 = vmatprep.subr.mxu0 0.0
  %938 = vmatpush1.msra.mxu0 0.0
  %939 = vmatprep.subr.mxu0 0.0
  %940 = vmatpush1.msra.mxu0 0.0
  %941 = vmatprep.subr.mxu0 0.0
  %942 = vmatpush1.msra.mxu0 0.0
  %943 = vmatprep.subr.mxu0 0.0
  %944 = vmatpush1.msra.mxu0 0.0
  %945 = vmatprep.subr.mxu0 0.0
  %946 = vmatpush1.msra.mxu0 0.0
  %947 = vmatprep.subr.mxu0 0.0
  %948 = vmatpush1.msra.mxu0 0.0
  %949 = vmatprep.subr.mxu0 0.0
  %950 = vmatpush1.msra.mxu0 0.0
  %951 = vmatprep.subr.mxu0 0.0
  %952 = vmatpush1.msra.mxu0 0.0
  %953 = vmatprep.subr.mxu0 0.0
  %954 = vmatpush1.msra.mxu0 0.0
  %955 = vmatprep.subr.mxu0 0.0
  %956 = vmatpush1.msra.mxu0 0.0
  %957 = vmatprep.subr.mxu0 0.0
  %958 = vmatpush1.msra.mxu0 0.0
  %959 = vmatprep.subr.mxu0 0.0
  %960 = vmatpush1.msra.mxu0 0.0
  %961 = vmatprep.subr.mxu0 %v532
  %962 = vmatpush1.msra.mxu0 %v531
  %963 = vmatprep.subr.mxu0 %v522
  %964 = vmatpush1.msra.mxu0 %v521
  %965 = vmatprep.subr.mxu0 %v512
  %966 = vmatpush1.msra.mxu0 %v511
  %967 = vmatprep.subr.mxu0 0.0
  %968 = vmatpush2.msra.mxu0 0.0
  %969 = vmatprep.subr.mxu0 0.0
  %970 = vmatpush2.msra.mxu0 0.0
  %971 = vmatprep.subr.mxu0 0.0
  %972 = vmatpush2.msra.mxu0 0.0
  %973 = vmatprep.subr.mxu0 0.0
  %974 = vmatpush2.msra.mxu0 0.0
  %975 = vmatprep.subr.mxu0 0.0
  %976 = vmatpush2.msra.mxu0 0.0
  %977 = vmatprep.subr.mxu0 0.0
  %978 = vmatpush2.msra.mxu0 0.0
  %979 = vmatprep.subr.mxu0 0.0
  %980 = vmatpush2.msra.mxu0 0.0
  %981 = vmatprep.subr.mxu0 0.0
  %982 = vmatpush2.msra.mxu0 0.0
  %983 = vmatprep.subr.mxu0 0.0
  %984 = vmatpush2.msra.mxu0 0.0
  %985 = vmatprep.subr.mxu0 0.0
  %986 = vmatpush2.msra.mxu0 0.0
  %987 = vmatprep.subr.mxu0 0.0
  %988 = vmatpush2.msra.mxu0 0.0
  %989 = vmatprep.subr.mxu0 0.0
  %990 = vmatpush2.msra.mxu0 0.0
  %991 = vmatprep.subr.mxu0 0.0
  %992 = vmatpush2.msra.mxu0 0.0
  %993 = vmatprep.subr.mxu0 0.0
  %994 = vmatpush2.msra.mxu0 0.0
  %995 = vmatprep.subr.mxu0 0.0
  %996 = vmatpush2.msra.mxu0 0.0
  %997 = vmatprep.subr.mxu0 0.0
  %998 = vmatpush2.msra.mxu0 0.0
  %999 = vmatprep.mubr.f32.mxu0 0.0
  %1000 = vmatmul.mubr.f32.gmra.mxu0 %v60
  %v1001 = vpop.f32.mrf.mxu0
  %v1002 = vadd.f32 %v617, %v1001
  %v1003 = vpop.f32.mrf.mxu0
  %v1004 = vadd.f32 %v619, %v1003
  %1005 = vmatprep.mubr.f32.mxu0 0.0
  %1006 = vmatmul.mubr.f32.gmra.mxu0 %v63
  %v1007 = vpop.f32.mrf.mxu0
  %v1008 = vadd.f32 %v623, %v1007
  %v1009 = vpop.f32.mrf.mxu0
  %v1010 = vadd.f32 %v625, %v1009
  %1011 = vdwg.mxu0
  %1012 = vmatprep.subr.mxu0 0.0
  %1013 = vmatpush1.msra.mxu0 0.0
  %1014 = vmatprep.subr.mxu0 0.0
  %1015 = vmatpush1.msra.mxu0 0.0
  %1016 = vmatprep.subr.mxu0 0.0
  %1017 = vmatpush1.msra.mxu0 0.0
  %1018 = vmatprep.subr.mxu0 0.0
  %1019 = vmatpush1.msra.mxu0 0.0
  %1020 = vmatprep.subr.mxu0 0.0
  %1021 = vmatpush1.msra.mxu0 0.0
  %1022 = vmatprep.subr.mxu0 0.0
  %1023 = vmatpush1.msra.mxu0 0.0
  %1024 = vmatprep.subr.mxu0 0.0
  %1025 = vmatpush1.msra.mxu0 0.0
  %1026 = vmatprep.subr.mxu0 0.0
  %1027 = vmatpush1.msra.mxu0 0.0
  %1028 = vmatprep.subr.mxu0 0.0
  %1029 = vmatpush1.msra.mxu0 0.0
  %1030 = vmatprep.subr.mxu0 0.0
  %1031 = vmatpush1.msra.mxu0 0.0
  %1032 = vmatprep.subr.mxu0 0.0
  %1033 = vmatpush1.msra.mxu0 0.0
  %1034 = vmatprep.subr.mxu0 0.0
  %1035 = vmatpush1.msra.mxu0 0.0
  %1036 = vmatprep.subr.mxu0 0.0
  %1037 = vmatpush1.msra.mxu0 0.0
  %1038 = vmatprep.subr.mxu0 %v534
  %1039 = vmatpush1.msra.mxu0 %v533
  %1040 = vmatprep.subr.mxu0 %v524
  %1041 = vmatpush1.msra.mxu0 %v523
  %1042 = vmatprep.subr.mxu0 %v514
  %1043 = vmatpush1.msra.mxu0 %v513
  %1044 = vmatprep.subr.mxu0 0.0
  %1045 = vmatpush2.msra.mxu0 0.0
  %1046 = vmatprep.subr.mxu0 0.0
  %1047 = vmatpush2.msra.mxu0 0.0
  %1048 = vmatprep.subr.mxu0 0.0
  %1049 = vmatpush2.msra.mxu0 0.0
  %1050 = vmatprep.subr.mxu0 0.0
  %1051 = vmatpush2.msra.mxu0 0.0
  %1052 = vmatprep.subr.mxu0 0.0
  %1053 = vmatpush2.msra.mxu0 0.0
  %1054 = vmatprep.subr.mxu0 0.0
  %1055 = vmatpush2.msra.mxu0 0.0
  %1056 = vmatprep.subr.mxu0 0.0
  %1057 = vmatpush2.msra.mxu0 0.0
  %1058 = vmatprep.subr.mxu0 0.0
  %1059 = vmatpush2.msra.mxu0 0.0
  %1060 = vmatprep.subr.mxu0 0.0
  %1061 = vmatpush2.msra.mxu0 0.0
  %1062 = vmatprep.subr.mxu0 0.0
  %1063 = vmatpush2.msra.mxu0 0.0
  %1064 = vmatprep.subr.mxu0 0.0
  %1065 = vmatpush2.msra.mxu0 0.0
  %1066 = vmatprep.subr.mxu0 0.0
  %1067 = vmatpush2.msra.mxu0 0.0
  %1068 = vmatprep.subr.mxu0 0.0
  %1069 = vmatpush2.msra.mxu0 0.0
  %1070 = vmatprep.subr.mxu0 0.0
  %1071 = vmatpush2.msra.mxu0 0.0
  %1072 = vmatprep.subr.mxu0 0.0
  %1073 = vmatpush2.msra.mxu0 0.0
  %1074 = vmatprep.subr.mxu0 0.0
  %1075 = vmatpush2.msra.mxu0 0.0
  %1076 = vmatprep.mubr.f32.mxu0 0.0
  %1077 = vmatmul.mubr.f32.gmra.mxu0 %v60
  %v1078 = vpop.f32.mrf.mxu0
  %v1079 = vadd.f32 %v694, %v1078
  %v1080 = vpop.f32.mrf.mxu0
  %v1081 = vadd.f32 %v696, %v1080
  %1082 = vmatprep.mubr.f32.mxu0 0.0
  %1083 = vmatmul.mubr.f32.gmra.mxu0 %v63
  %v1084 = vpop.f32.mrf.mxu0
  %v1085 = vadd.f32 %v700, %v1084
  %v1086 = vpop.f32.mrf.mxu0
  %v1087 = vadd.f32 %v702, %v1086
  %1088 = vdwg.mxu0
  %1089 = vmatprep.subr.mxu0 0.0
  %1090 = vmatpush1.msra.mxu0 0.0
  %1091 = vmatprep.subr.mxu0 0.0
  %1092 = vmatpush1.msra.mxu0 0.0
  %1093 = vmatprep.subr.mxu0 0.0
  %1094 = vmatpush1.msra.mxu0 0.0
  %1095 = vmatprep.subr.mxu0 0.0
  %1096 = vmatpush1.msra.mxu0 0.0
  %1097 = vmatprep.subr.mxu0 0.0
  %1098 = vmatpush1.msra.mxu0 0.0
  %1099 = vmatprep.subr.mxu0 0.0
  %1100 = vmatpush1.msra.mxu0 0.0
  %1101 = vmatprep.subr.mxu0 0.0
  %1102 = vmatpush1.msra.mxu0 0.0
  %1103 = vmatprep.subr.mxu0 0.0
  %1104 = vmatpush1.msra.mxu0 0.0
  %1105 = vmatprep.subr.mxu0 0.0
  %1106 = vmatpush1.msra.mxu0 0.0
  %1107 = vmatprep.subr.mxu0 0.0
  %1108 = vmatpush1.msra.mxu0 0.0
  %1109 = vmatprep.subr.mxu0 0.0
  %1110 = vmatpush1.msra.mxu0 0.0
  %1111 = vmatprep.subr.mxu0 0.0
  %1112 = vmatpush1.msra.mxu0 0.0
  %1113 = vmatprep.subr.mxu0 0.0
  %1114 = vmatpush1.msra.mxu0 0.0
  %1115 = vmatprep.subr.mxu0 %v536
  %1116 = vmatpush1.msra.mxu0 %v535
  %1117 = vmatprep.subr.mxu0 %v526
  %1118 = vmatpush1.msra.mxu0 %v525
  %1119 = vmatprep.subr.mxu0 %v516
  %1120 = vmatpush1.msra.mxu0 %v515
  %1121 = vmatprep.subr.mxu0 0.0
  %1122 = vmatpush2.msra.mxu0 0.0
  %1123 = vmatprep.subr.mxu0 0.0
  %1124 = vmatpush2.msra.mxu0 0.0
  %1125 = vmatprep.subr.mxu0 0.0
  %1126 = vmatpush2.msra.mxu0 0.0
  %1127 = vmatprep.subr.mxu0 0.0
  %1128 = vmatpush2.msra.mxu0 0.0
  %1129 = vmatprep.subr.mxu0 0.0
  %1130 = vmatpush2.msra.mxu0 0.0
  %1131 = vmatprep.subr.mxu0 0.0
  %1132 = vmatpush2.msra.mxu0 0.0
  %1133 = vmatprep.subr.mxu0 0.0
  %1134 = vmatpush2.msra.mxu0 0.0
  %1135 = vmatprep.subr.mxu0 0.0
  %1136 = vmatpush2.msra.mxu0 0.0
  %1137 = vmatprep.subr.mxu0 0.0
  %1138 = vmatpush2.msra.mxu0 0.0
  %1139 = vmatprep.subr.mxu0 0.0
  %1140 = vmatpush2.msra.mxu0 0.0
  %1141 = vmatprep.subr.mxu0 0.0
  %1142 = vmatpush2.msra.mxu0 0.0
  %1143 = vmatprep.subr.mxu0 0.0
  %1144 = vmatpush2.msra.mxu0 0.0
  %1145 = vmatprep.subr.mxu0 0.0
  %1146 = vmatpush2.msra.mxu0 0.0
  %1147 = vmatprep.subr.mxu0 0.0
  %1148 = vmatpush2.msra.mxu0 0.0
  %1149 = vmatprep.subr.mxu0 0.0
  %1150 = vmatpush2.msra.mxu0 0.0
  %1151 = vmatprep.subr.mxu0 0.0
  %1152 = vmatpush2.msra.mxu0 0.0
  %1153 = vmatprep.mubr.f32.mxu0 0.0
  %1154 = vmatmul.mubr.f32.gmra.mxu0 %v60
  %v1155 = vpop.f32.mrf.mxu0
  %v1156 = vadd.f32 %v771, %v1155
  %v1157 = vpop.f32.mrf.mxu0
  %v1158 = vadd.f32 %v773, %v1157
  %1159 = vmatprep.mubr.f32.mxu0 0.0
  %1160 = vmatmul.mubr.f32.gmra.mxu0 %v63
  %v1161 = vpop.f32.mrf.mxu0
  %v1162 = vadd.f32 %v777, %v1161
  %v1163 = vpop.f32.mrf.mxu0
  %v1164 = vadd.f32 %v779, %v1163
  %1165 = vdwg.mxu0
  %1166 = vmatprep.subr.mxu0 0.0
  %1167 = vmatpush1.msra.mxu0 0.0
  %1168 = vmatprep.subr.mxu0 0.0
  %1169 = vmatpush1.msra.mxu0 0.0
  %1170 = vmatprep.subr.mxu0 0.0
  %1171 = vmatpush1.msra.mxu0 0.0
  %1172 = vmatprep.subr.mxu0 0.0
  %1173 = vmatpush1.msra.mxu0 0.0
  %1174 = vmatprep.subr.mxu0 0.0
  %1175 = vmatpush1.msra.mxu0 0.0
  %1176 = vmatprep.subr.mxu0 0.0
  %1177 = vmatpush1.msra.mxu0 0.0
  %1178 = vmatprep.subr.mxu0 0.0
  %1179 = vmatpush1.msra.mxu0 0.0
  %1180 = vmatprep.subr.mxu0 0.0
  %1181 = vmatpush1.msra.mxu0 0.0
  %1182 = vmatprep.subr.mxu0 0.0
  %1183 = vmatpush1.msra.mxu0 0.0
  %1184 = vmatprep.subr.mxu0 0.0
  %1185 = vmatpush1.msra.mxu0 0.0
  %1186 = vmatprep.subr.mxu0 0.0
  %1187 = vmatpush1.msra.mxu0 0.0
  %1188 = vmatprep.subr.mxu0 0.0
  %1189 = vmatpush1.msra.mxu0 0.0
  %1190 = vmatprep.subr.mxu0 0.0
  %1191 = vmatpush1.msra.mxu0 0.0
  %1192 = vmatprep.subr.mxu0 %v538
  %1193 = vmatpush1.msra.mxu0 %v537
  %1194 = vmatprep.subr.mxu0 %v528
  %1195 = vmatpush1.msra.mxu0 %v527
  %1196 = vmatprep.subr.mxu0 %v518
  %1197 = vmatpush1.msra.mxu0 %v517
  %1198 = vmatprep.subr.mxu0 0.0
  %1199 = vmatpush2.msra.mxu0 0.0
  %1200 = vmatprep.subr.mxu0 0.0
  %1201 = vmatpush2.msra.mxu0 0.0
  %1202 = vmatprep.subr.mxu0 0.0
  %1203 = vmatpush2.msra.mxu0 0.0
  %1204 = vmatprep.subr.mxu0 0.0
  %1205 = vmatpush2.msra.mxu0 0.0
  %1206 = vmatprep.subr.mxu0 0.0
  %1207 = vmatpush2.msra.mxu0 0.0
  %1208 = vmatprep.subr.mxu0 0.0
  %1209 = vmatpush2.msra.mxu0 0.0
  %1210 = vmatprep.subr.mxu0 0.0
  %1211 = vmatpush2.msra.mxu0 0.0
  %1212 = vmatprep.subr.mxu0 0.0
  %1213 = vmatpush2.msra.mxu0 0.0
  %1214 = vmatprep.subr.mxu0 0.0
  %1215 = vmatpush2.msra.mxu0 0.0
  %1216 = vmatprep.subr.mxu0 0.0
  %1217 = vmatpush2.msra.mxu0 0.0
  %1218 = vmatprep.subr.mxu0 0.0
  %1219 = vmatpush2.msra.mxu0 0.0
  %1220 = vmatprep.subr.mxu0 0.0
  %1221 = vmatpush2.msra.mxu0 0.0
  %1222 = vmatprep.subr.mxu0 0.0
  %1223 = vmatpush2.msra.mxu0 0.0
  %1224 = vmatprep.subr.mxu0 0.0
  %1225 = vmatpush2.msra.mxu0 0.0
  %1226 = vmatprep.subr.mxu0 0.0
  %1227 = vmatpush2.msra.mxu0 0.0
  %1228 = vmatprep.subr.mxu0 0.0
  %1229 = vmatpush2.msra.mxu0 0.0
  %1230 = vmatprep.mubr.f32.mxu0 0.0
  %1231 = vmatmul.mubr.f32.gmra.mxu0 %v60
  %v1232 = vpop.f32.mrf.mxu0
  %v1233 = vadd.f32 %v848, %v1232
  %v1234 = vpop.f32.mrf.mxu0
  %v1235 = vadd.f32 %v850, %v1234
  %1236 = vmatprep.mubr.f32.mxu0 0.0
  %1237 = vmatmul.mubr.f32.gmra.mxu0 %v63
  %v1238 = vpop.f32.mrf.mxu0
  %v1239 = vadd.f32 %v854, %v1238
  %v1240 = vpop.f32.mrf.mxu0
  %v1241 = vadd.f32 %v856, %v1240
  %1242 = vdwg.mxu0
  %1243 = vmatprep.subr.mxu0 0.0
  %1244 = vmatpush1.msra.mxu0 0.0
  %1245 = vmatprep.subr.mxu0 0.0
  %1246 = vmatpush1.msra.mxu0 0.0
  %1247 = vmatprep.subr.mxu0 0.0
  %1248 = vmatpush1.msra.mxu0 0.0
  %1249 = vmatprep.subr.mxu0 0.0
  %1250 = vmatpush1.msra.mxu0 0.0
  %1251 = vmatprep.subr.mxu0 0.0
  %1252 = vmatpush1.msra.mxu0 0.0
  %1253 = vmatprep.subr.mxu0 0.0
  %1254 = vmatpush1.msra.mxu0 0.0
  %1255 = vmatprep.subr.mxu0 0.0
  %1256 = vmatpush1.msra.mxu0 0.0
  %1257 = vmatprep.subr.mxu0 0.0
  %1258 = vmatpush1.msra.mxu0 0.0
  %1259 = vmatprep.subr.mxu0 0.0
  %1260 = vmatpush1.msra.mxu0 0.0
  %1261 = vmatprep.subr.mxu0 0.0
  %1262 = vmatpush1.msra.mxu0 0.0
  %1263 = vmatprep.subr.mxu0 0.0
  %1264 = vmatpush1.msra.mxu0 0.0
  %1265 = vmatprep.subr.mxu0 0.0
  %1266 = vmatpush1.msra.mxu0 0.0
  %1267 = vmatprep.subr.mxu0 0.0
  %1268 = vmatpush1.msra.mxu0 0.0
  %1269 = vmatprep.subr.mxu0 %v540
  %1270 = vmatpush1.msra.mxu0 %v539
  %1271 = vmatprep.subr.mxu0 %v530
  %1272 = vmatpush1.msra.mxu0 %v529
  %1273 = vmatprep.subr.mxu0 %v520
  %1274 = vmatpush1.msra.mxu0 %v519
  %1275 = vmatprep.subr.mxu0 0.0
  %1276 = vmatpush2.msra.mxu0 0.0
  %1277 = vmatprep.subr.mxu0 0.0
  %1278 = vmatpush2.msra.mxu0 0.0
  %1279 = vmatprep.subr.mxu0 0.0
  %1280 = vmatpush2.msra.mxu0 0.0
  %1281 = vmatprep.subr.mxu0 0.0
  %1282 = vmatpush2.msra.mxu0 0.0
  %1283 = vmatprep.subr.mxu0 0.0
  %1284 = vmatpush2.msra.mxu0 0.0
  %1285 = vmatprep.subr.mxu0 0.0
  %1286 = vmatpush2.msra.mxu0 0.0
  %1287 = vmatprep.subr.mxu0 0.0
  %1288 = vmatpush2.msra.mxu0 0.0
  %1289 = vmatprep.subr.mxu0 0.0
  %1290 = vmatpush2.msra.mxu0 0.0
  %1291 = vmatprep.subr.mxu0 0.0
  %1292 = vmatpush2.msra.mxu0 0.0
  %1293 = vmatprep.subr.mxu0 0.0
  %1294 = vmatpush2.msra.mxu0 0.0
  %1295 = vmatprep.subr.mxu0 0.0
  %1296 = vmatpush2.msra.mxu0 0.0
  %1297 = vmatprep.subr.mxu0 0.0
  %1298 = vmatpush2.msra.mxu0 0.0
  %1299 = vmatprep.subr.mxu0 0.0
  %1300 = vmatpush2.msra.mxu0 0.0
  %1301 = vmatprep.subr.mxu0 0.0
  %1302 = vmatpush2.msra.mxu0 0.0
  %1303 = vmatprep.subr.mxu0 0.0
  %1304 = vmatpush2.msra.mxu0 0.0
  %1305 = vmatprep.subr.mxu0 0.0
  %1306 = vmatpush2.msra.mxu0 0.0
  %1307 = vmatprep.mubr.f32.mxu0 0.0
  %1308 = vmatmul.mubr.f32.gmra.mxu0 %v60
  %v1309 = vpop.f32.mrf.mxu0
  %v1310 = vadd.f32 %v925, %v1309
  %v1311 = vpop.f32.mrf.mxu0
  %v1312 = vadd.f32 %v927, %v1311
  %1313 = vmatprep.mubr.f32.mxu0 0.0
  %1314 = vmatmul.mubr.f32.gmra.mxu0 %v63
  %v1315 = vpop.f32.mrf.mxu0
  %v1316 = vadd.f32 %v931, %v1315
  %v1317 = vpop.f32.mrf.mxu0
  %v1318 = vadd.f32 %v933, %v1317
  %1319 = vdwg.mxu0
  %v1320 = vadd.f32 %v1002, %v51
  %v1321 = vadd.f32 %v1004, %v51
  %v1322 = vadd.f32 %v1079, %v51
  %v1323 = vadd.f32 %v1081, %v51
  %v1324 = vadd.f32 %v1156, %v51
  %v1325 = vadd.f32 %v1158, %v51
  %v1326 = vadd.f32 %v1233, %v51
  %v1327 = vadd.f32 %v1235, %v51
  %v1328 = vadd.f32 %v1310, %v51
  %v1329 = vadd.f32 %v1312, %v51
  %v1330 = vadd.f32 %v1008, %v56
  %v1331 = vadd.f32 %v1010, %v56
  %v1332 = vadd.f32 %v1085, %v56
  %v1333 = vadd.f32 %v1087, %v56
  %v1334 = vadd.f32 %v1162, %v56
  %v1335 = vadd.f32 %v1164, %v56
  %v1336 = vadd.f32 %v1239, %v56
  %v1337 = vadd.f32 %v1241, %v56
  %v1338 = vadd.f32 %v1316, %v56
  %v1339 = vadd.f32 %v1318, %v56
  %vm1340 = vcmp.gt.f32.partialorder %v1320, 0.0
  %vm1341 = vcmp.gt.f32.partialorder %v1321, 0.0
  %vm1342 = vcmp.gt.f32.partialorder %v1322, 0.0
  %vm1343 = vcmp.gt.f32.partialorder %v1323, 0.0
  %vm1344 = vcmp.gt.f32.partialorder %v1324, 0.0
  %vm1345 = vcmp.gt.f32.partialorder %v1325, 0.0
  %vm1346 = vcmp.gt.f32.partialorder %v1326, 0.0
  %vm1347 = vcmp.gt.f32.partialorder %v1327, 0.0
  %vm1348 = vcmp.gt.f32.partialorder %v1328, 0.0
  %vm1349 = vcmp.gt.f32.partialorder %v1329, 0.0
  %vm1350 = vcmp.gt.f32.partialorder %v1330, 0.0
  %vm1351 = vcmp.gt.f32.partialorder %v1331, 0.0
  %vm1352 = vcmp.gt.f32.partialorder %v1332, 0.0
  %vm1353 = vcmp.gt.f32.partialorder %v1333, 0.0
  %vm1354 = vcmp.gt.f32.partialorder %v1334, 0.0
  %vm1355 = vcmp.gt.f32.partialorder %v1335, 0.0
  %vm1356 = vcmp.gt.f32.partialorder %v1336, 0.0
  %vm1357 = vcmp.gt.f32.partialorder %v1337, 0.0
  %vm1358 = vcmp.gt.f32.partialorder %v1338, 0.0
  %vm1359 = vcmp.gt.f32.partialorder %v1339, 0.0
  %v1360 = vmul.f32 %v1320, -0.042
  %v1361 = vmul.f32 %v1321, -0.042
  %v1362 = vmul.f32 %v1322, -0.042
  %v1363 = vmul.f32 %v1323, -0.042
  %v1364 = vmul.f32 %v1324, -0.042
  %v1365 = vmul.f32 %v1325, -0.042
  %v1366 = vmul.f32 %v1326, -0.042
  %v1367 = vmul.f32 %v1327, -0.042
  %v1368 = vmul.f32 %v1328, -0.042
  %v1369 = vmul.f32 %v1329, -0.042
  %v1370 = vmul.f32 %v1330, -0.042
  %v1371 = vmul.f32 %v1331, -0.042
  %v1372 = vmul.f32 %v1332, -0.042
  %v1373 = vmul.f32 %v1333, -0.042
  %v1374 = vmul.f32 %v1334, -0.042
  %v1375 = vmul.f32 %v1335, -0.042
  %v1376 = vmul.f32 %v1336, -0.042
  %v1377 = vmul.f32 %v1337, -0.042
  %v1378 = vmul.f32 %v1338, -0.042
  %v1379 = vmul.f32 %v1339, -0.042
  %v1380 = vsel %vm1340, %v1320, %v1360
  %v1381 = vsel %vm1341, %v1321, %v1361
  %v1382 = vsel %vm1342, %v1322, %v1362
  %v1383 = vsel %vm1343, %v1323, %v1363
  %v1384 = vsel %vm1344, %v1324, %v1364
  %v1385 = vsel %vm1345, %v1325, %v1365
  %v1386 = vsel %vm1346, %v1326, %v1366
  %v1387 = vsel %vm1347, %v1327, %v1367
  %v1388 = vsel %vm1348, %v1328, %v1368
  %v1389 = vsel %vm1349, %v1329, %v1369
  %v1390 = vsel %vm1350, %v1330, %v1370
  %v1391 = vsel %vm1351, %v1331, %v1371
  %v1392 = vsel %vm1352, %v1332, %v1372
  %v1393 = vsel %vm1353, %v1333, %v1373
  %v1394 = vsel %vm1354, %v1334, %v1374
  %v1395 = vsel %vm1355, %v1335, %v1375
  %v1396 = vsel %vm1356, %v1336, %v1376
  %v1397 = vsel %vm1357, %v1337, %v1377
  %v1398 = vsel %vm1358, %v1338, %v1378
  %v1399 = vsel %vm1359, %v1339, %v1379
  %v1400 = vadd.f32 %v490, %v1380
  %v1401 = vadd.f32 %v491, %v1381
  %v1402 = vadd.f32 %v492, %v1382
  %v1403 = vadd.f32 %v493, %v1383
  %v1404 = vadd.f32 %v494, %v1384
  %v1405 = vadd.f32 %v495, %v1385
  %v1406 = vadd.f32 %v496, %v1386
  %v1407 = vadd.f32 %v497, %v1387
  %v1408 = vadd.f32 %v498, %v1388
  %v1409 = vadd.f32 %v499, %v1389
  %v1410 = vadd.f32 %v500, %v1390
  %v1411 = vadd.f32 %v501, %v1391
  %v1412 = vadd.f32 %v502, %v1392
  %v1413 = vadd.f32 %v503, %v1393
  %v1414 = vadd.f32 %v504, %v1394
  %v1415 = vadd.f32 %v505, %v1395
  %v1416 = vadd.f32 %v506, %v1396
  %v1417 = vadd.f32 %v507, %v1397
  %v1418 = vadd.f32 %v508, %v1398
  %v1419 = vadd.f32 %v509, %v1399
  %1420 = vmatprep.subr.mxu0 0.0
  %1421 = vmatpush1.msra.mxu0 0.0
  %1422 = vmatprep.subr.mxu0 0.0
  %1423 = vmatpush1.msra.mxu0 0.0
  %1424 = vmatprep.subr.mxu0 0.0
  %1425 = vmatpush1.msra.mxu0 0.0
  %1426 = vmatprep.subr.mxu0 0.0
  %1427 = vmatpush1.msra.mxu0 0.0
  %1428 = vmatprep.subr.mxu0 0.0
  %1429 = vmatpush1.msra.mxu0 0.0
  %1430 = vmatprep.subr.mxu0 0.0
  %1431 = vmatpush1.msra.mxu0 0.0
  %1432 = vmatprep.subr.mxu0 0.0
  %1433 = vmatpush1.msra.mxu0 0.0
  %1434 = vmatprep.subr.mxu0 0.0
  %1435 = vmatpush1.msra.mxu0 0.0
  %1436 = vmatprep.subr.mxu0 0.0
  %1437 = vmatpush1.msra.mxu0 0.0
  %1438 = vmatprep.subr.mxu0 0.0
  %1439 = vmatpush1.msra.mxu0 0.0
  %1440 = vmatprep.subr.mxu0 0.0
  %1441 = vmatpush1.msra.mxu0 0.0
  %1442 = vmatprep.subr.mxu0 0.0
  %1443 = vmatpush1.msra.mxu0 0.0
  %1444 = vmatprep.subr.mxu0 0.0
  %1445 = vmatpush1.msra.mxu0 0.0
  %1446 = vmatprep.subr.mxu0 %v532
  %1447 = vmatpush1.msra.mxu0 %v531
  %1448 = vmatprep.subr.mxu0 %v522
  %1449 = vmatpush1.msra.mxu0 %v521
  %1450 = vmatprep.subr.mxu0 %v512
  %1451 = vmatpush1.msra.mxu0 %v511
  %1452 = vmatprep.subr.mxu0 0.0
  %1453 = vmatpush2.msra.mxu0 0.0
  %1454 = vmatprep.subr.mxu0 0.0
  %1455 = vmatpush2.msra.mxu0 0.0
  %1456 = vmatprep.subr.mxu0 0.0
  %1457 = vmatpush2.msra.mxu0 0.0
  %1458 = vmatprep.subr.mxu0 0.0
  %1459 = vmatpush2.msra.mxu0 0.0
  %1460 = vmatprep.subr.mxu0 0.0
  %1461 = vmatpush2.msra.mxu0 0.0
  %1462 = vmatprep.subr.mxu0 0.0
  %1463 = vmatpush2.msra.mxu0 0.0
  %1464 = vmatprep.subr.mxu0 0.0
  %1465 = vmatpush2.msra.mxu0 0.0
  %1466 = vmatprep.subr.mxu0 0.0
  %1467 = vmatpush2.msra.mxu0 0.0
  %1468 = vmatprep.subr.mxu0 0.0
  %1469 = vmatpush2.msra.mxu0 0.0
  %1470 = vmatprep.subr.mxu0 0.0
  %1471 = vmatpush2.msra.mxu0 0.0
  %1472 = vmatprep.subr.mxu0 0.0
  %1473 = vmatpush2.msra.mxu0 0.0
  %1474 = vmatprep.subr.mxu0 0.0
  %1475 = vmatpush2.msra.mxu0 0.0
  %1476 = vmatprep.subr.mxu0 0.0
  %1477 = vmatpush2.msra.mxu0 0.0
  %1478 = vmatprep.subr.mxu0 0.0
  %1479 = vmatpush2.msra.mxu0 0.0
  %1480 = vmatprep.subr.mxu0 0.0
  %1481 = vmatpush2.msra.mxu0 0.0
  %1482 = vmatprep.subr.mxu0 0.0
  %1483 = vmatpush2.msra.mxu0 0.0
  %1484 = vmatprep.mubr.f32.mxu0 0.0
  %1485 = vmatmul.mubr.f32.gmra.mxu0 %v545
  %v1486 = vpop.f32.mrf.mxu0
  %v1487 = vadd.f32 %v51, %v1486
  %v1488 = vpop.f32.mrf.mxu0
  %v1489 = vadd.f32 %v51, %v1488
  %1490 = vmatprep.mubr.f32.mxu0 0.0
  %1491 = vmatmul.mubr.f32.gmra.mxu0 %v548
  %v1492 = vpop.f32.mrf.mxu0
  %v1493 = vadd.f32 %v56, %v1492
  %v1494 = vpop.f32.mrf.mxu0
  %v1495 = vadd.f32 %v56, %v1494
  %1496 = vdwg.mxu0
  %1497 = vmatprep.subr.mxu0 0.0
  %1498 = vmatpush1.msra.mxu0 0.0
  %1499 = vmatprep.subr.mxu0 0.0
  %1500 = vmatpush1.msra.mxu0 0.0
  %1501 = vmatprep.subr.mxu0 0.0
  %1502 = vmatpush1.msra.mxu0 0.0
  %1503 = vmatprep.subr.mxu0 0.0
  %1504 = vmatpush1.msra.mxu0 0.0
  %1505 = vmatprep.subr.mxu0 0.0
  %1506 = vmatpush1.msra.mxu0 0.0
  %1507 = vmatprep.subr.mxu0 0.0
  %1508 = vmatpush1.msra.mxu0 0.0
  %1509 = vmatprep.subr.mxu0 0.0
  %1510 = vmatpush1.msra.mxu0 0.0
  %1511 = vmatprep.subr.mxu0 0.0
  %1512 = vmatpush1.msra.mxu0 0.0
  %1513 = vmatprep.subr.mxu0 0.0
  %1514 = vmatpush1.msra.mxu0 0.0
  %1515 = vmatprep.subr.mxu0 0.0
  %1516 = vmatpush1.msra.mxu0 0.0
  %1517 = vmatprep.subr.mxu0 0.0
  %1518 = vmatpush1.msra.mxu0 0.0
  %1519 = vmatprep.subr.mxu0 0.0
  %1520 = vmatpush1.msra.mxu0 0.0
  %1521 = vmatprep.subr.mxu0 0.0
  %1522 = vmatpush1.msra.mxu0 0.0
  %1523 = vmatprep.subr.mxu0 %v534
  %1524 = vmatpush1.msra.mxu0 %v533
  %1525 = vmatprep.subr.mxu0 %v524
  %1526 = vmatpush1.msra.mxu0 %v523
  %1527 = vmatprep.subr.mxu0 %v514
  %1528 = vmatpush1.msra.mxu0 %v513
  %1529 = vmatprep.subr.mxu0 0.0
  %1530 = vmatpush2.msra.mxu0 0.0
  %1531 = vmatprep.subr.mxu0 0.0
  %1532 = vmatpush2.msra.mxu0 0.0
  %1533 = vmatprep.subr.mxu0 0.0
  %1534 = vmatpush2.msra.mxu0 0.0
  %1535 = vmatprep.subr.mxu0 0.0
  %1536 = vmatpush2.msra.mxu0 0.0
  %1537 = vmatprep.subr.mxu0 0.0
  %1538 = vmatpush2.msra.mxu0 0.0
  %1539 = vmatprep.subr.mxu0 0.0
  %1540 = vmatpush2.msra.mxu0 0.0
  %1541 = vmatprep.subr.mxu0 0.0
  %1542 = vmatpush2.msra.mxu0 0.0
  %1543 = vmatprep.subr.mxu0 0.0
  %1544 = vmatpush2.msra.mxu0 0.0
  %1545 = vmatprep.subr.mxu0 0.0
  %1546 = vmatpush2.msra.mxu0 0.0
  %1547 = vmatprep.subr.mxu0 0.0
  %1548 = vmatpush2.msra.mxu0 0.0
  %1549 = vmatprep.subr.mxu0 0.0
  %1550 = vmatpush2.msra.mxu0 0.0
  %1551 = vmatprep.subr.mxu0 0.0
  %1552 = vmatpush2.msra.mxu0 0.0
  %1553 = vmatprep.subr.mxu0 0.0
  %1554 = vmatpush2.msra.mxu0 0.0
  %1555 = vmatprep.subr.mxu0 0.0
  %1556 = vmatpush2.msra.mxu0 0.0
  %1557 = vmatprep.subr.mxu0 0.0
  %1558 = vmatpush2.msra.mxu0 0.0
  %1559 = vmatprep.subr.mxu0 0.0
  %1560 = vmatpush2.msra.mxu0 0.0
  %1561 = vmatprep.mubr.f32.mxu0 0.0
  %1562 = vmatmul.mubr.f32.gmra.mxu0 %v545
  %v1563 = vpop.f32.mrf.mxu0
  %v1564 = vadd.f32 %v51, %v1563
  %v1565 = vpop.f32.mrf.mxu0
  %v1566 = vadd.f32 %v51, %v1565
  %1567 = vmatprep.mubr.f32.mxu0 0.0
  %1568 = vmatmul.mubr.f32.gmra.mxu0 %v548
  %v1569 = vpop.f32.mrf.mxu0
  %v1570 = vadd.f32 %v56, %v1569
  %v1571 = vpop.f32.mrf.mxu0
  %v1572 = vadd.f32 %v56, %v1571
  %1573 = vdwg.mxu0
  %1574 = vmatprep.subr.mxu0 0.0
  %1575 = vmatpush1.msra.mxu0 0.0
  %1576 = vmatprep.subr.mxu0 0.0
  %1577 = vmatpush1.msra.mxu0 0.0
  %1578 = vmatprep.subr.mxu0 0.0
  %1579 = vmatpush1.msra.mxu0 0.0
  %1580 = vmatprep.subr.mxu0 0.0
  %1581 = vmatpush1.msra.mxu0 0.0
  %1582 = vmatprep.subr.mxu0 0.0
  %1583 = vmatpush1.msra.mxu0 0.0
  %1584 = vmatprep.subr.mxu0 0.0
  %1585 = vmatpush1.msra.mxu0 0.0
  %1586 = vmatprep.subr.mxu0 0.0
  %1587 = vmatpush1.msra.mxu0 0.0
  %1588 = vmatprep.subr.mxu0 0.0
  %1589 = vmatpush1.msra.mxu0 0.0
  %1590 = vmatprep.subr.mxu0 0.0
  %1591 = vmatpush1.msra.mxu0 0.0
  %1592 = vmatprep.subr.mxu0 0.0
  %1593 = vmatpush1.msra.mxu0 0.0
  %1594 = vmatprep.subr.mxu0 0.0
  %1595 = vmatpush1.msra.mxu0 0.0
  %1596 = vmatprep.subr.mxu0 0.0
  %1597 = vmatpush1.msra.mxu0 0.0
  %1598 = vmatprep.subr.mxu0 0.0
  %1599 = vmatpush1.msra.mxu0 0.0
  %1600 = vmatprep.subr.mxu0 %v536
  %1601 = vmatpush1.msra.mxu0 %v535
  %1602 = vmatprep.subr.mxu0 %v526
  %1603 = vmatpush1.msra.mxu0 %v525
  %1604 = vmatprep.subr.mxu0 %v516
  %1605 = vmatpush1.msra.mxu0 %v515
  %1606 = vmatprep.subr.mxu0 0.0
  %1607 = vmatpush2.msra.mxu0 0.0
  %1608 = vmatprep.subr.mxu0 0.0
  %1609 = vmatpush2.msra.mxu0 0.0
  %1610 = vmatprep.subr.mxu0 0.0
  %1611 = vmatpush2.msra.mxu0 0.0
  %1612 = vmatprep.subr.mxu0 0.0
  %1613 = vmatpush2.msra.mxu0 0.0
  %1614 = vmatprep.subr.mxu0 0.0
  %1615 = vmatpush2.msra.mxu0 0.0
  %1616 = vmatprep.subr.mxu0 0.0
  %1617 = vmatpush2.msra.mxu0 0.0
  %1618 = vmatprep.subr.mxu0 0.0
  %1619 = vmatpush2.msra.mxu0 0.0
  %1620 = vmatprep.subr.mxu0 0.0
  %1621 = vmatpush2.msra.mxu0 0.0
  %1622 = vmatprep.subr.mxu0 0.0
  %1623 = vmatpush2.msra.mxu0 0.0
  %1624 = vmatprep.subr.mxu0 0.0
  %1625 = vmatpush2.msra.mxu0 0.0
  %1626 = vmatprep.subr.mxu0 0.0
  %1627 = vmatpush2.msra.mxu0 0.0
  %1628 = vmatprep.subr.mxu0 0.0
  %1629 = vmatpush2.msra.mxu0 0.0
  %1630 = vmatprep.subr.mxu0 0.0
  %1631 = vmatpush2.msra.mxu0 0.0
  %1632 = vmatprep.subr.mxu0 0.0
  %1633 = vmatpush2.msra.mxu0 0.0
  %1634 = vmatprep.subr.mxu0 0.0
  %1635 = vmatpush2.msra.mxu0 0.0
  %1636 = vmatprep.subr.mxu0 0.0
  %1637 = vmatpush2.msra.mxu0 0.0
  %1638 = vmatprep.mubr.f32.mxu0 0.0
  %1639 = vmatmul.mubr.f32.gmra.mxu0 %v545
  %v1640 = vpop.f32.mrf.mxu0
  %v1641 = vadd.f32 %v51, %v1640
  %v1642 = vpop.f32.mrf.mxu0
  %v1643 = vadd.f32 %v51, %v1642
  %1644 = vmatprep.mubr.f32.mxu0 0.0
  %1645 = vmatmul.mubr.f32.gmra.mxu0 %v548
  %v1646 = vpop.f32.mrf.mxu0
  %v1647 = vadd.f32 %v56, %v1646
  %v1648 = vpop.f32.mrf.mxu0
  %v1649 = vadd.f32 %v56, %v1648
  %1650 = vdwg.mxu0
  %1651 = vmatprep.subr.mxu0 0.0
  %1652 = vmatpush1.msra.mxu0 0.0
  %1653 = vmatprep.subr.mxu0 0.0
  %1654 = vmatpush1.msra.mxu0 0.0
  %1655 = vmatprep.subr.mxu0 0.0
  %1656 = vmatpush1.msra.mxu0 0.0
  %1657 = vmatprep.subr.mxu0 0.0
  %1658 = vmatpush1.msra.mxu0 0.0
  %1659 = vmatprep.subr.mxu0 0.0
  %1660 = vmatpush1.msra.mxu0 0.0
  %1661 = vmatprep.subr.mxu0 0.0
  %1662 = vmatpush1.msra.mxu0 0.0
  %1663 = vmatprep.subr.mxu0 0.0
  %1664 = vmatpush1.msra.mxu0 0.0
  %1665 = vmatprep.subr.mxu0 0.0
  %1666 = vmatpush1.msra.mxu0 0.0
  %1667 = vmatprep.subr.mxu0 0.0
  %1668 = vmatpush1.msra.mxu0 0.0
  %1669 = vmatprep.subr.mxu0 0.0
  %1670 = vmatpush1.msra.mxu0 0.0
  %1671 = vmatprep.subr.mxu0 0.0
  %1672 = vmatpush1.msra.mxu0 0.0
  %1673 = vmatprep.subr.mxu0 0.0
  %1674 = vmatpush1.msra.mxu0 0.0
  %1675 = vmatprep.subr.mxu0 0.0
  %1676 = vmatpush1.msra.mxu0 0.0
  %1677 = vmatprep.subr.mxu0 %v538
  %1678 = vmatpush1.msra.mxu0 %v537
  %1679 = vmatprep.subr.mxu0 %v528
  %1680 = vmatpush1.msra.mxu0 %v527
  %1681 = vmatprep.subr.mxu0 %v518
  %1682 = vmatpush1.msra.mxu0 %v517
  %1683 = vmatprep.subr.mxu0 0.0
  %1684 = vmatpush2.msra.mxu0 0.0
  %1685 = vmatprep.subr.mxu0 0.0
  %1686 = vmatpush2.msra.mxu0 0.0
  %1687 = vmatprep.subr.mxu0 0.0
  %1688 = vmatpush2.msra.mxu0 0.0
  %1689 = vmatprep.subr.mxu0 0.0
  %1690 = vmatpush2.msra.mxu0 0.0
  %1691 = vmatprep.subr.mxu0 0.0
  %1692 = vmatpush2.msra.mxu0 0.0
  %1693 = vmatprep.subr.mxu0 0.0
  %1694 = vmatpush2.msra.mxu0 0.0
  %1695 = vmatprep.subr.mxu0 0.0
  %1696 = vmatpush2.msra.mxu0 0.0
  %1697 = vmatprep.subr.mxu0 0.0
  %1698 = vmatpush2.msra.mxu0 0.0
  %1699 = vmatprep.subr.mxu0 0.0
  %1700 = vmatpush2.msra.mxu0 0.0
  %1701 = vmatprep.subr.mxu0 0.0
  %1702 = vmatpush2.msra.mxu0 0.0
  %1703 = vmatprep.subr.mxu0 0.0
  %1704 = vmatpush2.msra.mxu0 0.0
  %1705 = vmatprep.subr.mxu0 0.0
  %1706 = vmatpush2.msra.mxu0 0.0
  %1707 = vmatprep.subr.mxu0 0.0
  %1708 = vmatpush2.msra.mxu0 0.0
  %1709 = vmatprep.subr.mxu0 0.0
  %1710 = vmatpush2.msra.mxu0 0.0
  %1711 = vmatprep.subr.mxu0 0.0
  %1712 = vmatpush2.msra.mxu0 0.0
  %1713 = vmatprep.subr.mxu0 0.0
  %1714 = vmatpush2.msra.mxu0 0.0
  %1715 = vmatprep.mubr.f32.mxu0 0.0
  %1716 = vmatmul.mubr.f32.gmra.mxu0 %v545
  %v1717 = vpop.f32.mrf.mxu0
  %v1718 = vadd.f32 %v51, %v1717
  %v1719 = vpop.f32.mrf.mxu0
  %v1720 = vadd.f32 %v51, %v1719
  %1721 = vmatprep.mubr.f32.mxu0 0.0
  %1722 = vmatmul.mubr.f32.gmra.mxu0 %v548
  %v1723 = vpop.f32.mrf.mxu0
  %v1724 = vadd.f32 %v56, %v1723
  %v1725 = vpop.f32.mrf.mxu0
  %v1726 = vadd.f32 %v56, %v1725
  %1727 = vdwg.mxu0
  %1728 = vmatprep.subr.mxu0 0.0
  %1729 = vmatpush1.msra.mxu0 0.0
  %1730 = vmatprep.subr.mxu0 0.0
  %1731 = vmatpush1.msra.mxu0 0.0
  %1732 = vmatprep.subr.mxu0 0.0
  %1733 = vmatpush1.msra.mxu0 0.0
  %1734 = vmatprep.subr.mxu0 0.0
  %1735 = vmatpush1.msra.mxu0 0.0
  %1736 = vmatprep.subr.mxu0 0.0
  %1737 = vmatpush1.msra.mxu0 0.0
  %1738 = vmatprep.subr.mxu0 0.0
  %1739 = vmatpush1.msra.mxu0 0.0
  %1740 = vmatprep.subr.mxu0 0.0
  %1741 = vmatpush1.msra.mxu0 0.0
  %1742 = vmatprep.subr.mxu0 0.0
  %1743 = vmatpush1.msra.mxu0 0.0
  %1744 = vmatprep.subr.mxu0 0.0
  %1745 = vmatpush1.msra.mxu0 0.0
  %1746 = vmatprep.subr.mxu0 0.0
  %1747 = vmatpush1.msra.mxu0 0.0
  %1748 = vmatprep.subr.mxu0 0.0
  %1749 = vmatpush1.msra.mxu0 0.0
  %1750 = vmatprep.subr.mxu0 0.0
  %1751 = vmatpush1.msra.mxu0 0.0
  %1752 = vmatprep.subr.mxu0 0.0
  %1753 = vmatpush1.msra.mxu0 0.0
  %1754 = vmatprep.subr.mxu0 %v540
  %1755 = vmatpush1.msra.mxu0 %v539
  %1756 = vmatprep.subr.mxu0 %v530
  %1757 = vmatpush1.msra.mxu0 %v529
  %1758 = vmatprep.subr.mxu0 %v520
  %1759 = vmatpush1.msra.mxu0 %v519
  %1760 = vmatprep.subr.mxu0 0.0
  %1761 = vmatpush2.msra.mxu0 0.0
  %1762 = vmatprep.subr.mxu0 0.0
  %1763 = vmatpush2.msra.mxu0 0.0
  %1764 = vmatprep.subr.mxu0 0.0
  %1765 = vmatpush2.msra.mxu0 0.0
  %1766 = vmatprep.subr.mxu0 0.0
  %1767 = vmatpush2.msra.mxu0 0.0
  %1768 = vmatprep.subr.mxu0 0.0
  %1769 = vmatpush2.msra.mxu0 0.0
  %1770 = vmatprep.subr.mxu0 0.0
  %1771 = vmatpush2.msra.mxu0 0.0
  %1772 = vmatprep.subr.mxu0 0.0
  %1773 = vmatpush2.msra.mxu0 0.0
  %1774 = vmatprep.subr.mxu0 0.0
  %1775 = vmatpush2.msra.mxu0 0.0
  %1776 = vmatprep.subr.mxu0 0.0
  %1777 = vmatpush2.msra.mxu0 0.0
  %1778 = vmatprep.subr.mxu0 0.0
  %1779 = vmatpush2.msra.mxu0 0.0
  %1780 = vmatprep.subr.mxu0 0.0
  %1781 = vmatpush2.msra.mxu0 0.0
  %1782 = vmatprep.subr.mxu0 0.0
  %1783 = vmatpush2.msra.mxu0 0.0
  %1784 = vmatprep.subr.mxu0 0.0
  %1785 = vmatpush2.msra.mxu0 0.0
  %1786 = vmatprep.subr.mxu0 0.0
  %1787 = vmatpush2.msra.mxu0 0.0
  %1788 = vmatprep.subr.mxu0 0.0
  %1789 = vmatpush2.msra.mxu0 0.0
  %1790 = vmatprep.subr.mxu0 0.0
  %1791 = vmatpush2.msra.mxu0 0.0
  %1792 = vmatprep.mubr.f32.mxu0 0.0
  %1793 = vmatmul.mubr.f32.gmra.mxu0 %v545
  %v1794 = vpop.f32.mrf.mxu0
  %v1795 = vadd.f32 %v51, %v1794
  %v1796 = vpop.f32.mrf.mxu0
  %v1797 = vadd.f32 %v51, %v1796
  %1798 = vmatprep.mubr.f32.mxu0 0.0
  %1799 = vmatmul.mubr.f32.gmra.mxu0 %v548
  %v1800 = vpop.f32.mrf.mxu0
  %v1801 = vadd.f32 %v56, %v1800
  %v1802 = vpop.f32.mrf.mxu0
  %v1803 = vadd.f32 %v56, %v1802
  %1804 = vdwg.mxu0
  %vm1805 = vcmp.gt.f32.partialorder %v1487, 0.0
  %vm1806 = vcmp.gt.f32.partialorder %v1489, 0.0
  %vm1807 = vcmp.gt.f32.partialorder %v1564, 0.0
  %vm1808 = vcmp.gt.f32.partialorder %v1566, 0.0
  %vm1809 = vcmp.gt.f32.partialorder %v1641, 0.0
  %vm1810 = vcmp.gt.f32.partialorder %v1643, 0.0
  %vm1811 = vcmp.gt.f32.partialorder %v1718, 0.0
  %vm1812 = vcmp.gt.f32.partialorder %v1720, 0.0
  %vm1813 = vcmp.gt.f32.partialorder %v1795, 0.0
  %vm1814 = vcmp.gt.f32.partialorder %v1797, 0.0
  %vm1815 = vcmp.gt.f32.partialorder %v1493, 0.0
  %vm1816 = vcmp.gt.f32.partialorder %v1495, 0.0
  %vm1817 = vcmp.gt.f32.partialorder %v1570, 0.0
  %vm1818 = vcmp.gt.f32.partialorder %v1572, 0.0
  %vm1819 = vcmp.gt.f32.partialorder %v1647, 0.0
  %vm1820 = vcmp.gt.f32.partialorder %v1649, 0.0
  %vm1821 = vcmp.gt.f32.partialorder %v1724, 0.0
  %vm1822 = vcmp.gt.f32.partialorder %v1726, 0.0
  %vm1823 = vcmp.gt.f32.partialorder %v1801, 0.0
  %vm1824 = vcmp.gt.f32.partialorder %v1803, 0.0
  %v1825 = vmul.f32 %v1487, -0.042
  %v1826 = vmul.f32 %v1489, -0.042
  %v1827 = vmul.f32 %v1564, -0.042
  %v1828 = vmul.f32 %v1566, -0.042
  %v1829 = vmul.f32 %v1641, -0.042
  %v1830 = vmul.f32 %v1643, -0.042
  %v1831 = vmul.f32 %v1718, -0.042
  %v1832 = vmul.f32 %v1720, -0.042
  %v1833 = vmul.f32 %v1795, -0.042
  %v1834 = vmul.f32 %v1797, -0.042
  %v1835 = vmul.f32 %v1493, -0.042
  %v1836 = vmul.f32 %v1495, -0.042
  %v1837 = vmul.f32 %v1570, -0.042
  %v1838 = vmul.f32 %v1572, -0.042
  %v1839 = vmul.f32 %v1647, -0.042
  %v1840 = vmul.f32 %v1649, -0.042
  %v1841 = vmul.f32 %v1724, -0.042
  %v1842 = vmul.f32 %v1726, -0.042
  %v1843 = vmul.f32 %v1801, -0.042
  %v1844 = vmul.f32 %v1803, -0.042
  %v1845 = vsel %vm1805, %v1487, %v1825
  %v1846 = vsel %vm1806, %v1489, %v1826
  %v1847 = vsel %vm1807, %v1564, %v1827
  %v1848 = vsel %vm1808, %v1566, %v1828
  %v1849 = vsel %vm1809, %v1641, %v1829
  %v1850 = vsel %vm1810, %v1643, %v1830
  %v1851 = vsel %vm1811, %v1718, %v1831
  %v1852 = vsel %vm1812, %v1720, %v1832
  %v1853 = vsel %vm1813, %v1795, %v1833
  %v1854 = vsel %vm1814, %v1797, %v1834
  %v1855 = vsel %vm1815, %v1493, %v1835
  %v1856 = vsel %vm1816, %v1495, %v1836
  %v1857 = vsel %vm1817, %v1570, %v1837
  %v1858 = vsel %vm1818, %v1572, %v1838
  %v1859 = vsel %vm1819, %v1647, %v1839
  %v1860 = vsel %vm1820, %v1649, %v1840
  %v1861 = vsel %vm1821, %v1724, %v1841
  %v1862 = vsel %vm1822, %v1726, %v1842
  %v1863 = vsel %vm1823, %v1801, %v1843
  %v1864 = vsel %vm1824, %v1803, %v1844
  %v1865 = vadd.f32 %v1400, %v1845
  %v1866 = vadd.f32 %v1401, %v1846
  %v1867 = vadd.f32 %v1402, %v1847
  %v1868 = vadd.f32 %v1403, %v1848
  %v1869 = vadd.f32 %v1404, %v1849
  %v1870 = vadd.f32 %v1405, %v1850
  %v1871 = vadd.f32 %v1406, %v1851
  %v1872 = vadd.f32 %v1407, %v1852
  %v1873 = vadd.f32 %v1408, %v1853
  %v1874 = vadd.f32 %v1409, %v1854
  %v1875 = vadd.f32 %v1410, %v1855
  %v1876 = vadd.f32 %v1411, %v1856
  %v1877 = vadd.f32 %v1412, %v1857
  %v1878 = vadd.f32 %v1413, %v1858
  %v1879 = vadd.f32 %v1414, %v1859
  %v1880 = vadd.f32 %v1415, %v1860
  %v1881 = vadd.f32 %v1416, %v1861
  %v1882 = vadd.f32 %v1417, %v1862
  %v1883 = vadd.f32 %v1418, %v1863
  %v1884 = vadd.f32 %v1419, %v1864
  %v1885 = vlaneseq
  %v1886 = vshrl.u32 %v1885, 7
  %v1887 = vadd.s32 %v1886, 8
  %v1888 = vadd.s32 %v1886, 16
  %v1889 = vadd.s32 %v1886, 24
  %v1890 = vadd.s32 %v1886, 32
  %v1891 = vadd.s32 %v1886, 40
  %v1892 = vadd.s32 %v1886, 48
  %v1893 = vadd.s32 %v1886, 56
  %v1894 = vadd.s32 %v1886, 64
  %v1895 = vadd.s32 %v1886, 72
  %v1896 = vadd.s32 %v1886, 80
  %v1897 = vadd.s32 %v1886, 88
  %v1898 = vadd.s32 %v1886, 96
  %v1899 = vadd.s32 %v1886, 104
  %v1900 = vadd.s32 %v1886, 112
  %v1901 = vadd.s32 %v1886, 120
  %v1902 = vadd.s32 %v1886, 128
  %v1903 = vadd.s32 %v1886, 136
  %v1904 = vadd.s32 %v1886, 144
  %v1905 = vadd.s32 %v1886, 152
  %v1906 = vadd.s32 %v1886, 160
  %v1907 = vadd.s32 %v1886, 168
  %v1908 = vadd.s32 %v1886, 176
  %v1909 = vadd.s32 %v1886, 184
  %v1910 = vadd.s32 %v1886, 192
  %v1911 = vadd.s32 %v1886, 200
  %v1912 = vadd.s32 %v1886, 208
  %v1913 = vadd.s32 %v1886, 216
  %v1914 = vadd.s32 %v1886, 224
  %v1915 = vadd.s32 %v1886, 232
  %v1916 = vadd.s32 %v1886, 240
  %v1917 = vadd.s32 %v1886, 248
  %v1918 = vadd.s32 %v1886, 256
  %v1919 = vadd.s32 %v1886, 264
  %v1920 = vadd.s32 %v1886, 272
  %v1921 = vadd.s32 %v1886, 280
  %v1922 = vadd.s32 %v1886, 288
  %v1923 = vadd.s32 %v1886, 296
  %v1924 = vadd.s32 %v1886, 304
  %v1925 = vadd.s32 %v1886, 312
  %v1926 = vadd.s32 %v1886, 320
  %v1927 = vadd.s32 %v1886, 328
  %v1928 = vadd.s32 %v1886, 336
  %v1929 = vadd.s32 %v1886, 344
  %v1930 = vadd.s32 %v1886, 352
  %v1931 = vadd.s32 %v1886, 360
  %v1932 = vadd.s32 %v1886, 368
  %v1933 = vadd.s32 %v1886, 376
  %v1934 = vadd.s32 %v1886, 384
  %v1935 = vadd.s32 %v1886, 392
  %v1936 = vadd.s32 %v1886, 400
  %v1937 = vadd.s32 %v1886, 408
  %v1938 = vadd.s32 %v1886, 416
  %v1939 = vadd.s32 %v1886, 424
  %v1940 = vadd.s32 %v1886, 432
  %v1941 = vadd.s32 %v1886, 440
  %v1942 = vadd.s32 %v1886, 448
  %v1943 = vadd.s32 %v1886, 456
  %v1944 = vadd.s32 %v1886, 464
  %v1945 = vadd.s32 %v1886, 472
  %v1946 = vadd.s32 %v1886, 480
  %v1947 = vadd.s32 %v1886, 488
  %v1948 = vadd.s32 %v1886, 496
  %v1949 = vadd.s32 %v1886, 504
  %v1950 = vadd.s32 %v1886, 512
  %v1951 = vadd.s32 %v1886, 520
  %v1952 = vadd.s32 %v1886, 528
  %v1953 = vadd.s32 %v1886, 536
  %v1954 = vadd.s32 %v1886, 544
  %v1955 = vadd.s32 %v1886, 552
  %v1956 = vadd.s32 %v1886, 560
  %v1957 = vadd.s32 %v1886, 568
  %v1958 = vadd.s32 %v1886, 576
  %v1959 = vadd.s32 %v1886, 584
  %v1960 = vadd.s32 %v1886, 592
  %v1961 = vadd.s32 %v1886, 600
  %v1962 = vadd.s32 %v1886, 608
  %v1963 = vadd.s32 %v1886, 616
  %v1964 = vadd.s32 %v1886, 624
  %v1965 = vadd.s32 %v1886, 632
  %v1966 = vadd.s32 %v1886, 640
  %v1967 = vadd.s32 %v1886, 648
  %v1968 = vadd.s32 %v1886, 656
  %v1969 = vadd.s32 %v1886, 664
  %v1970 = vadd.s32 %v1886, 672
  %v1971 = vadd.s32 %v1886, 680
  %v1972 = vadd.s32 %v1886, 688
  %v1973 = vadd.s32 %v1886, 696
  %v1974 = vadd.s32 %v1886, 704
  %v1975 = vadd.s32 %v1886, 712
  %v1976 = vadd.s32 %v1886, 720
  %v1977 = vadd.s32 %v1886, 728
  %v1978 = vadd.s32 %v1886, 736
  %v1979 = vadd.s32 %v1886, 744
  %v1980 = vadd.s32 %v1886, 752
  %v1981 = vadd.s32 %v1886, 760
  %v1982 = vadd.s32 %v1886, 768
  %v1983 = vadd.s32 %v1886, 776
  %v1984 = vadd.s32 %v1886, 784
  %v1985 = vadd.s32 %v1886, 792
  %v1986 = vadd.s32 %v1886, 800
  %v1987 = vadd.s32 %v1886, 808
  %v1988 = vadd.s32 %v1886, 816
  %v1989 = vadd.s32 %v1886, 824
  %v1990 = vadd.s32 %v1886, 832
  %v1991 = vadd.s32 %v1886, 840
  %v1992 = vadd.s32 %v1886, 848
  %v1993 = vadd.s32 %v1886, 856
  %v1994 = vadd.s32 %v1886, 864
  %v1995 = vadd.s32 %v1886, 872
  %v1996 = vadd.s32 %v1886, 880
  %v1997 = vadd.s32 %v1886, 888
  %v1998 = vadd.s32 %v1886, 896
  %v1999 = vadd.s32 %v1886, 904
  %v2000 = vadd.s32 %v1886, 912
  %v2001 = vadd.s32 %v1886, 920
  %v2002 = vadd.s32 %v1886, 928
  %v2003 = vadd.s32 %v1886, 936
  %v2004 = vadd.s32 %v1886, 944
  %v2005 = vadd.s32 %v1886, 952
  %v2006 = vadd.s32 %v1886, 960
  %v2007 = vadd.s32 %v1886, 968
  %v2008 = vadd.s32 %v1886, 976
  %v2009 = vadd.s32 %v1886, 984
  %v2010 = vadd.s32 %v1886, 992
  %v2011 = vadd.s32 %v1886, 1000
  %v2012 = vadd.s32 %v1886, 1008
  %v2013 = vadd.s32 %v1886, 1016
  %v2014 = vadd.s32 %v1886, 1024
  %v2015 = vadd.s32 %v1886, 1032
  %v2016 = vadd.s32 %v1886, 1040
  %v2017 = vadd.s32 %v1886, 1048
  %v2018 = vadd.s32 %v1886, 1056
  %v2019 = vadd.s32 %v1886, 1064
  %v2020 = vadd.s32 %v1886, 1072
  %v2021 = vadd.s32 %v1886, 1080
  %v2022 = vadd.s32 %v1886, 1088
  %v2023 = vadd.s32 %v1886, 1096
  %v2024 = vadd.s32 %v1886, 1104
  %v2025 = vadd.s32 %v1886, 1112
  %v2026 = vadd.s32 %v1886, 1120
  %v2027 = vadd.s32 %v1886, 1128
  %v2028 = vadd.s32 %v1886, 1136
  %v2029 = vadd.s32 %v1886, 1144
  %v2030 = vadd.s32 %v1886, 1152
  %v2031 = vadd.s32 %v1886, 1160
  %v2032 = vadd.s32 %v1886, 1168
  %v2033 = vadd.s32 %v1886, 1176
  %v2034 = vadd.s32 %v1886, 1184
  %v2035 = vadd.s32 %v1886, 1192
  %v2036 = vadd.s32 %v1886, 1200
  %v2037 = vadd.s32 %v1886, 1208
  %v2038 = vlaneseq
  %v2039 = vand.u32 %v2038, 127
  %v2040 = vmul.u32 %v2039, 64
  %vm2041 = vcmp.ge.s32.totalorder %v1886, %v2040
  %vm2042 = vcmp.ge.s32.totalorder %v1887, %v2040
  %vm2043 = vcmp.ge.s32.totalorder %v1888, %v2040
  %vm2044 = vcmp.ge.s32.totalorder %v1889, %v2040
  %vm2045 = vcmp.ge.s32.totalorder %v1890, %v2040
  %vm2046 = vcmp.ge.s32.totalorder %v1891, %v2040
  %vm2047 = vcmp.ge.s32.totalorder %v1892, %v2040
  %vm2048 = vcmp.ge.s32.totalorder %v1893, %v2040
  %vm2049 = vcmp.ge.s32.totalorder %v1894, %v2040
  %vm2050 = vcmp.ge.s32.totalorder %v1895, %v2040
  %vm2051 = vcmp.ge.s32.totalorder %v1896, %v2040
  %vm2052 = vcmp.ge.s32.totalorder %v1897, %v2040
  %vm2053 = vcmp.ge.s32.totalorder %v1898, %v2040
  %vm2054 = vcmp.ge.s32.totalorder %v1899, %v2040
  %vm2055 = vcmp.ge.s32.totalorder %v1900, %v2040
  %vm2056 = vcmp.ge.s32.totalorder %v1901, %v2040
  %vm2057 = vcmp.ge.s32.totalorder %v1902, %v2040
  %vm2058 = vcmp.ge.s32.totalorder %v1903, %v2040
  %vm2059 = vcmp.ge.s32.totalorder %v1904, %v2040
  %vm2060 = vcmp.ge.s32.totalorder %v1905, %v2040
  %vm2061 = vcmp.ge.s32.totalorder %v1906, %v2040
  %vm2062 = vcmp.ge.s32.totalorder %v1907, %v2040
  %vm2063 = vcmp.ge.s32.totalorder %v1908, %v2040
  %vm2064 = vcmp.ge.s32.totalorder %v1909, %v2040
  %vm2065 = vcmp.ge.s32.totalorder %v1910, %v2040
  %vm2066 = vcmp.ge.s32.totalorder %v1911, %v2040
  %vm2067 = vcmp.ge.s32.totalorder %v1912, %v2040
  %vm2068 = vcmp.ge.s32.totalorder %v1913, %v2040
  %vm2069 = vcmp.ge.s32.totalorder %v1914, %v2040
  %vm2070 = vcmp.ge.s32.totalorder %v1915, %v2040
  %vm2071 = vcmp.ge.s32.totalorder %v1916, %v2040
  %vm2072 = vcmp.ge.s32.totalorder %v1917, %v2040
  %vm2073 = vcmp.ge.s32.totalorder %v1918, %v2040
  %vm2074 = vcmp.ge.s32.totalorder %v1919, %v2040
  %vm2075 = vcmp.ge.s32.totalorder %v1920, %v2040
  %vm2076 = vcmp.ge.s32.totalorder %v1921, %v2040
  %vm2077 = vcmp.ge.s32.totalorder %v1922, %v2040
  %vm2078 = vcmp.ge.s32.totalorder %v1923, %v2040
  %vm2079 = vcmp.ge.s32.totalorder %v1924, %v2040
  %vm2080 = vcmp.ge.s32.totalorder %v1925, %v2040
  %vm2081 = vcmp.ge.s32.totalorder %v1926, %v2040
  %vm2082 = vcmp.ge.s32.totalorder %v1927, %v2040
  %vm2083 = vcmp.ge.s32.totalorder %v1928, %v2040
  %vm2084 = vcmp.ge.s32.totalorder %v1929, %v2040
  %vm2085 = vcmp.ge.s32.totalorder %v1930, %v2040
  %vm2086 = vcmp.ge.s32.totalorder %v1931, %v2040
  %vm2087 = vcmp.ge.s32.totalorder %v1932, %v2040
  %vm2088 = vcmp.ge.s32.totalorder %v1933, %v2040
  %vm2089 = vcmp.ge.s32.totalorder %v1934, %v2040
  %vm2090 = vcmp.ge.s32.totalorder %v1935, %v2040
  %vm2091 = vcmp.ge.s32.totalorder %v1936, %v2040
  %vm2092 = vcmp.ge.s32.totalorder %v1937, %v2040
  %vm2093 = vcmp.ge.s32.totalorder %v1938, %v2040
  %vm2094 = vcmp.ge.s32.totalorder %v1939, %v2040
  %vm2095 = vcmp.ge.s32.totalorder %v1940, %v2040
  %vm2096 = vcmp.ge.s32.totalorder %v1941, %v2040
  %vm2097 = vcmp.ge.s32.totalorder %v1942, %v2040
  %vm2098 = vcmp.ge.s32.totalorder %v1943, %v2040
  %vm2099 = vcmp.ge.s32.totalorder %v1944, %v2040
  %vm2100 = vcmp.ge.s32.totalorder %v1945, %v2040
  %vm2101 = vcmp.ge.s32.totalorder %v1946, %v2040
  %vm2102 = vcmp.ge.s32.totalorder %v1947, %v2040
  %vm2103 = vcmp.ge.s32.totalorder %v1948, %v2040
  %vm2104 = vcmp.ge.s32.totalorder %v1949, %v2040
  %vm2105 = vcmp.ge.s32.totalorder %v1950, %v2040
  %vm2106 = vcmp.ge.s32.totalorder %v1951, %v2040
  %vm2107 = vcmp.ge.s32.totalorder %v1952, %v2040
  %vm2108 = vcmp.ge.s32.totalorder %v1953, %v2040
  %vm2109 = vcmp.ge.s32.totalorder %v1954, %v2040
  %vm2110 = vcmp.ge.s32.totalorder %v1955, %v2040
  %vm2111 = vcmp.ge.s32.totalorder %v1956, %v2040
  %vm2112 = vcmp.ge.s32.totalorder %v1957, %v2040
  %vm2113 = vcmp.ge.s32.totalorder %v1958, %v2040
  %vm2114 = vcmp.ge.s32.totalorder %v1959, %v2040
  %vm2115 = vcmp.ge.s32.totalorder %v1960, %v2040
  %vm2116 = vcmp.ge.s32.totalorder %v1961, %v2040
  %vm2117 = vcmp.ge.s32.totalorder %v1962, %v2040
  %vm2118 = vcmp.ge.s32.totalorder %v1963, %v2040
  %vm2119 = vcmp.ge.s32.totalorder %v1964, %v2040
  %vm2120 = vcmp.ge.s32.totalorder %v1965, %v2040
  %vm2121 = vcmp.ge.s32.totalorder %v1966, %v2040
  %vm2122 = vcmp.ge.s32.totalorder %v1967, %v2040
  %vm2123 = vcmp.ge.s32.totalorder %v1968, %v2040
  %vm2124 = vcmp.ge.s32.totalorder %v1969, %v2040
  %vm2125 = vcmp.ge.s32.totalorder %v1970, %v2040
  %vm2126 = vcmp.ge.s32.totalorder %v1971, %v2040
  %vm2127 = vcmp.ge.s32.totalorder %v1972, %v2040
  %vm2128 = vcmp.ge.s32.totalorder %v1973, %v2040
  %vm2129 = vcmp.ge.s32.totalorder %v1974, %v2040
  %vm2130 = vcmp.ge.s32.totalorder %v1975, %v2040
  %vm2131 = vcmp.ge.s32.totalorder %v1976, %v2040
  %vm2132 = vcmp.ge.s32.totalorder %v1977, %v2040
  %vm2133 = vcmp.ge.s32.totalorder %v1978, %v2040
  %vm2134 = vcmp.ge.s32.totalorder %v1979, %v2040
  %vm2135 = vcmp.ge.s32.totalorder %v1980, %v2040
  %vm2136 = vcmp.ge.s32.totalorder %v1981, %v2040
  %vm2137 = vcmp.ge.s32.totalorder %v1982, %v2040
  %vm2138 = vcmp.ge.s32.totalorder %v1983, %v2040
  %vm2139 = vcmp.ge.s32.totalorder %v1984, %v2040
  %vm2140 = vcmp.ge.s32.totalorder %v1985, %v2040
  %vm2141 = vcmp.ge.s32.totalorder %v1986, %v2040
  %vm2142 = vcmp.ge.s32.totalorder %v1987, %v2040
  %vm2143 = vcmp.ge.s32.totalorder %v1988, %v2040
  %vm2144 = vcmp.ge.s32.totalorder %v1989, %v2040
  %vm2145 = vcmp.ge.s32.totalorder %v1990, %v2040
  %vm2146 = vcmp.ge.s32.totalorder %v1991, %v2040
  %vm2147 = vcmp.ge.s32.totalorder %v1992, %v2040
  %vm2148 = vcmp.ge.s32.totalorder %v1993, %v2040
  %vm2149 = vcmp.ge.s32.totalorder %v1994, %v2040
  %vm2150 = vcmp.ge.s32.totalorder %v1995, %v2040
  %vm2151 = vcmp.ge.s32.totalorder %v1996, %v2040
  %vm2152 = vcmp.ge.s32.totalorder %v1997, %v2040
  %vm2153 = vcmp.ge.s32.totalorder %v1998, %v2040
  %vm2154 = vcmp.ge.s32.totalorder %v1999, %v2040
  %vm2155 = vcmp.ge.s32.totalorder %v2000, %v2040
  %vm2156 = vcmp.ge.s32.totalorder %v2001, %v2040
  %vm2157 = vcmp.ge.s32.totalorder %v2002, %v2040
  %vm2158 = vcmp.ge.s32.totalorder %v2003, %v2040
  %vm2159 = vcmp.ge.s32.totalorder %v2004, %v2040
  %vm2160 = vcmp.ge.s32.totalorder %v2005, %v2040
  %vm2161 = vcmp.ge.s32.totalorder %v2006, %v2040
  %vm2162 = vcmp.ge.s32.totalorder %v2007, %v2040
  %vm2163 = vcmp.ge.s32.totalorder %v2008, %v2040
  %vm2164 = vcmp.ge.s32.totalorder %v2009, %v2040
  %vm2165 = vcmp.ge.s32.totalorder %v2010, %v2040
  %vm2166 = vcmp.ge.s32.totalorder %v2011, %v2040
  %vm2167 = vcmp.ge.s32.totalorder %v2012, %v2040
  %vm2168 = vcmp.ge.s32.totalorder %v2013, %v2040
  %vm2169 = vcmp.ge.s32.totalorder %v2014, %v2040
  %vm2170 = vcmp.ge.s32.totalorder %v2015, %v2040
  %vm2171 = vcmp.ge.s32.totalorder %v2016, %v2040
  %vm2172 = vcmp.ge.s32.totalorder %v2017, %v2040
  %vm2173 = vcmp.ge.s32.totalorder %v2018, %v2040
  %vm2174 = vcmp.ge.s32.totalorder %v2019, %v2040
  %vm2175 = vcmp.ge.s32.totalorder %v2020, %v2040
  %vm2176 = vcmp.ge.s32.totalorder %v2021, %v2040
  %vm2177 = vcmp.ge.s32.totalorder %v2022, %v2040
  %vm2178 = vcmp.ge.s32.totalorder %v2023, %v2040
  %vm2179 = vcmp.ge.s32.totalorder %v2024, %v2040
  %vm2180 = vcmp.ge.s32.totalorder %v2025, %v2040
  %vm2181 = vcmp.ge.s32.totalorder %v2026, %v2040
  %vm2182 = vcmp.ge.s32.totalorder %v2027, %v2040
  %vm2183 = vcmp.ge.s32.totalorder %v2028, %v2040
  %vm2184 = vcmp.ge.s32.totalorder %v2029, %v2040
  %vm2185 = vcmp.ge.s32.totalorder %v2030, %v2040
  %vm2186 = vcmp.ge.s32.totalorder %v2031, %v2040
  %vm2187 = vcmp.ge.s32.totalorder %v2032, %v2040
  %vm2188 = vcmp.ge.s32.totalorder %v2033, %v2040
  %vm2189 = vcmp.ge.s32.totalorder %v2034, %v2040
  %vm2190 = vcmp.ge.s32.totalorder %v2035, %v2040
  %vm2191 = vcmp.ge.s32.totalorder %v2036, %v2040
  %vm2192 = vcmp.ge.s32.totalorder %v2037, %v2040
  %v2193 = vadd.s32 %v2040, 64
  %vm2194 = vcmp.lt.s32.totalorder %v1886, %v2193
  %vm2195 = vcmp.lt.s32.totalorder %v1887, %v2193
  %vm2196 = vcmp.lt.s32.totalorder %v1888, %v2193
  %vm2197 = vcmp.lt.s32.totalorder %v1889, %v2193
  %vm2198 = vcmp.lt.s32.totalorder %v1890, %v2193
  %vm2199 = vcmp.lt.s32.totalorder %v1891, %v2193
  %vm2200 = vcmp.lt.s32.totalorder %v1892, %v2193
  %vm2201 = vcmp.lt.s32.totalorder %v1893, %v2193
  %vm2202 = vcmp.lt.s32.totalorder %v1894, %v2193
  %vm2203 = vcmp.lt.s32.totalorder %v1895, %v2193
  %vm2204 = vcmp.lt.s32.totalorder %v1896, %v2193
  %vm2205 = vcmp.lt.s32.totalorder %v1897, %v2193
  %vm2206 = vcmp.lt.s32.totalorder %v1898, %v2193
  %vm2207 = vcmp.lt.s32.totalorder %v1899, %v2193
  %vm2208 = vcmp.lt.s32.totalorder %v1900, %v2193
  %vm2209 = vcmp.lt.s32.totalorder %v1901, %v2193
  %vm2210 = vcmp.lt.s32.totalorder %v1902, %v2193
  %vm2211 = vcmp.lt.s32.totalorder %v1903, %v2193
  %vm2212 = vcmp.lt.s32.totalorder %v1904, %v2193
  %vm2213 = vcmp.lt.s32.totalorder %v1905, %v2193
  %vm2214 = vcmp.lt.s32.totalorder %v1906, %v2193
  %vm2215 = vcmp.lt.s32.totalorder %v1907, %v2193
  %vm2216 = vcmp.lt.s32.totalorder %v1908, %v2193
  %vm2217 = vcmp.lt.s32.totalorder %v1909, %v2193
  %vm2218 = vcmp.lt.s32.totalorder %v1910, %v2193
  %vm2219 = vcmp.lt.s32.totalorder %v1911, %v2193
  %vm2220 = vcmp.lt.s32.totalorder %v1912, %v2193
  %vm2221 = vcmp.lt.s32.totalorder %v1913, %v2193
  %vm2222 = vcmp.lt.s32.totalorder %v1914, %v2193
  %vm2223 = vcmp.lt.s32.totalorder %v1915, %v2193
  %vm2224 = vcmp.lt.s32.totalorder %v1916, %v2193
  %vm2225 = vcmp.lt.s32.totalorder %v1917, %v2193
  %vm2226 = vcmp.lt.s32.totalorder %v1918, %v2193
  %vm2227 = vcmp.lt.s32.totalorder %v1919, %v2193
  %vm2228 = vcmp.lt.s32.totalorder %v1920, %v2193
  %vm2229 = vcmp.lt.s32.totalorder %v1921, %v2193
  %vm2230 = vcmp.lt.s32.totalorder %v1922, %v2193
  %vm2231 = vcmp.lt.s32.totalorder %v1923, %v2193
  %vm2232 = vcmp.lt.s32.totalorder %v1924, %v2193
  %vm2233 = vcmp.lt.s32.totalorder %v1925, %v2193
  %vm2234 = vcmp.lt.s32.totalorder %v1926, %v2193
  %vm2235 = vcmp.lt.s32.totalorder %v1927, %v2193
  %vm2236 = vcmp.lt.s32.totalorder %v1928, %v2193
  %vm2237 = vcmp.lt.s32.totalorder %v1929, %v2193
  %vm2238 = vcmp.lt.s32.totalorder %v1930, %v2193
  %vm2239 = vcmp.lt.s32.totalorder %v1931, %v2193
  %vm2240 = vcmp.lt.s32.totalorder %v1932, %v2193
  %vm2241 = vcmp.lt.s32.totalorder %v1933, %v2193
  %vm2242 = vcmp.lt.s32.totalorder %v1934, %v2193
  %vm2243 = vcmp.lt.s32.totalorder %v1935, %v2193
  %vm2244 = vcmp.lt.s32.totalorder %v1936, %v2193
  %vm2245 = vcmp.lt.s32.totalorder %v1937, %v2193
  %vm2246 = vcmp.lt.s32.totalorder %v1938, %v2193
  %vm2247 = vcmp.lt.s32.totalorder %v1939, %v2193
  %vm2248 = vcmp.lt.s32.totalorder %v1940, %v2193
  %vm2249 = vcmp.lt.s32.totalorder %v1941, %v2193
  %vm2250 = vcmp.lt.s32.totalorder %v1942, %v2193
  %vm2251 = vcmp.lt.s32.totalorder %v1943, %v2193
  %vm2252 = vcmp.lt.s32.totalorder %v1944, %v2193
  %vm2253 = vcmp.lt.s32.totalorder %v1945, %v2193
  %vm2254 = vcmp.lt.s32.totalorder %v1946, %v2193
  %vm2255 = vcmp.lt.s32.totalorder %v1947, %v2193
  %vm2256 = vcmp.lt.s32.totalorder %v1948, %v2193
  %vm2257 = vcmp.lt.s32.totalorder %v1949, %v2193
  %vm2258 = vcmp.lt.s32.totalorder %v1950, %v2193
  %vm2259 = vcmp.lt.s32.totalorder %v1951, %v2193
  %vm2260 = vcmp.lt.s32.totalorder %v1952, %v2193
  %vm2261 = vcmp.lt.s32.totalorder %v1953, %v2193
  %vm2262 = vcmp.lt.s32.totalorder %v1954, %v2193
  %vm2263 = vcmp.lt.s32.totalorder %v1955, %v2193
  %vm2264 = vcmp.lt.s32.totalorder %v1956, %v2193
  %vm2265 = vcmp.lt.s32.totalorder %v1957, %v2193
  %vm2266 = vcmp.lt.s32.totalorder %v1958, %v2193
  %vm2267 = vcmp.lt.s32.totalorder %v1959, %v2193
  %vm2268 = vcmp.lt.s32.totalorder %v1960, %v2193
  %vm2269 = vcmp.lt.s32.totalorder %v1961, %v2193
  %vm2270 = vcmp.lt.s32.totalorder %v1962, %v2193
  %vm2271 = vcmp.lt.s32.totalorder %v1963, %v2193
  %vm2272 = vcmp.lt.s32.totalorder %v1964, %v2193
  %vm2273 = vcmp.lt.s32.totalorder %v1965, %v2193
  %vm2274 = vcmp.lt.s32.totalorder %v1966, %v2193
  %vm2275 = vcmp.lt.s32.totalorder %v1967, %v2193
  %vm2276 = vcmp.lt.s32.totalorder %v1968, %v2193
  %vm2277 = vcmp.lt.s32.totalorder %v1969, %v2193
  %vm2278 = vcmp.lt.s32.totalorder %v1970, %v2193
  %vm2279 = vcmp.lt.s32.totalorder %v1971, %v2193
  %vm2280 = vcmp.lt.s32.totalorder %v1972, %v2193
  %vm2281 = vcmp.lt.s32.totalorder %v1973, %v2193
  %vm2282 = vcmp.lt.s32.totalorder %v1974, %v2193
  %vm2283 = vcmp.lt.s32.totalorder %v1975, %v2193
  %vm2284 = vcmp.lt.s32.totalorder %v1976, %v2193
  %vm2285 = vcmp.lt.s32.totalorder %v1977, %v2193
  %vm2286 = vcmp.lt.s32.totalorder %v1978, %v2193
  %vm2287 = vcmp.lt.s32.totalorder %v1979, %v2193
  %vm2288 = vcmp.lt.s32.totalorder %v1980, %v2193
  %vm2289 = vcmp.lt.s32.totalorder %v1981, %v2193
  %vm2290 = vcmp.lt.s32.totalorder %v1982, %v2193
  %vm2291 = vcmp.lt.s32.totalorder %v1983, %v2193
  %vm2292 = vcmp.lt.s32.totalorder %v1984, %v2193
  %vm2293 = vcmp.lt.s32.totalorder %v1985, %v2193
  %vm2294 = vcmp.lt.s32.totalorder %v1986, %v2193
  %vm2295 = vcmp.lt.s32.totalorder %v1987, %v2193
  %vm2296 = vcmp.lt.s32.totalorder %v1988, %v2193
  %vm2297 = vcmp.lt.s32.totalorder %v1989, %v2193
  %vm2298 = vcmp.lt.s32.totalorder %v1990, %v2193
  %vm2299 = vcmp.lt.s32.totalorder %v1991, %v2193
  %vm2300 = vcmp.lt.s32.totalorder %v1992, %v2193
  %vm2301 = vcmp.lt.s32.totalorder %v1993, %v2193
  %vm2302 = vcmp.lt.s32.totalorder %v1994, %v2193
  %vm2303 = vcmp.lt.s32.totalorder %v1995, %v2193
  %vm2304 = vcmp.lt.s32.totalorder %v1996, %v2193
  %vm2305 = vcmp.lt.s32.totalorder %v1997, %v2193
  %vm2306 = vcmp.lt.s32.totalorder %v1998, %v2193
  %vm2307 = vcmp.lt.s32.totalorder %v1999, %v2193
  %vm2308 = vcmp.lt.s32.totalorder %v2000, %v2193
  %vm2309 = vcmp.lt.s32.totalorder %v2001, %v2193
  %vm2310 = vcmp.lt.s32.totalorder %v2002, %v2193
  %vm2311 = vcmp.lt.s32.totalorder %v2003, %v2193
  %vm2312 = vcmp.lt.s32.totalorder %v2004, %v2193
  %vm2313 = vcmp.lt.s32.totalorder %v2005, %v2193
  %vm2314 = vcmp.lt.s32.totalorder %v2006, %v2193
  %vm2315 = vcmp.lt.s32.totalorder %v2007, %v2193
  %vm2316 = vcmp.lt.s32.totalorder %v2008, %v2193
  %vm2317 = vcmp.lt.s32.totalorder %v2009, %v2193
  %vm2318 = vcmp.lt.s32.totalorder %v2010, %v2193
  %vm2319 = vcmp.lt.s32.totalorder %v2011, %v2193
  %vm2320 = vcmp.lt.s32.totalorder %v2012, %v2193
  %vm2321 = vcmp.lt.s32.totalorder %v2013, %v2193
  %vm2322 = vcmp.lt.s32.totalorder %v2014, %v2193
  %vm2323 = vcmp.lt.s32.totalorder %v2015, %v2193
  %vm2324 = vcmp.lt.s32.totalorder %v2016, %v2193
  %vm2325 = vcmp.lt.s32.totalorder %v2017, %v2193
  %vm2326 = vcmp.lt.s32.totalorder %v2018, %v2193
  %vm2327 = vcmp.lt.s32.totalorder %v2019, %v2193
  %vm2328 = vcmp.lt.s32.totalorder %v2020, %v2193
  %vm2329 = vcmp.lt.s32.totalorder %v2021, %v2193
  %vm2330 = vcmp.lt.s32.totalorder %v2022, %v2193
  %vm2331 = vcmp.lt.s32.totalorder %v2023, %v2193
  %vm2332 = vcmp.lt.s32.totalorder %v2024, %v2193
  %vm2333 = vcmp.lt.s32.totalorder %v2025, %v2193
  %vm2334 = vcmp.lt.s32.totalorder %v2026, %v2193
  %vm2335 = vcmp.lt.s32.totalorder %v2027, %v2193
  %vm2336 = vcmp.lt.s32.totalorder %v2028, %v2193
  %vm2337 = vcmp.lt.s32.totalorder %v2029, %v2193
  %vm2338 = vcmp.lt.s32.totalorder %v2030, %v2193
  %vm2339 = vcmp.lt.s32.totalorder %v2031, %v2193
  %vm2340 = vcmp.lt.s32.totalorder %v2032, %v2193
  %vm2341 = vcmp.lt.s32.totalorder %v2033, %v2193
  %vm2342 = vcmp.lt.s32.totalorder %v2034, %v2193
  %vm2343 = vcmp.lt.s32.totalorder %v2035, %v2193
  %vm2344 = vcmp.lt.s32.totalorder %v2036, %v2193
  %vm2345 = vcmp.lt.s32.totalorder %v2037, %v2193
  %vm2346 = vmand %vm2041, %vm2194
  %vm2347 = vmand %vm2042, %vm2195
  %vm2348 = vmand %vm2043, %vm2196
  %vm2349 = vmand %vm2044, %vm2197
  %vm2350 = vmand %vm2045, %vm2198
  %vm2351 = vmand %vm2046, %vm2199
  %vm2352 = vmand %vm2047, %vm2200
  %vm2353 = vmand %vm2048, %vm2201
  %vm2354 = vmand %vm2049, %vm2202
  %vm2355 = vmand %vm2050, %vm2203
  %vm2356 = vmand %vm2051, %vm2204
  %vm2357 = vmand %vm2052, %vm2205
  %vm2358 = vmand %vm2053, %vm2206
  %vm2359 = vmand %vm2054, %vm2207
  %vm2360 = vmand %vm2055, %vm2208
  %vm2361 = vmand %vm2056, %vm2209
  %vm2362 = vmand %vm2057, %vm2210
  %vm2363 = vmand %vm2058, %vm2211
  %vm2364 = vmand %vm2059, %vm2212
  %vm2365 = vmand %vm2060, %vm2213
  %vm2366 = vmand %vm2061, %vm2214
  %vm2367 = vmand %vm2062, %vm2215
  %vm2368 = vmand %vm2063, %vm2216
  %vm2369 = vmand %vm2064, %vm2217
  %vm2370 = vmand %vm2065, %vm2218
  %vm2371 = vmand %vm2066, %vm2219
  %vm2372 = vmand %vm2067, %vm2220
  %vm2373 = vmand %vm2068, %vm2221
  %vm2374 = vmand %vm2069, %vm2222
  %vm2375 = vmand %vm2070, %vm2223
  %vm2376 = vmand %vm2071, %vm2224
  %vm2377 = vmand %vm2072, %vm2225
  %vm2378 = vmand %vm2073, %vm2226
  %vm2379 = vmand %vm2074, %vm2227
  %vm2380 = vmand %vm2075, %vm2228
  %vm2381 = vmand %vm2076, %vm2229
  %vm2382 = vmand %vm2077, %vm2230
  %vm2383 = vmand %vm2078, %vm2231
  %vm2384 = vmand %vm2079, %vm2232
  %vm2385 = vmand %vm2080, %vm2233
  %vm2386 = vmand %vm2081, %vm2234
  %vm2387 = vmand %vm2082, %vm2235
  %vm2388 = vmand %vm2083, %vm2236
  %vm2389 = vmand %vm2084, %vm2237
  %vm2390 = vmand %vm2085, %vm2238
  %vm2391 = vmand %vm2086, %vm2239
  %vm2392 = vmand %vm2087, %vm2240
  %vm2393 = vmand %vm2088, %vm2241
  %vm2394 = vmand %vm2089, %vm2242
  %vm2395 = vmand %vm2090, %vm2243
  %vm2396 = vmand %vm2091, %vm2244
  %vm2397 = vmand %vm2092, %vm2245
  %vm2398 = vmand %vm2093, %vm2246
  %vm2399 = vmand %vm2094, %vm2247
  %vm2400 = vmand %vm2095, %vm2248
  %vm2401 = vmand %vm2096, %vm2249
  %vm2402 = vmand %vm2097, %vm2250
  %vm2403 = vmand %vm2098, %vm2251
  %vm2404 = vmand %vm2099, %vm2252
  %vm2405 = vmand %vm2100, %vm2253
  %vm2406 = vmand %vm2101, %vm2254
  %vm2407 = vmand %vm2102, %vm2255
  %vm2408 = vmand %vm2103, %vm2256
  %vm2409 = vmand %vm2104, %vm2257
  %vm2410 = vmand %vm2105, %vm2258
  %vm2411 = vmand %vm2106, %vm2259
  %vm2412 = vmand %vm2107, %vm2260
  %vm2413 = vmand %vm2108, %vm2261
  %vm2414 = vmand %vm2109, %vm2262
  %vm2415 = vmand %vm2110, %vm2263
  %vm2416 = vmand %vm2111, %vm2264
  %vm2417 = vmand %vm2112, %vm2265
  %vm2418 = vmand %vm2113, %vm2266
  %vm2419 = vmand %vm2114, %vm2267
  %vm2420 = vmand %vm2115, %vm2268
  %vm2421 = vmand %vm2116, %vm2269
  %vm2422 = vmand %vm2117, %vm2270
  %vm2423 = vmand %vm2118, %vm2271
  %vm2424 = vmand %vm2119, %vm2272
  %vm2425 = vmand %vm2120, %vm2273
  %vm2426 = vmand %vm2121, %vm2274
  %vm2427 = vmand %vm2122, %vm2275
  %vm2428 = vmand %vm2123, %vm2276
  %vm2429 = vmand %vm2124, %vm2277
  %vm2430 = vmand %vm2125, %vm2278
  %vm2431 = vmand %vm2126, %vm2279
  %vm2432 = vmand %vm2127, %vm2280
  %vm2433 = vmand %vm2128, %vm2281
  %vm2434 = vmand %vm2129, %vm2282
  %vm2435 = vmand %vm2130, %vm2283
  %vm2436 = vmand %vm2131, %vm2284
  %vm2437 = vmand %vm2132, %vm2285
  %vm2438 = vmand %vm2133, %vm2286
  %vm2439 = vmand %vm2134, %vm2287
  %vm2440 = vmand %vm2135, %vm2288
  %vm2441 = vmand %vm2136, %vm2289
  %vm2442 = vmand %vm2137, %vm2290
  %vm2443 = vmand %vm2138, %vm2291
  %vm2444 = vmand %vm2139, %vm2292
  %vm2445 = vmand %vm2140, %vm2293
  %vm2446 = vmand %vm2141, %vm2294
  %vm2447 = vmand %vm2142, %vm2295
  %vm2448 = vmand %vm2143, %vm2296
  %vm2449 = vmand %vm2144, %vm2297
  %vm2450 = vmand %vm2145, %vm2298
  %vm2451 = vmand %vm2146, %vm2299
  %vm2452 = vmand %vm2147, %vm2300
  %vm2453 = vmand %vm2148, %vm2301
  %vm2454 = vmand %vm2149, %vm2302
  %vm2455 = vmand %vm2150, %vm2303
  %vm2456 = vmand %vm2151, %vm2304
  %vm2457 = vmand %vm2152, %vm2305
  %vm2458 = vmand %vm2153, %vm2306
  %vm2459 = vmand %vm2154, %vm2307
  %vm2460 = vmand %vm2155, %vm2308
  %vm2461 = vmand %vm2156, %vm2309
  %vm2462 = vmand %vm2157, %vm2310
  %vm2463 = vmand %vm2158, %vm2311
  %vm2464 = vmand %vm2159, %vm2312
  %vm2465 = vmand %vm2160, %vm2313
  %vm2466 = vmand %vm2161, %vm2314
  %vm2467 = vmand %vm2162, %vm2315
  %vm2468 = vmand %vm2163, %vm2316
  %vm2469 = vmand %vm2164, %vm2317
  %vm2470 = vmand %vm2165, %vm2318
  %vm2471 = vmand %vm2166, %vm2319
  %vm2472 = vmand %vm2167, %vm2320
  %vm2473 = vmand %vm2168, %vm2321
  %vm2474 = vmand %vm2169, %vm2322
  %vm2475 = vmand %vm2170, %vm2323
  %vm2476 = vmand %vm2171, %vm2324
  %vm2477 = vmand %vm2172, %vm2325
  %vm2478 = vmand %vm2173, %vm2326
  %vm2479 = vmand %vm2174, %vm2327
  %vm2480 = vmand %vm2175, %vm2328
  %vm2481 = vmand %vm2176, %vm2329
  %vm2482 = vmand %vm2177, %vm2330
  %vm2483 = vmand %vm2178, %vm2331
  %vm2484 = vmand %vm2179, %vm2332
  %vm2485 = vmand %vm2180, %vm2333
  %vm2486 = vmand %vm2181, %vm2334
  %vm2487 = vmand %vm2182, %vm2335
  %vm2488 = vmand %vm2183, %vm2336
  %vm2489 = vmand %vm2184, %vm2337
  %vm2490 = vmand %vm2185, %vm2338
  %vm2491 = vmand %vm2186, %vm2339
  %vm2492 = vmand %vm2187, %vm2340
  %vm2493 = vmand %vm2188, %vm2341
  %vm2494 = vmand %vm2189, %vm2342
  %vm2495 = vmand %vm2190, %vm2343
  %vm2496 = vmand %vm2191, %vm2344
  %vm2497 = vmand %vm2192, %vm2345
  %v2498 = vsel %vm2346, 1.0, 0.0
  %v2499 = vsel %vm2347, 1.0, 0.0
  %v2500 = vsel %vm2348, 1.0, 0.0
  %v2501 = vsel %vm2349, 1.0, 0.0
  %v2502 = vsel %vm2350, 1.0, 0.0
  %v2503 = vsel %vm2351, 1.0, 0.0
  %v2504 = vsel %vm2352, 1.0, 0.0
  %v2505 = vsel %vm2353, 1.0, 0.0
  %v2506 = vsel %vm2354, 1.0, 0.0
  %v2507 = vsel %vm2355, 1.0, 0.0
  %v2508 = vsel %vm2356, 1.0, 0.0
  %v2509 = vsel %vm2357, 1.0, 0.0
  %v2510 = vsel %vm2358, 1.0, 0.0
  %v2511 = vsel %vm2359, 1.0, 0.0
  %v2512 = vsel %vm2360, 1.0, 0.0
  %v2513 = vsel %vm2361, 1.0, 0.0
  %v2514 = vsel %vm2362, 1.0, 0.0
  %v2515 = vsel %vm2363, 1.0, 0.0
  %v2516 = vsel %vm2364, 1.0, 0.0
  %v2517 = vsel %vm2365, 1.0, 0.0
  %v2518 = vsel %vm2366, 1.0, 0.0
  %v2519 = vsel %vm2367, 1.0, 0.0
  %v2520 = vsel %vm2368, 1.0, 0.0
  %v2521 = vsel %vm2369, 1.0, 0.0
  %v2522 = vsel %vm2370, 1.0, 0.0
  %v2523 = vsel %vm2371, 1.0, 0.0
  %v2524 = vsel %vm2372, 1.0, 0.0
  %v2525 = vsel %vm2373, 1.0, 0.0
  %v2526 = vsel %vm2374, 1.0, 0.0
  %v2527 = vsel %vm2375, 1.0, 0.0
  %v2528 = vsel %vm2376, 1.0, 0.0
  %v2529 = vsel %vm2377, 1.0, 0.0
  %v2530 = vsel %vm2378, 1.0, 0.0
  %v2531 = vsel %vm2379, 1.0, 0.0
  %v2532 = vsel %vm2380, 1.0, 0.0
  %v2533 = vsel %vm2381, 1.0, 0.0
  %v2534 = vsel %vm2382, 1.0, 0.0
  %v2535 = vsel %vm2383, 1.0, 0.0
  %v2536 = vsel %vm2384, 1.0, 0.0
  %v2537 = vsel %vm2385, 1.0, 0.0
  %v2538 = vsel %vm2386, 1.0, 0.0
  %v2539 = vsel %vm2387, 1.0, 0.0
  %v2540 = vsel %vm2388, 1.0, 0.0
  %v2541 = vsel %vm2389, 1.0, 0.0
  %v2542 = vsel %vm2390, 1.0, 0.0
  %v2543 = vsel %vm2391, 1.0, 0.0
  %v2544 = vsel %vm2392, 1.0, 0.0
  %v2545 = vsel %vm2393, 1.0, 0.0
  %v2546 = vsel %vm2394, 1.0, 0.0
  %v2547 = vsel %vm2395, 1.0, 0.0
  %v2548 = vsel %vm2396, 1.0, 0.0
  %v2549 = vsel %vm2397, 1.0, 0.0
  %v2550 = vsel %vm2398, 1.0, 0.0
  %v2551 = vsel %vm2399, 1.0, 0.0
  %v2552 = vsel %vm2400, 1.0, 0.0
  %v2553 = vsel %vm2401, 1.0, 0.0
  %v2554 = vsel %vm2402, 1.0, 0.0
  %v2555 = vsel %vm2403, 1.0, 0.0
  %v2556 = vsel %vm2404, 1.0, 0.0
  %v2557 = vsel %vm2405, 1.0, 0.0
  %v2558 = vsel %vm2406, 1.0, 0.0
  %v2559 = vsel %vm2407, 1.0, 0.0
  %v2560 = vsel %vm2408, 1.0, 0.0
  %v2561 = vsel %vm2409, 1.0, 0.0
  %v2562 = vsel %vm2410, 1.0, 0.0
  %v2563 = vsel %vm2411, 1.0, 0.0
  %v2564 = vsel %vm2412, 1.0, 0.0
  %v2565 = vsel %vm2413, 1.0, 0.0
  %v2566 = vsel %vm2414, 1.0, 0.0
  %v2567 = vsel %vm2415, 1.0, 0.0
  %v2568 = vsel %vm2416, 1.0, 0.0
  %v2569 = vsel %vm2417, 1.0, 0.0
  %v2570 = vsel %vm2418, 1.0, 0.0
  %v2571 = vsel %vm2419, 1.0, 0.0
  %v2572 = vsel %vm2420, 1.0, 0.0
  %v2573 = vsel %vm2421, 1.0, 0.0
  %v2574 = vsel %vm2422, 1.0, 0.0
  %v2575 = vsel %vm2423, 1.0, 0.0
  %v2576 = vsel %vm2424, 1.0, 0.0
  %v2577 = vsel %vm2425, 1.0, 0.0
  %v2578 = vsel %vm2426, 1.0, 0.0
  %v2579 = vsel %vm2427, 1.0, 0.0
  %v2580 = vsel %vm2428, 1.0, 0.0
  %v2581 = vsel %vm2429, 1.0, 0.0
  %v2582 = vsel %vm2430, 1.0, 0.0
  %v2583 = vsel %vm2431, 1.0, 0.0
  %v2584 = vsel %vm2432, 1.0, 0.0
  %v2585 = vsel %vm2433, 1.0, 0.0
  %v2586 = vsel %vm2434, 1.0, 0.0
  %v2587 = vsel %vm2435, 1.0, 0.0
  %v2588 = vsel %vm2436, 1.0, 0.0
  %v2589 = vsel %vm2437, 1.0, 0.0
  %v2590 = vsel %vm2438, 1.0, 0.0
  %v2591 = vsel %vm2439, 1.0, 0.0
  %v2592 = vsel %vm2440, 1.0, 0.0
  %v2593 = vsel %vm2441, 1.0, 0.0
  %v2594 = vsel %vm2442, 1.0, 0.0
  %v2595 = vsel %vm2443, 1.0, 0.0
  %v2596 = vsel %vm2444, 1.0, 0.0
  %v2597 = vsel %vm2445, 1.0, 0.0
  %v2598 = vsel %vm2446, 1.0, 0.0
  %v2599 = vsel %vm2447, 1.0, 0.0
  %v2600 = vsel %vm2448, 1.0, 0.0
  %v2601 = vsel %vm2449, 1.0, 0.0
  %v2602 = vsel %vm2450, 1.0, 0.0
  %v2603 = vsel %vm2451, 1.0, 0.0
  %v2604 = vsel %vm2452, 1.0, 0.0
  %v2605 = vsel %vm2453, 1.0, 0.0
  %v2606 = vsel %vm2454, 1.0, 0.0
  %v2607 = vsel %vm2455, 1.0, 0.0
  %v2608 = vsel %vm2456, 1.0, 0.0
  %v2609 = vsel %vm2457, 1.0, 0.0
  %v2610 = vsel %vm2458, 1.0, 0.0
  %v2611 = vsel %vm2459, 1.0, 0.0
  %v2612 = vsel %vm2460, 1.0, 0.0
  %v2613 = vsel %vm2461, 1.0, 0.0
  %v2614 = vsel %vm2462, 1.0, 0.0
  %v2615 = vsel %vm2463, 1.0, 0.0
  %v2616 = vsel %vm2464, 1.0, 0.0
  %v2617 = vsel %vm2465, 1.0, 0.0
  %v2618 = vsel %vm2466, 1.0, 0.0
  %v2619 = vsel %vm2467, 1.0, 0.0
  %v2620 = vsel %vm2468, 1.0, 0.0
  %v2621 = vsel %vm2469, 1.0, 0.0
  %v2622 = vsel %vm2470, 1.0, 0.0
  %v2623 = vsel %vm2471, 1.0, 0.0
  %v2624 = vsel %vm2472, 1.0, 0.0
  %v2625 = vsel %vm2473, 1.0, 0.0
  %v2626 = vsel %vm2474, 1.0, 0.0
  %v2627 = vsel %vm2475, 1.0, 0.0
  %v2628 = vsel %vm2476, 1.0, 0.0
  %v2629 = vsel %vm2477, 1.0, 0.0
  %v2630 = vsel %vm2478, 1.0, 0.0
  %v2631 = vsel %vm2479, 1.0, 0.0
  %v2632 = vsel %vm2480, 1.0, 0.0
  %v2633 = vsel %vm2481, 1.0, 0.0
  %v2634 = vsel %vm2482, 1.0, 0.0
  %v2635 = vsel %vm2483, 1.0, 0.0
  %v2636 = vsel %vm2484, 1.0, 0.0
  %v2637 = vsel %vm2485, 1.0, 0.0
  %v2638 = vsel %vm2486, 1.0, 0.0
  %v2639 = vsel %vm2487, 1.0, 0.0
  %v2640 = vsel %vm2488, 1.0, 0.0
  %v2641 = vsel %vm2489, 1.0, 0.0
  %v2642 = vsel %vm2490, 1.0, 0.0
  %v2643 = vsel %vm2491, 1.0, 0.0
  %v2644 = vsel %vm2492, 1.0, 0.0
  %v2645 = vsel %vm2493, 1.0, 0.0
  %v2646 = vsel %vm2494, 1.0, 0.0
  %v2647 = vsel %vm2495, 1.0, 0.0
  %v2648 = vsel %vm2496, 1.0, 0.0
  %v2649 = vsel %vm2497, 1.0, 0.0
  %vm2650 = vcmask 523264
  %v2652 = vsel %vm2650, %v1874, 0
  %v2655 = vsel %vm2650, %v1884, 0
  %2657 = vmatprep.subr.mxu0 0.0
  %2658 = vmatpush1.msra.mxu0 %v2513
  %2659 = vmatprep.subr.mxu0 0.0
  %2660 = vmatpush1.msra.mxu0 %v2512
  %2661 = vmatprep.subr.mxu0 0.0
  %2662 = vmatpush1.msra.mxu0 %v2511
  %2663 = vmatprep.subr.mxu0 0.0
  %2664 = vmatpush1.msra.mxu0 %v2510
  %2665 = vmatprep.subr.mxu0 0.0
  %2666 = vmatpush1.msra.mxu0 %v2509
  %2667 = vmatprep.subr.mxu0 0.0
  %2668 = vmatpush1.msra.mxu0 %v2508
  %2669 = vmatprep.subr.mxu0 0.0
  %2670 = vmatpush1.msra.mxu0 %v2507
  %2671 = vmatprep.subr.mxu0 0.0
  %2672 = vmatpush1.msra.mxu0 %v2506
  %2673 = vmatprep.subr.mxu0 0.0
  %2674 = vmatpush1.msra.mxu0 %v2505
  %2675 = vmatprep.subr.mxu0 0.0
  %2676 = vmatpush1.msra.mxu0 %v2504
  %2677 = vmatprep.subr.mxu0 0.0
  %2678 = vmatpush1.msra.mxu0 %v2503
  %2679 = vmatprep.subr.mxu0 0.0
  %2680 = vmatpush1.msra.mxu0 %v2502
  %2681 = vmatprep.subr.mxu0 0.0
  %2682 = vmatpush1.msra.mxu0 %v2501
  %2683 = vmatprep.subr.mxu0 0.0
  %2684 = vmatpush1.msra.mxu0 %v2500
  %2685 = vmatprep.subr.mxu0 0.0
  %2686 = vmatpush1.msra.mxu0 %v2499
  %2687 = vmatprep.subr.mxu0 0.0
  %2688 = vmatpush1.msra.mxu0 %v2498
  %2689 = vmatprep.subr.mxu0 0.0
  %2690 = vmatpush2.msra.mxu0 %v2529
  %2691 = vmatprep.subr.mxu0 0.0
  %2692 = vmatpush2.msra.mxu0 %v2528
  %2693 = vmatprep.subr.mxu0 0.0
  %2694 = vmatpush2.msra.mxu0 %v2527
  %2695 = vmatprep.subr.mxu0 0.0
  %2696 = vmatpush2.msra.mxu0 %v2526
  %2697 = vmatprep.subr.mxu0 0.0
  %2698 = vmatpush2.msra.mxu0 %v2525
  %2699 = vmatprep.subr.mxu0 0.0
  %2700 = vmatpush2.msra.mxu0 %v2524
  %2701 = vmatprep.subr.mxu0 0.0
  %2702 = vmatpush2.msra.mxu0 %v2523
  %2703 = vmatprep.subr.mxu0 0.0
  %2704 = vmatpush2.msra.mxu0 %v2522
  %2705 = vmatprep.subr.mxu0 0.0
  %2706 = vmatpush2.msra.mxu0 %v2521
  %2707 = vmatprep.subr.mxu0 0.0
  %2708 = vmatpush2.msra.mxu0 %v2520
  %2709 = vmatprep.subr.mxu0 0.0
  %2710 = vmatpush2.msra.mxu0 %v2519
  %2711 = vmatprep.subr.mxu0 0.0
  %2712 = vmatpush2.msra.mxu0 %v2518
  %2713 = vmatprep.subr.mxu0 0.0
  %2714 = vmatpush2.msra.mxu0 %v2517
  %2715 = vmatprep.subr.mxu0 0.0
  %2716 = vmatpush2.msra.mxu0 %v2516
  %2717 = vmatprep.subr.mxu0 0.0
  %2718 = vmatpush2.msra.mxu0 %v2515
  %2719 = vmatprep.subr.mxu0 0.0
  %2720 = vmatpush2.msra.mxu0 %v2514
  %2721 = vmatprep.mubr.f32.mxu0 %v1866
  %2722 = vmatmul.mubr.f32.gmra.mxu0 %v1865
  %v2723 = vpop.f32.mrf.mxu0
  %v2724 = vadd.f32 0.0, %v2723
  %v2725 = vpop.f32.mrf.mxu0
  %2726 = vmatprep.mubr.f32.mxu0 %v1876
  %2727 = vmatmul.mubr.f32.gmra.mxu0 %v1875
  %v2728 = vpop.f32.mrf.mxu0
  %v2729 = vadd.f32 0.0, %v2728
  %v2730 = vpop.f32.mrf.mxu0
  %2731 = vdwg.mxu0
  %2732 = vmatprep.subr.mxu0 0.0
  %2733 = vmatpush1.msra.mxu0 %v2545
  %2734 = vmatprep.subr.mxu0 0.0
  %2735 = vmatpush1.msra.mxu0 %v2544
  %2736 = vmatprep.subr.mxu0 0.0
  %2737 = vmatpush1.msra.mxu0 %v2543
  %2738 = vmatprep.subr.mxu0 0.0
  %2739 = vmatpush1.msra.mxu0 %v2542
  %2740 = vmatprep.subr.mxu0 0.0
  %2741 = vmatpush1.msra.mxu0 %v2541
  %2742 = vmatprep.subr.mxu0 0.0
  %2743 = vmatpush1.msra.mxu0 %v2540
  %2744 = vmatprep.subr.mxu0 0.0
  %2745 = vmatpush1.msra.mxu0 %v2539
  %2746 = vmatprep.subr.mxu0 0.0
  %2747 = vmatpush1.msra.mxu0 %v2538
  %2748 = vmatprep.subr.mxu0 0.0
  %2749 = vmatpush1.msra.mxu0 %v2537
  %2750 = vmatprep.subr.mxu0 0.0
  %2751 = vmatpush1.msra.mxu0 %v2536
  %2752 = vmatprep.subr.mxu0 0.0
  %2753 = vmatpush1.msra.mxu0 %v2535
  %2754 = vmatprep.subr.mxu0 0.0
  %2755 = vmatpush1.msra.mxu0 %v2534
  %2756 = vmatprep.subr.mxu0 0.0
  %2757 = vmatpush1.msra.mxu0 %v2533
  %2758 = vmatprep.subr.mxu0 0.0
  %2759 = vmatpush1.msra.mxu0 %v2532
  %2760 = vmatprep.subr.mxu0 0.0
  %2761 = vmatpush1.msra.mxu0 %v2531
  %2762 = vmatprep.subr.mxu0 0.0
  %2763 = vmatpush1.msra.mxu0 %v2530
  %2764 = vmatprep.subr.mxu0 0.0
  %2765 = vmatpush2.msra.mxu0 %v2561
  %2766 = vmatprep.subr.mxu0 0.0
  %2767 = vmatpush2.msra.mxu0 %v2560
  %2768 = vmatprep.subr.mxu0 0.0
  %2769 = vmatpush2.msra.mxu0 %v2559
  %2770 = vmatprep.subr.mxu0 0.0
  %2771 = vmatpush2.msra.mxu0 %v2558
  %2772 = vmatprep.subr.mxu0 0.0
  %2773 = vmatpush2.msra.mxu0 %v2557
  %2774 = vmatprep.subr.mxu0 0.0
  %2775 = vmatpush2.msra.mxu0 %v2556
  %2776 = vmatprep.subr.mxu0 0.0
  %2777 = vmatpush2.msra.mxu0 %v2555
  %2778 = vmatprep.subr.mxu0 0.0
  %2779 = vmatpush2.msra.mxu0 %v2554
  %2780 = vmatprep.subr.mxu0 0.0
  %2781 = vmatpush2.msra.mxu0 %v2553
  %2782 = vmatprep.subr.mxu0 0.0
  %2783 = vmatpush2.msra.mxu0 %v2552
  %2784 = vmatprep.subr.mxu0 0.0
  %2785 = vmatpush2.msra.mxu0 %v2551
  %2786 = vmatprep.subr.mxu0 0.0
  %2787 = vmatpush2.msra.mxu0 %v2550
  %2788 = vmatprep.subr.mxu0 0.0
  %2789 = vmatpush2.msra.mxu0 %v2549
  %2790 = vmatprep.subr.mxu0 0.0
  %2791 = vmatpush2.msra.mxu0 %v2548
  %2792 = vmatprep.subr.mxu0 0.0
  %2793 = vmatpush2.msra.mxu0 %v2547
  %2794 = vmatprep.subr.mxu0 0.0
  %2795 = vmatpush2.msra.mxu0 %v2546
  %2796 = vmatprep.mubr.f32.mxu0 %v1868
  %2797 = vmatmul.mubr.f32.gmra.mxu0 %v1867
  %v2798 = vpop.f32.mrf.mxu0
  %v2799 = vadd.f32 %v2724, %v2798
  %v2800 = vpop.f32.mrf.mxu0
  %2801 = vmatprep.mubr.f32.mxu0 %v1878
  %2802 = vmatmul.mubr.f32.gmra.mxu0 %v1877
  %v2803 = vpop.f32.mrf.mxu0
  %v2804 = vadd.f32 %v2729, %v2803
  %v2805 = vpop.f32.mrf.mxu0
  %2806 = vdwg.mxu0
  %2807 = vmatprep.subr.mxu0 0.0
  %2808 = vmatpush1.msra.mxu0 %v2577
  %2809 = vmatprep.subr.mxu0 0.0
  %2810 = vmatpush1.msra.mxu0 %v2576
  %2811 = vmatprep.subr.mxu0 0.0
  %2812 = vmatpush1.msra.mxu0 %v2575
  %2813 = vmatprep.subr.mxu0 0.0
  %2814 = vmatpush1.msra.mxu0 %v2574
  %2815 = vmatprep.subr.mxu0 0.0
  %2816 = vmatpush1.msra.mxu0 %v2573
  %2817 = vmatprep.subr.mxu0 0.0
  %2818 = vmatpush1.msra.mxu0 %v2572
  %2819 = vmatprep.subr.mxu0 0.0
  %2820 = vmatpush1.msra.mxu0 %v2571
  %2821 = vmatprep.subr.mxu0 0.0
  %2822 = vmatpush1.msra.mxu0 %v2570
  %2823 = vmatprep.subr.mxu0 0.0
  %2824 = vmatpush1.msra.mxu0 %v2569
  %2825 = vmatprep.subr.mxu0 0.0
  %2826 = vmatpush1.msra.mxu0 %v2568
  %2827 = vmatprep.subr.mxu0 0.0
  %2828 = vmatpush1.msra.mxu0 %v2567
  %2829 = vmatprep.subr.mxu0 0.0
  %2830 = vmatpush1.msra.mxu0 %v2566
  %2831 = vmatprep.subr.mxu0 0.0
  %2832 = vmatpush1.msra.mxu0 %v2565
  %2833 = vmatprep.subr.mxu0 0.0
  %2834 = vmatpush1.msra.mxu0 %v2564
  %2835 = vmatprep.subr.mxu0 0.0
  %2836 = vmatpush1.msra.mxu0 %v2563
  %2837 = vmatprep.subr.mxu0 0.0
  %2838 = vmatpush1.msra.mxu0 %v2562
  %2839 = vmatprep.subr.mxu0 0.0
  %2840 = vmatpush2.msra.mxu0 %v2593
  %2841 = vmatprep.subr.mxu0 0.0
  %2842 = vmatpush2.msra.mxu0 %v2592
  %2843 = vmatprep.subr.mxu0 0.0
  %2844 = vmatpush2.msra.mxu0 %v2591
  %2845 = vmatprep.subr.mxu0 0.0
  %2846 = vmatpush2.msra.mxu0 %v2590
  %2847 = vmatprep.subr.mxu0 0.0
  %2848 = vmatpush2.msra.mxu0 %v2589
  %2849 = vmatprep.subr.mxu0 0.0
  %2850 = vmatpush2.msra.mxu0 %v2588
  %2851 = vmatprep.subr.mxu0 0.0
  %2852 = vmatpush2.msra.mxu0 %v2587
  %2853 = vmatprep.subr.mxu0 0.0
  %2854 = vmatpush2.msra.mxu0 %v2586
  %2855 = vmatprep.subr.mxu0 0.0
  %2856 = vmatpush2.msra.mxu0 %v2585
  %2857 = vmatprep.subr.mxu0 0.0
  %2858 = vmatpush2.msra.mxu0 %v2584
  %2859 = vmatprep.subr.mxu0 0.0
  %2860 = vmatpush2.msra.mxu0 %v2583
  %2861 = vmatprep.subr.mxu0 0.0
  %2862 = vmatpush2.msra.mxu0 %v2582
  %2863 = vmatprep.subr.mxu0 0.0
  %2864 = vmatpush2.msra.mxu0 %v2581
  %2865 = vmatprep.subr.mxu0 0.0
  %2866 = vmatpush2.msra.mxu0 %v2580
  %2867 = vmatprep.subr.mxu0 0.0
  %2868 = vmatpush2.msra.mxu0 %v2579
  %2869 = vmatprep.subr.mxu0 0.0
  %2870 = vmatpush2.msra.mxu0 %v2578
  %2871 = vmatprep.mubr.f32.mxu0 %v1870
  %2872 = vmatmul.mubr.f32.gmra.mxu0 %v1869
  %v2873 = vpop.f32.mrf.mxu0
  %v2874 = vadd.f32 %v2799, %v2873
  %v2875 = vpop.f32.mrf.mxu0
  %2876 = vmatprep.mubr.f32.mxu0 %v1880
  %2877 = vmatmul.mubr.f32.gmra.mxu0 %v1879
  %v2878 = vpop.f32.mrf.mxu0
  %v2879 = vadd.f32 %v2804, %v2878
  %v2880 = vpop.f32.mrf.mxu0
  %2881 = vdwg.mxu0
  %2882 = vmatprep.subr.mxu0 0.0
  %2883 = vmatpush1.msra.mxu0 %v2609
  %2884 = vmatprep.subr.mxu0 0.0
  %2885 = vmatpush1.msra.mxu0 %v2608
  %2886 = vmatprep.subr.mxu0 0.0
  %2887 = vmatpush1.msra.mxu0 %v2607
  %2888 = vmatprep.subr.mxu0 0.0
  %2889 = vmatpush1.msra.mxu0 %v2606
  %2890 = vmatprep.subr.mxu0 0.0
  %2891 = vmatpush1.msra.mxu0 %v2605
  %2892 = vmatprep.subr.mxu0 0.0
  %2893 = vmatpush1.msra.mxu0 %v2604
  %2894 = vmatprep.subr.mxu0 0.0
  %2895 = vmatpush1.msra.mxu0 %v2603
  %2896 = vmatprep.subr.mxu0 0.0
  %2897 = vmatpush1.msra.mxu0 %v2602
  %2898 = vmatprep.subr.mxu0 0.0
  %2899 = vmatpush1.msra.mxu0 %v2601
  %2900 = vmatprep.subr.mxu0 0.0
  %2901 = vmatpush1.msra.mxu0 %v2600
  %2902 = vmatprep.subr.mxu0 0.0
  %2903 = vmatpush1.msra.mxu0 %v2599
  %2904 = vmatprep.subr.mxu0 0.0
  %2905 = vmatpush1.msra.mxu0 %v2598
  %2906 = vmatprep.subr.mxu0 0.0
  %2907 = vmatpush1.msra.mxu0 %v2597
  %2908 = vmatprep.subr.mxu0 0.0
  %2909 = vmatpush1.msra.mxu0 %v2596
  %2910 = vmatprep.subr.mxu0 0.0
  %2911 = vmatpush1.msra.mxu0 %v2595
  %2912 = vmatprep.subr.mxu0 0.0
  %2913 = vmatpush1.msra.mxu0 %v2594
  %2914 = vmatprep.subr.mxu0 0.0
  %2915 = vmatpush2.msra.mxu0 %v2625
  %2916 = vmatprep.subr.mxu0 0.0
  %2917 = vmatpush2.msra.mxu0 %v2624
  %2918 = vmatprep.subr.mxu0 0.0
  %2919 = vmatpush2.msra.mxu0 %v2623
  %2920 = vmatprep.subr.mxu0 0.0
  %2921 = vmatpush2.msra.mxu0 %v2622
  %2922 = vmatprep.subr.mxu0 0.0
  %2923 = vmatpush2.msra.mxu0 %v2621
  %2924 = vmatprep.subr.mxu0 0.0
  %2925 = vmatpush2.msra.mxu0 %v2620
  %2926 = vmatprep.subr.mxu0 0.0
  %2927 = vmatpush2.msra.mxu0 %v2619
  %2928 = vmatprep.subr.mxu0 0.0
  %2929 = vmatpush2.msra.mxu0 %v2618
  %2930 = vmatprep.subr.mxu0 0.0
  %2931 = vmatpush2.msra.mxu0 %v2617
  %2932 = vmatprep.subr.mxu0 0.0
  %2933 = vmatpush2.msra.mxu0 %v2616
  %2934 = vmatprep.subr.mxu0 0.0
  %2935 = vmatpush2.msra.mxu0 %v2615
  %2936 = vmatprep.subr.mxu0 0.0
  %2937 = vmatpush2.msra.mxu0 %v2614
  %2938 = vmatprep.subr.mxu0 0.0
  %2939 = vmatpush2.msra.mxu0 %v2613
  %2940 = vmatprep.subr.mxu0 0.0
  %2941 = vmatpush2.msra.mxu0 %v2612
  %2942 = vmatprep.subr.mxu0 0.0
  %2943 = vmatpush2.msra.mxu0 %v2611
  %2944 = vmatprep.subr.mxu0 0.0
  %2945 = vmatpush2.msra.mxu0 %v2610
  %2946 = vmatprep.mubr.f32.mxu0 %v1872
  %2947 = vmatmul.mubr.f32.gmra.mxu0 %v1871
  %v2948 = vpop.f32.mrf.mxu0
  %v2949 = vadd.f32 %v2874, %v2948
  %v2950 = vpop.f32.mrf.mxu0
  %2951 = vmatprep.mubr.f32.mxu0 %v1882
  %2952 = vmatmul.mubr.f32.gmra.mxu0 %v1881
  %v2953 = vpop.f32.mrf.mxu0
  %v2954 = vadd.f32 %v2879, %v2953
  %v2955 = vpop.f32.mrf.mxu0
  %2956 = vdwg.mxu0
  %2957 = vmatprep.subr.mxu0 0.0
  %2958 = vmatpush1.msra.mxu0 %v2641
  %2959 = vmatprep.subr.mxu0 0.0
  %2960 = vmatpush1.msra.mxu0 %v2640
  %2961 = vmatprep.subr.mxu0 0.0
  %2962 = vmatpush1.msra.mxu0 %v2639
  %2963 = vmatprep.subr.mxu0 0.0
  %2964 = vmatpush1.msra.mxu0 %v2638
  %2965 = vmatprep.subr.mxu0 0.0
  %2966 = vmatpush1.msra.mxu0 %v2637
  %2967 = vmatprep.subr.mxu0 0.0
  %2968 = vmatpush1.msra.mxu0 %v2636
  %2969 = vmatprep.subr.mxu0 0.0
  %2970 = vmatpush1.msra.mxu0 %v2635
  %2971 = vmatprep.subr.mxu0 0.0
  %2972 = vmatpush1.msra.mxu0 %v2634
  %2973 = vmatprep.subr.mxu0 0.0
  %2974 = vmatpush1.msra.mxu0 %v2633
  %2975 = vmatprep.subr.mxu0 0.0
  %2976 = vmatpush1.msra.mxu0 %v2632
  %2977 = vmatprep.subr.mxu0 0.0
  %2978 = vmatpush1.msra.mxu0 %v2631
  %2979 = vmatprep.subr.mxu0 0.0
  %2980 = vmatpush1.msra.mxu0 %v2630
  %2981 = vmatprep.subr.mxu0 0.0
  %2982 = vmatpush1.msra.mxu0 %v2629
  %2983 = vmatprep.subr.mxu0 0.0
  %2984 = vmatpush1.msra.mxu0 %v2628
  %2985 = vmatprep.subr.mxu0 0.0
  %2986 = vmatpush1.msra.mxu0 %v2627
  %2987 = vmatprep.subr.mxu0 0.0
  %2988 = vmatpush1.msra.mxu0 %v2626
  %2989 = vmatprep.subr.mxu0 0.0
  %2990 = vmatpush2.msra.mxu0 0.0
  %2991 = vmatprep.subr.mxu0 0.0
  %2992 = vmatpush2.msra.mxu0 0.0
  %2993 = vmatprep.subr.mxu0 0.0
  %2994 = vmatpush2.msra.mxu0 0.0
  %2995 = vmatprep.subr.mxu0 0.0
  %2996 = vmatpush2.msra.mxu0 0.0
  %2997 = vmatprep.subr.mxu0 0.0
  %2998 = vmatpush2.msra.mxu0 0.0
  %2999 = vmatprep.subr.mxu0 0.0
  %3000 = vmatpush2.msra.mxu0 0.0
  %3001 = vmatprep.subr.mxu0 0.0
  %3002 = vmatpush2.msra.mxu0 0.0
  %3003 = vmatprep.subr.mxu0 0.0
  %3004 = vmatpush2.msra.mxu0 0.0
  %3005 = vmatprep.subr.mxu0 0.0
  %3006 = vmatpush2.msra.mxu0 %v2649
  %3007 = vmatprep.subr.mxu0 0.0
  %3008 = vmatpush2.msra.mxu0 %v2648
  %3009 = vmatprep.subr.mxu0 0.0
  %3010 = vmatpush2.msra.mxu0 %v2647
  %3011 = vmatprep.subr.mxu0 0.0
  %3012 = vmatpush2.msra.mxu0 %v2646
  %3013 = vmatprep.subr.mxu0 0.0
  %3014 = vmatpush2.msra.mxu0 %v2645
  %3015 = vmatprep.subr.mxu0 0.0
  %3016 = vmatpush2.msra.mxu0 %v2644
  %3017 = vmatprep.subr.mxu0 0.0
  %3018 = vmatpush2.msra.mxu0 %v2643
  %3019 = vmatprep.subr.mxu0 0.0
  %3020 = vmatpush2.msra.mxu0 %v2642
  %3021 = vmatprep.mubr.f32.mxu0 %v2652
  %3022 = vmatmul.mubr.f32.gmra.mxu0 %v1873
  %v3023 = vpop.f32.mrf.mxu0
  %v3024 = vadd.f32 %v2949, %v3023
  %v3025 = vpop.f32.mrf.mxu0
  %3026 = vmatprep.mubr.f32.mxu0 %v2655
  %3027 = vmatmul.mubr.f32.gmra.mxu0 %v1883
  %v3028 = vpop.f32.mrf.mxu0
  %v3029 = vadd.f32 %v2954, %v3028
  %v3030 = vpop.f32.mrf.mxu0
  %3031 = vdwg.mxu0
  %v3033 = vrot.slane %v3024, 3
  %v3035 = vadd.f32 %v3024, %v3033
  %vm3037 = vcmask 1041408
  %v3038 = vrot.slane %v3024, 6
  %v3039 = vrot.slane %v3029, 6
  %v3040 = vsel %vm3037, %v3038, %v3039
  %v3042 = vadd.f32 %v3035, %v3040
  %v3043 = vrot.slane %v3029, 1
  %v3045 = vadd.f32 %v3042, %v3043
  %v3046 = vmul.f32 %v3045, 0.0013020834
  %vm3047 = vcmask 149504
  %3048 = vst.msk [vmem:[%s3] sm:$0x7] %vm3047, %v3046
  // Predicated region
  $region14: #{model_forward.1} parent=0 // pred_check
    _
  $region15: #{model_forward.1} parent=0 // pred_check_branch
    %3050 = sbr.rel (0) target = $region17
  $region16: #{model_forward.1} parent=0 // pred_region
    _
  $region17: #{model_forward.1} parent=0 // pred_fallthru
    _
  // Predicated region
  $region18: #{model_forward.1} parent=0 // pred_check
    _
  $region19: #{model_forward.1} parent=0 // pred_check_branch
    %3052 = sbr.rel (0) target = $region21
  $region20: #{model_forward.1} parent=0 // pred_region
    _
  $region21: #{model_forward.1} parent=0 // pred_fallthru
    _

</llo_original>
